<compile_context>
chip_gen: v7x
topology: tpu7x:2x2x1
jax: 0.10.0
libtpu: 0.0.40
codegen_flags: <defaults>
</compile_context>

<pallas_src>
import jax
import jax.numpy as jnp
from jax.experimental import pallas as pl
from jax.experimental.pallas import tpu as pltpu


# ----------------------------------------------------------------------------
# Kernels
# ----------------------------------------------------------------------------

def _neumf_kernel_tied(ug_ref, ig_ref,
                       w1u_ref, w1i_ref, b1_ref,
                       w2_ref, b2_ref,
                       wpg_ref, wph_ref, bp_ref,
                       out_ref):
    """Tied-MLP-embedding path: um/im == tile(ug/ig, rate), so MLP layer 1 is
    folded onto the GMF embeddings and only ug/ig (64 B/row) come from HBM."""
    f32 = jnp.float32
    ug = ug_ref[...].astype(f32)                              # (TB, F) f32
    ig = ig_ref[...].astype(f32)                              # (v5e: f32 VPU)

    # ---- GMF branch ----
    gmf = ug * ig                                             # (TB, F)

    # ---- MLP branch, layer 1 with (exactly, f32-) folded weights ----
    h1 = (jnp.dot(ug, w1u_ref[...], preferred_element_type=f32)
          + jnp.dot(ig, w1i_ref[...], preferred_element_type=f32)
          + b1_ref[...])
    h1 = jnp.maximum(h1, 0.0)                                 # (TB, 2F) f32
    h2 = jnp.dot(h1.astype(jnp.bfloat16), w2_ref[...],
                 preferred_element_type=f32) + b2_ref[...]
    h2 = jnp.maximum(h2, 0.0)                                 # (TB, F)  f32

    # ---- predict head: VPU multiply + lane reduce (no 1-col MXU matmul) ----
    t = gmf * wpg_ref[...] + h2 * wph_ref[...]                # (TB, F)
    pred = jnp.sum(t, axis=-1, keepdims=True) + bp_ref[...]   # (TB, 1)
    # (TB,1) -> (1,TB) sublane->lane relayout is ~TB/8 vregs/step; per review
    # this stays hidden under the gather DMA, and the out_spec stays lane-dense.
    out_ref[0, :] = pred[:, 0]


def _neumf_kernel_untied(ug_ref, ig_ref, mlp_ref,
                         w1_ref, b1_ref,
                         w2_ref, b2_ref,
                         wpg_ref, wph_ref, bp_ref,
                         out_ref):
    """General path: independent MLP embedding tables; mlp_ref = [um | im]."""
    f32 = jnp.float32
    gmf = ug_ref[...].astype(f32) * ig_ref[...].astype(f32)   # (TB, F)

    # single merged (TB,4F)@(4F,2F) matmul: one MXU push, one DMA stream
    h1 = jnp.dot(mlp_ref[...], w1_ref[...],
                 preferred_element_type=f32) + b1_ref[...]
    h1 = jnp.maximum(h1, 0.0)                                 # (TB, 2F)
    h2 = jnp.dot(h1.astype(jnp.bfloat16), w2_ref[...],
                 preferred_element_type=f32) + b2_ref[...]
    h2 = jnp.maximum(h2, 0.0)                                 # (TB, F)

    t = gmf * wpg_ref[...] + h2 * wph_ref[...]
    pred = jnp.sum(t, axis=-1, keepdims=True) + bp_ref[...]
    out_ref[0, :] = pred[:, 0]


# ----------------------------------------------------------------------------
# Wrapper
# ----------------------------------------------------------------------------

def _round_up(x, m):
    return -(-x // m) * m


def _pick_tb(batch, tb_max=8192):
    """Batch tile: big enough to amortize the ~0.35us/grid-step overhead, and
    (when batch allows) an even tile count so ('parallel',) can shard tiles
    over both v7x TensorCores."""
    b128 = _round_up(max(int(batch), 1), 128)
    if b128 <= 256:
        return b128
    tb = min(tb_max, _round_up(b128 // 2, 128))
    n = -(-b128 // tb)
    if n > 1 and n % 2:                 # keep tile count even (2-TC chips)
        tb = _round_up(-(-b128 // (n + 1)), 128)
    return max(tb, 128)


def neumf_forward(user, item, params, *, tb=None, tied_mlp=True):
    """NeuMF-end forward (eval mode -> dropout is identity).

    user/item: int32 (B,). Returns f32 (B,) predictions.

    tied_mlp=True assumes embed_*_MLP == tile(embed_*_GMF, rate), exactly how
    the reference module constructs them; the um/im gathers are skipped (3x
    less HBM gather traffic). Use tied_mlp=False for checkpoints whose MLP
    embedding tables were trained independently of the GMF tables.
    """
    F = params["embed_user_GMF"].shape[1]
    B = user.shape[0]
    if tb is None:
        tb = _pick_tb(B)
    assert tb % 128 == 0, "batch tile must be a multiple of 128 (lane-dense output)"
    n_tiles = pl.cdiv(B, tb)
    b_pad = n_tiles * tb
    if b_pad != B:
        # Padded rows reuse index 0 (a valid row); their garbage outputs are
        # discarded by the final [:B] slice. Do NOT reduce over padded output.
        user = jnp.pad(user, (0, b_pad - B))
        item = jnp.pad(item, (0, b_pad - B))

    # Embedding gathers are glue (plain XLA row gathers); the kernel does the math.
    ug = params["embed_user_GMF"][user]          # (Bp, F)  bf16
    ig = params["embed_item_GMF"][item]          # (Bp, F)  bf16

    batch_spec = lambda w: pl.BlockSpec((tb, w), lambda i: (i, 0))
    resident = lambda a: pl.BlockSpec(a.shape, lambda i: (0, 0))   # stays in VMEM

    tail_weights = (params["b1"], params["w2_t"], params["b2"],
                    params["wp_g"], params["wp_h"], params["bp"])

    if tied_mlp:
        kernel = _neumf_kernel_tied
        data_inputs = (ug, ig)
        weight_inputs = (params["w1u_fold"], params["w1i_fold"]) + tail_weights
        data_specs = [batch_spec(F), batch_spec(F)]
    else:
        um = params["embed_user_MLP"][user]      # (Bp, 2F) bf16
        im = params["embed_item_MLP"][item]      # (Bp, 2F) bf16
        mlp_x = jnp.concatenate([um, im], axis=-1)   # (Bp, 4F): one stream,
                                                     # one merged K=4F matmul
        kernel = _neumf_kernel_untied
        data_inputs = (ug, ig, mlp_x)
        weight_inputs = (params["w1_t"],) + tail_weights
        data_specs = [batch_spec(F), batch_spec(F), batch_spec(4 * F)]

    in_specs = data_specs + [resident(w) for w in weight_inputs]

    # Explicit VMEM budget (v7x scoped default is 32 MiB of 64 MiB physical):
    # double-buffered batch tiles + output + resident weights + headroom.
    tile_bytes = sum(tb * x.shape[1] * x.dtype.itemsize for x in data_inputs)
    weight_bytes = sum(int(w.size) * w.dtype.itemsize for w in weight_inputs)
    vmem_limit = int(2 * (tile_bytes + 4 * tb + weight_bytes) + (16 << 20))

    grid_spec = pltpu.PrefetchScalarGridSpec(
        num_scalar_prefetch=0,
        grid=(n_tiles,),
        in_specs=in_specs,
        out_specs=pl.BlockSpec((1, tb), lambda i: (0, i)),   # batch on lanes
    )

    out = pl.pallas_call(
        kernel,
        out_shape=jax.ShapeDtypeStruct((1, b_pad), jnp.float32),
        grid_spec=grid_spec,
        compiler_params=pltpu.CompilerParams(
            dimension_semantics=("parallel",),
            vmem_limit_bytes=vmem_limit),
    )(*data_inputs, *weight_inputs)

    return out.reshape(-1)[:B]                   # matches prediction.view(-1)


# ----------------------------------------------------------------------------
# Plain-JAX reference (original module's concat form) + params
# ----------------------------------------------------------------------------

def neumf_reference(user, item, params):
    f32 = jnp.float32
    ug = params["embed_user_GMF"][user].astype(f32)
    ig = params["embed_item_GMF"][item].astype(f32)
    um = params["embed_user_MLP"][user]
    im = params["embed_item_MLP"][item]

    gmf = ug * ig
    x = jnp.concatenate([um, im], axis=-1)                        # (B, 4F) bf16
    h1 = jnp.maximum(jnp.dot(x, params["w1_t"],
                             preferred_element_type=f32) + params["b1"], 0.0)
    h2 = jnp.maximum(jnp.dot(h1.astype(jnp.bfloat16), params["w2_t"],
                             preferred_element_type=f32) + params["b2"], 0.0)
    concat = jnp.concatenate([gmf, h2], axis=-1)                  # (B, 2F) f32
    wp_t = jnp.concatenate([params["wp_g"], params["wp_h"]], axis=-1).T
    pred = jnp.dot(concat, wp_t, precision=jax.lax.Precision.HIGHEST) + params["bp"]
    return pred.reshape(-1)


def init_params(key, user_num, item_num, factors, num_layers):
    assert num_layers == 2, "script hardcodes num_layers=2 for the kernel signature"
    k = jax.random.split(key, 5)
    F = factors
    bf16, f32 = jnp.bfloat16, jnp.float32

    # pretrained GMF embeddings (uservec / itemvec), dim == factors
    uservec = jax.random.normal(k[0], (user_num, F), f32) * 0.1
    itemvec = jax.random.normal(k[1], (item_num, F), f32) * 0.1

    # MLP embeddings: uservec / itemvec repeated `rate` times along dim=1
    mlp_dim = F * 2 ** (num_layers - 1)
    rate = mlp_dim // F
    embed_user_MLP = jnp.tile(uservec, (1, rate))   # (user_num, 2F)
    embed_item_MLP = jnp.tile(itemvec, (1, rate))   # (item_num, 2F)

    def xavier_uniform(key, out_f, in_f):
        bound = (6.0 / (in_f + out_f)) ** 0.5
        return jax.random.uniform(key, (out_f, in_f), f32, -bound, bound)

    # MLP layer 1: Linear(4F -> 2F), layer 2: Linear(2F -> F); biases zeroed
    w1 = xavier_uniform(k[2], 2 * F, 4 * F)
    w2 = xavier_uniform(k[3], F, 2 * F)

    # predict layer: Linear(2F -> 1), kaiming_uniform(a=1) ~ U(-sqrt(3/fan_in), +)
    fan_in = 2 * F
    bound = (3.0 / fan_in) ** 0.5
    wp = jax.random.uniform(k[4], (1, fan_in), f32, -bound, bound)

    w1_t = w1.T.astype(bf16)             # (4F, 2F), pre-transposed for x @ W
    w1_t32 = w1_t.astype(f32)
    return {
        # bf16 storage halves the dominant HBM gather bytes; f32 math in-kernel
        "embed_user_GMF": uservec.astype(bf16),
        "embed_item_GMF": itemvec.astype(bf16),
        "embed_user_MLP": embed_user_MLP.astype(bf16),
        "embed_item_MLP": embed_item_MLP.astype(bf16),
        # full pre-transposed MLP layer 1 (untied path, single merged matmul)
        "w1_t": w1_t,
        # tied path: fold the repeat(rate=2) structure of um/im into W1 (exact
        # f32 sums of the bf16 weight halves) so layer 1 runs off the GMF rows
        "w1u_fold": w1_t32[:F] + w1_t32[F:2 * F],         # (F, 2F) f32
        "w1i_fold": w1_t32[2 * F:3 * F] + w1_t32[3 * F:], # (F, 2F) f32
        "b1": jnp.zeros((1, 2 * F), f32),
        "w2_t": w2.T.astype(bf16),
        "b2": jnp.zeros((1, F), f32),
        # predict layer split into GMF / MLP halves -> VPU head, no concat
        "wp_g": wp[:, :F].astype(f32),
        "wp_h": wp[:, F:].astype(f32),
        "bp": jnp.zeros((1, 1), f32),
    }


if __name__ == "__main__":
    key = jax.random.PRNGKey(0)
    factors, num_layers = 16, 2
    user_num, item_num, batch = 64, 96, 300     # exercises tiling + padding

    pkey, ukey, ikey = jax.random.split(key, 3)
    params = init_params(pkey, user_num, item_num, factors, num_layers)
    user = jax.random.randint(ukey, (batch,), 0, user_num)
    item = jax.random.randint(ikey, (batch,), 0, item_num)

    ref = neumf_reference(user, item, params)

    # tied fast path (matches the module's construction: MLP tables = tiled GMF)
    pred_tied = jax.block_until_ready(
        neumf_forward(user, item, params, tied_mlp=True))
    # general path (independent MLP tables), explicit small tile
    pred_untied = jax.block_until_ready(
        neumf_forward(user, item, params, tb=128, tied_mlp=False))

    assert pred_tied.shape == (batch,) and pred_untied.shape == (batch,)
    for pred in (pred_tied, pred_untied):
        err = float(jnp.max(jnp.abs(pred - ref)))
        assert jnp.allclose(pred, ref, atol=1e-3, rtol=1e-3), f"max abs err {err}"
    print("KERNEL_OK")
</pallas_src>

<mosaic_0001>
module attributes {stable_mosaic.version = 11 : i64} {
  func.func @_neumf_kernel_tied(%arg0: i32, %arg1: memref<256x16xbf16, #tpu.memory_space<vmem>>, %arg2: memref<256x16xbf16, #tpu.memory_space<vmem>>, %arg3: memref<16x32xf32, #tpu.memory_space<vmem>>, %arg4: memref<16x32xf32, #tpu.memory_space<vmem>>, %arg5: memref<1x32xf32, #tpu.memory_space<vmem>>, %arg6: memref<32x16xbf16, #tpu.memory_space<vmem>>, %arg7: memref<1x16xf32, #tpu.memory_space<vmem>>, %arg8: memref<1x16xf32, #tpu.memory_space<vmem>>, %arg9: memref<1x16xf32, #tpu.memory_space<vmem>>, %arg10: memref<1x1xf32, #tpu.memory_space<vmem>>, %arg11: memref<1x256xf32, #tpu.memory_space<vmem>>) attributes {dimension_semantics = [#tpu.dimension_semantics<parallel>], iteration_bounds = array<i64: 2>, scalar_prefetch = 0 : i64, scratch_operands = 0 : i64, tpu.core_type = #tpu.core_type<tc>, window_params = [{transform_indices = @transform_0, window_bounds = array<i64: 256, 16>}, {transform_indices = @transform_1, window_bounds = array<i64: 256, 16>}, {pipeline_mode = #tpu.pipeline_mode<synchronous>, transform_indices = @transform_2, window_bounds = array<i64: 16, 32>}, {pipeline_mode = #tpu.pipeline_mode<synchronous>, transform_indices = @transform_3, window_bounds = array<i64: 16, 32>}, {pipeline_mode = #tpu.pipeline_mode<synchronous>, transform_indices = @transform_4, window_bounds = array<i64: 1, 32>}, {pipeline_mode = #tpu.pipeline_mode<synchronous>, transform_indices = @transform_5, window_bounds = array<i64: 32, 16>}, {pipeline_mode = #tpu.pipeline_mode<synchronous>, transform_indices = @transform_6, window_bounds = array<i64: 1, 16>}, {pipeline_mode = #tpu.pipeline_mode<synchronous>, transform_indices = @transform_7, window_bounds = array<i64: 1, 16>}, {pipeline_mode = #tpu.pipeline_mode<synchronous>, transform_indices = @transform_8, window_bounds = array<i64: 1, 16>}, {pipeline_mode = #tpu.pipeline_mode<synchronous>, transform_indices = @transform_9, window_bounds = array<i64: 1, 1>}, {transform_indices = @transform_10, window_bounds = array<i64: 1, 256>}]} {
    %c0 = arith.constant 0 : index
    %c0_0 = arith.constant 0 : index
    %0 = vector.load %arg1[%c0, %c0_0] : memref<256x16xbf16, #tpu.memory_space<vmem>>, vector<256x16xbf16>
    %1 = arith.extf %0 : vector<256x16xbf16> to vector<256x16xf32>
    %c0_1 = arith.constant 0 : index
    %c0_2 = arith.constant 0 : index
    %2 = vector.load %arg2[%c0_1, %c0_2] : memref<256x16xbf16, #tpu.memory_space<vmem>>, vector<256x16xbf16>
    %3 = arith.extf %2 : vector<256x16xbf16> to vector<256x16xf32>
    %4 = arith.mulf %1, %3 : vector<256x16xf32>
    %c0_3 = arith.constant 0 : index
    %c0_4 = arith.constant 0 : index
    %5 = vector.load %arg3[%c0_3, %c0_4] : memref<16x32xf32, #tpu.memory_space<vmem>>, vector<16x32xf32>
    %cst = arith.constant dense<0.000000e+00> : vector<256x32xf32>
    %6 = tpu.matmul %1, %5, %cst {dimension_numbers = #tpu.dot_dimension_numbers<[1], [0], [0], [1], [0, 0, 1, 1], [], []>} : vector<256x16xf32>, vector<16x32xf32>, vector<256x32xf32> -> vector<256x32xf32>
    %c0_5 = arith.constant 0 : index
    %c0_6 = arith.constant 0 : index
    %7 = vector.load %arg4[%c0_5, %c0_6] : memref<16x32xf32, #tpu.memory_space<vmem>>, vector<16x32xf32>
    %cst_7 = arith.constant dense<0.000000e+00> : vector<256x32xf32>
    %8 = tpu.matmul %3, %7, %cst_7 {dimension_numbers = #tpu.dot_dimension_numbers<[1], [0], [0], [1], [0, 0, 1, 1], [], []>} : vector<256x16xf32>, vector<16x32xf32>, vector<256x32xf32> -> vector<256x32xf32>
    %9 = arith.addf %6, %8 : vector<256x32xf32>
    %c0_8 = arith.constant 0 : index
    %c0_9 = arith.constant 0 : index
    %10 = vector.load %arg5[%c0_8, %c0_9] : memref<1x32xf32, #tpu.memory_space<vmem>>, vector<1x32xf32>
    %11 = vector.broadcast %10 : vector<1x32xf32> to vector<256x32xf32>
    %12 = arith.addf %9, %11 : vector<256x32xf32>
    %cst_10 = arith.constant 0.000000e+00 : f32
    %13 = vector.broadcast %cst_10 : f32 to vector<256x32xf32>
    %14 = arith.maximumf %12, %13 : vector<256x32xf32>
    %15 = arith.truncf %14 : vector<256x32xf32> to vector<256x32xbf16>
    %c0_11 = arith.constant 0 : index
    %c0_12 = arith.constant 0 : index
    %16 = vector.load %arg6[%c0_11, %c0_12] : memref<32x16xbf16, #tpu.memory_space<vmem>>, vector<32x16xbf16>
    %cst_13 = arith.constant dense<0.000000e+00> : vector<256x16xf32>
    %17 = tpu.matmul %15, %16, %cst_13 {dimension_numbers = #tpu.dot_dimension_numbers<[1], [0], [0], [1], [0, 0, 1, 1], [], []>} : vector<256x32xbf16>, vector<32x16xbf16>, vector<256x16xf32> -> vector<256x16xf32>
    %c0_14 = arith.constant 0 : index
    %c0_15 = arith.constant 0 : index
    %18 = vector.load %arg7[%c0_14, %c0_15] : memref<1x16xf32, #tpu.memory_space<vmem>>, vector<1x16xf32>
    %19 = vector.broadcast %18 : vector<1x16xf32> to vector<256x16xf32>
    %20 = arith.addf %17, %19 : vector<256x16xf32>
    %cst_16 = arith.constant 0.000000e+00 : f32
    %21 = vector.broadcast %cst_16 : f32 to vector<256x16xf32>
    %22 = arith.maximumf %20, %21 : vector<256x16xf32>
    %c0_17 = arith.constant 0 : index
    %c0_18 = arith.constant 0 : index
    %23 = vector.load %arg8[%c0_17, %c0_18] : memref<1x16xf32, #tpu.memory_space<vmem>>, vector<1x16xf32>
    %24 = vector.broadcast %23 : vector<1x16xf32> to vector<256x16xf32>
    %25 = arith.mulf %4, %24 : vector<256x16xf32>
    %c0_19 = arith.constant 0 : index
    %c0_20 = arith.constant 0 : index
    %26 = vector.load %arg9[%c0_19, %c0_20] : memref<1x16xf32, #tpu.memory_space<vmem>>, vector<1x16xf32>
    %27 = vector.broadcast %26 : vector<1x16xf32> to vector<256x16xf32>
    %28 = arith.mulf %22, %27 : vector<256x16xf32>
    %29 = arith.addf %25, %28 : vector<256x16xf32>
    %cst_21 = arith.constant dense<0.000000e+00> : vector<256xf32>
    %30 = vector.multi_reduction <add>, %29, %cst_21 [1] : vector<256x16xf32> to vector<256xf32>
    %31 = vector.shape_cast %30 : vector<256xf32> to vector<256x1xf32>
    %c0_22 = arith.constant 0 : index
    %c0_23 = arith.constant 0 : index
    %32 = vector.load %arg10[%c0_22, %c0_23] : memref<1x1xf32, #tpu.memory_space<vmem>>, vector<1x1xf32>
    %33 = vector.broadcast %32 : vector<1x1xf32> to vector<256x1xf32>
    %34 = arith.addf %31, %33 : vector<256x1xf32>
    %35 = vector.shape_cast %34 : vector<256x1xf32> to vector<256xf32>
    %c0_24 = arith.constant 0 : index
    %c0_25 = arith.constant 0 : index
    %36 = vector.load %arg11[%c0_24, %c0_25] : memref<1x256xf32, #tpu.memory_space<vmem>>, vector<1x256xf32>
    %37 = vector.shape_cast %36 : vector<1x256xf32> to vector<256xf32>
    %38 = vector.shape_cast %35 : vector<256xf32> to vector<1x256xf32>
    tpu.vector_store %arg11[%c0_24, %c0_25], %38 {strides = array<i32>} : memref<1x256xf32, #tpu.memory_space<vmem>>, vector<1x256xf32>,
    return
  }
  func.func @transform_0(%arg0: i32) -> (i32, i32) {
    %c0_i32 = arith.constant 0 : i32
    %c0_i32_0 = arith.constant 0 : i32
    return %arg0, %c0_i32 : i32, i32
  }
  func.func @transform_1(%arg0: i32) -> (i32, i32) {
    %c0_i32 = arith.constant 0 : i32
    %c0_i32_0 = arith.constant 0 : i32
    return %arg0, %c0_i32 : i32, i32
  }
  func.func @transform_2(%arg0: i32) -> (i32, i32) {
    %c0_i32 = arith.constant 0 : i32
    %c0_i32_0 = arith.constant 0 : i32
    %c0_i32_1 = arith.constant 0 : i32
    return %c0_i32, %c0_i32_0 : i32, i32
  }
  func.func @transform_3(%arg0: i32) -> (i32, i32) {
    %c0_i32 = arith.constant 0 : i32
    %c0_i32_0 = arith.constant 0 : i32
    %c0_i32_1 = arith.constant 0 : i32
    return %c0_i32, %c0_i32_0 : i32, i32
  }
  func.func @transform_4(%arg0: i32) -> (i32, i32) {
    %c0_i32 = arith.constant 0 : i32
    %c0_i32_0 = arith.constant 0 : i32
    %c0_i32_1 = arith.constant 0 : i32
    return %c0_i32, %c0_i32_0 : i32, i32
  }
  func.func @transform_5(%arg0: i32) -> (i32, i32) {
    %c0_i32 = arith.constant 0 : i32
    %c0_i32_0 = arith.constant 0 : i32
    %c0_i32_1 = arith.constant 0 : i32
    return %c0_i32, %c0_i32_0 : i32, i32
  }
  func.func @transform_6(%arg0: i32) -> (i32, i32) {
    %c0_i32 = arith.constant 0 : i32
    %c0_i32_0 = arith.constant 0 : i32
    %c0_i32_1 = arith.constant 0 : i32
    return %c0_i32, %c0_i32_0 : i32, i32
  }
  func.func @transform_7(%arg0: i32) -> (i32, i32) {
    %c0_i32 = arith.constant 0 : i32
    %c0_i32_0 = arith.constant 0 : i32
    %c0_i32_1 = arith.constant 0 : i32
    return %c0_i32, %c0_i32_0 : i32, i32
  }
  func.func @transform_8(%arg0: i32) -> (i32, i32) {
    %c0_i32 = arith.constant 0 : i32
    %c0_i32_0 = arith.constant 0 : i32
    %c0_i32_1 = arith.constant 0 : i32
    return %c0_i32, %c0_i32_0 : i32, i32
  }
  func.func @transform_9(%arg0: i32) -> (i32, i32) {
    %c0_i32 = arith.constant 0 : i32
    %c0_i32_0 = arith.constant 0 : i32
    %c0_i32_1 = arith.constant 0 : i32
    return %c0_i32, %c0_i32_0 : i32, i32
  }
  func.func @transform_10(%arg0: i32) -> (i32, i32) {
    %c0_i32 = arith.constant 0 : i32
    %c0_i32_0 = arith.constant 0 : i32
    return %c0_i32, %arg0 : i32, i32
  }
}

</mosaic_0001>

<llo_original>
// kernel: tpu_custom_call.1
$region0: #{tpu_custom_call.1}
  #allocation0 [shape = 'u32[]', space=smem, size = 0x4, offset = 0x4, fixed_abs, tag = 'smem constant byte address 0x4 - core index']
  #allocation1 [shape = 'u32[144,128]{1,0:T(1,128)}', space=vmem, size = 0x12000, scoped, tag = 'internal scratch']
  #allocation2 [shape = 'f32[1,1]{1,0:T(1,128)S(1)}', space=vmem, size = 0x200, scoped, tag = 'scoped memory for tpu_custom_call.1']
  %s0 = inlined_call_operand.vmem [shape: bf16[512,16], index: 0, kind: input, shape index: {}]
  %s1 = inlined_call_operand.vmem [shape: bf16[512,16], index: 1, kind: input, shape index: {}]
  %s2 = inlined_call_operand.vmem [shape: f32[16,32], index: 2, kind: input, shape index: {}]
  %s3 = inlined_call_operand.vmem [shape: f32[16,32], index: 3, kind: input, shape index: {}]
  %s4 = inlined_call_operand.vmem [shape: f32[1,32], index: 4, kind: input, shape index: {}]
  %s5 = inlined_call_operand.vmem [shape: bf16[32,16], index: 5, kind: input, shape index: {}]
  %s6 = inlined_call_operand.vmem [shape: f32[1,16], index: 6, kind: input, shape index: {}]
  %s7 = inlined_call_operand.vmem [shape: f32[1,16], index: 7, kind: input, shape index: {}]
  %s8 = inlined_call_operand.vmem [shape: f32[1,16], index: 8, kind: input, shape index: {}]
  %s9 = inlined_call_operand.<no memory space> [shape: f32[1,1], index: 9, kind: input, shape index: {}]
  %s10 = inlined_call_operand.hbm [shape: f32[1,512], index: 10, kind: output, shape index: {}]
  %s11 = sld [smem:[#allocation0]]
  $region73: #{tpu_custom_call.1} parent=0
    _
  %s13 = ssub.s32 1, %s11
  %s14 = scalar_select 0, %s13, %s11
  %v15 = vstv %s9
  %16 = vst [vmem:[#allocation2] sm:$0x1] %v15
  $region1: #{tpu_custom_call.1} parent=0
    #allocation3 [shape = 'u8[2048]{0}', space=vmem, size = 0x800, scoped, tag = 'output window, operand 0']
    #allocation4 [shape = 's32[2]{0}', space=sflag, size = 0x8, scoped, tag = 'scoped memory for tpu_custom_call.1']
    %17 = vsyncpa [#allocation4], 0
    %s18 = scalar_lea.sflag [#allocation4], 1
    %19 = vsyncpa %s18, 0
    loop: start=0, step=1, limit=4
    $region2: #{tpu_custom_call.1} parent=1 // loop_pre_header
      _
    $region3: #{tpu_custom_call.1} parent=1 // loop_header
      %s21 = sphi 0, %s25
      %p22 = scmp.ge.s32.totalorder %s21, 4
      %s31 = sphi 0, %s33
      %s34 = sphi 0, %s31
      %s35 = sphi 0, %s34
      %s51 = sphi 0, %s35
      %s57 = sphi 0, %s59
      %s60 = sphi 0, %s57
      %s61 = sphi 0, %s60
      %s77 = sphi 0, %s61
      %s81 = sphi 0, %s81
      %s83 = sphi 0, %s81
      %s84 = sphi 0, %s83
      %s98 = sphi 0, %s84
      %s102 = sphi 0, %s102
      %s104 = sphi 0, %s102
      %s105 = sphi 0, %s104
      %s119 = sphi 0, %s105
      %s123 = sphi 0, %s123
      %s125 = sphi 0, %s123
      %s126 = sphi 0, %s125
      %s140 = sphi 0, %s126
      %s144 = sphi 0, %s144
      %s146 = sphi 0, %s144
      %s147 = sphi 0, %s146
      %s161 = sphi 0, %s147
      %s165 = sphi 0, %s165
      %s167 = sphi 0, %s165
      %s168 = sphi 0, %s167
      %s182 = sphi 0, %s168
      %s186 = sphi 0, %s186
      %s188 = sphi 0, %s186
      %s189 = sphi 0, %s188
      %s203 = sphi 0, %s189
      %s207 = sphi 0, %s207
      %s209 = sphi 0, %s207
      %s210 = sphi 0, %s209
      %s224 = sphi 0, %s210
      %s228 = sphi 0, %s228
      %s230 = sphi 0, %s228
      %s231 = sphi 0, %s230
      %s245 = sphi 0, %s231
      %s251 = sphi 0, %s253
      %s254 = sphi 0, %s251
      %s255 = sphi 0, %s254
      %s271 = sphi 0, %s255
    $region4: #{tpu_custom_call.1} parent=1 // loop_header_branch
      %24 = sbr.rel (%p22) target = $region8
    $region5: #{tpu_custom_call.1} parent=1 // loop_body
      %s26 = ssub.s32 %s21, 1
      %s27 = ssub.s32 %s21, 2
      %s28 = sadd.s32 %s21, 1
      %s29 = ssub.s32 %s21, %s28
      %p30 = scmp.eq.s32.totalorder %s29, 0
      %s32 = sadd.s32 %s31, 1
      %s33 = scalar_select %p30, %s31, %s32
      %p36 = pneg %p30
      %p37 = scmp.eq.s32.totalorder %s21, 1
      %p38 = por %p36, %p37
      %p39 = scmp.ne.s32.totalorder %s31, %s34
      %p40 = scmp.eq.s32.totalorder %s21, 0
      %p41 = por %p39, %p40
      %p42 = scmp.ne.s32.totalorder %s31, %s34
      %p43 = scmp.eq.s32.totalorder %s26, 1
      %p44 = por %p42, %p43
      %p45 = scmp.ne.s32.totalorder %s34, %s35
      %p46 = scmp.eq.s32.totalorder %s26, 0
      %p47 = por %p45, %p46
      %p48 = scmp.ne.s32.totalorder %s34, %s35
      %p49 = scmp.eq.s32.totalorder %s27, 1
      %p50 = por %p48, %p49
      %p52 = scmp.ne.s32.totalorder %s35, %s51
      %p53 = scmp.eq.s32.totalorder %s27, 0
      %p54 = por %p52, %p53
      %s55 = ssub.s32 %s21, %s28
      %p56 = scmp.eq.s32.totalorder %s55, 0
      %s58 = sadd.s32 %s57, 1
      %s59 = scalar_select %p56, %s57, %s58
      %p62 = pneg %p56
      %p63 = scmp.eq.s32.totalorder %s21, 1
      %p64 = por %p62, %p63
      %p65 = scmp.ne.s32.totalorder %s57, %s60
      %p66 = scmp.eq.s32.totalorder %s21, 0
      %p67 = por %p65, %p66
      %p68 = scmp.ne.s32.totalorder %s57, %s60
      %p69 = scmp.eq.s32.totalorder %s26, 1
      %p70 = por %p68, %p69
      %p71 = scmp.ne.s32.totalorder %s60, %s61
      %p72 = scmp.eq.s32.totalorder %s26, 0
      %p73 = por %p71, %p72
      %p74 = scmp.ne.s32.totalorder %s60, %s61
      %p75 = scmp.eq.s32.totalorder %s27, 1
      %p76 = por %p74, %p75
      %p78 = scmp.ne.s32.totalorder %s61, %s77
      %p79 = scmp.eq.s32.totalorder %s27, 0
      %p80 = por %p78, %p79
      %s82 = sadd.s32 %s81, 1
      %p85 = scmp.eq.s32.totalorder %s21, 1
      %p86 = scmp.ne.s32.totalorder %s81, %s83
      %p87 = scmp.eq.s32.totalorder %s21, 0
      %p88 = por %p86, %p87
      %p89 = scmp.ne.s32.totalorder %s81, %s83
      %p90 = scmp.eq.s32.totalorder %s26, 1
      %p91 = por %p89, %p90
      %p92 = scmp.ne.s32.totalorder %s83, %s84
      %p93 = scmp.eq.s32.totalorder %s26, 0
      %p94 = por %p92, %p93
      %p95 = scmp.ne.s32.totalorder %s83, %s84
      %p96 = scmp.eq.s32.totalorder %s27, 1
      %p97 = por %p95, %p96
      %p99 = scmp.ne.s32.totalorder %s84, %s98
      %p100 = scmp.eq.s32.totalorder %s27, 0
      %p101 = por %p99, %p100
      %s103 = sadd.s32 %s102, 1
      %p106 = scmp.eq.s32.totalorder %s21, 1
      %p107 = scmp.ne.s32.totalorder %s102, %s104
      %p108 = scmp.eq.s32.totalorder %s21, 0
      %p109 = por %p107, %p108
      %p110 = scmp.ne.s32.totalorder %s102, %s104
      %p111 = scmp.eq.s32.totalorder %s26, 1
      %p112 = por %p110, %p111
      %p113 = scmp.ne.s32.totalorder %s104, %s105
      %p114 = scmp.eq.s32.totalorder %s26, 0
      %p115 = por %p113, %p114
      %p116 = scmp.ne.s32.totalorder %s104, %s105
      %p117 = scmp.eq.s32.totalorder %s27, 1
      %p118 = por %p116, %p117
      %p120 = scmp.ne.s32.totalorder %s105, %s119
      %p121 = scmp.eq.s32.totalorder %s27, 0
      %p122 = por %p120, %p121
      %s124 = sadd.s32 %s123, 1
      %p127 = scmp.eq.s32.totalorder %s21, 1
      %p128 = scmp.ne.s32.totalorder %s123, %s125
      %p129 = scmp.eq.s32.totalorder %s21, 0
      %p130 = por %p128, %p129
      %p131 = scmp.ne.s32.totalorder %s123, %s125
      %p132 = scmp.eq.s32.totalorder %s26, 1
      %p133 = por %p131, %p132
      %p134 = scmp.ne.s32.totalorder %s125, %s126
      %p135 = scmp.eq.s32.totalorder %s26, 0
      %p136 = por %p134, %p135
      %p137 = scmp.ne.s32.totalorder %s125, %s126
      %p138 = scmp.eq.s32.totalorder %s27, 1
      %p139 = por %p137, %p138
      %p141 = scmp.ne.s32.totalorder %s126, %s140
      %p142 = scmp.eq.s32.totalorder %s27, 0
      %p143 = por %p141, %p142
      %s145 = sadd.s32 %s144, 1
      %p148 = scmp.eq.s32.totalorder %s21, 1
      %p149 = scmp.ne.s32.totalorder %s144, %s146
      %p150 = scmp.eq.s32.totalorder %s21, 0
      %p151 = por %p149, %p150
      %p152 = scmp.ne.s32.totalorder %s144, %s146
      %p153 = scmp.eq.s32.totalorder %s26, 1
      %p154 = por %p152, %p153
      %p155 = scmp.ne.s32.totalorder %s146, %s147
      %p156 = scmp.eq.s32.totalorder %s26, 0
      %p157 = por %p155, %p156
      %p158 = scmp.ne.s32.totalorder %s146, %s147
      %p159 = scmp.eq.s32.totalorder %s27, 1
      %p160 = por %p158, %p159
      %p162 = scmp.ne.s32.totalorder %s147, %s161
      %p163 = scmp.eq.s32.totalorder %s27, 0
      %p164 = por %p162, %p163
      %s166 = sadd.s32 %s165, 1
      %p169 = scmp.eq.s32.totalorder %s21, 1
      %p170 = scmp.ne.s32.totalorder %s165, %s167
      %p171 = scmp.eq.s32.totalorder %s21, 0
      %p172 = por %p170, %p171
      %p173 = scmp.ne.s32.totalorder %s165, %s167
      %p174 = scmp.eq.s32.totalorder %s26, 1
      %p175 = por %p173, %p174
      %p176 = scmp.ne.s32.totalorder %s167, %s168
      %p177 = scmp.eq.s32.totalorder %s26, 0
      %p178 = por %p176, %p177
      %p179 = scmp.ne.s32.totalorder %s167, %s168
      %p180 = scmp.eq.s32.totalorder %s27, 1
      %p181 = por %p179, %p180
      %p183 = scmp.ne.s32.totalorder %s168, %s182
      %p184 = scmp.eq.s32.totalorder %s27, 0
      %p185 = por %p183, %p184
      %s187 = sadd.s32 %s186, 1
      %p190 = scmp.eq.s32.totalorder %s21, 1
      %p191 = scmp.ne.s32.totalorder %s186, %s188
      %p192 = scmp.eq.s32.totalorder %s21, 0
      %p193 = por %p191, %p192
      %p194 = scmp.ne.s32.totalorder %s186, %s188
      %p195 = scmp.eq.s32.totalorder %s26, 1
      %p196 = por %p194, %p195
      %p197 = scmp.ne.s32.totalorder %s188, %s189
      %p198 = scmp.eq.s32.totalorder %s26, 0
      %p199 = por %p197, %p198
      %p200 = scmp.ne.s32.totalorder %s188, %s189
      %p201 = scmp.eq.s32.totalorder %s27, 1
      %p202 = por %p200, %p201
      %p204 = scmp.ne.s32.totalorder %s189, %s203
      %p205 = scmp.eq.s32.totalorder %s27, 0
      %p206 = por %p204, %p205
      %s208 = sadd.s32 %s207, 1
      %p211 = scmp.eq.s32.totalorder %s21, 1
      %p212 = scmp.ne.s32.totalorder %s207, %s209
      %p213 = scmp.eq.s32.totalorder %s21, 0
      %p214 = por %p212, %p213
      %p215 = scmp.ne.s32.totalorder %s207, %s209
      %p216 = scmp.eq.s32.totalorder %s26, 1
      %p217 = por %p215, %p216
      %p218 = scmp.ne.s32.totalorder %s209, %s210
      %p219 = scmp.eq.s32.totalorder %s26, 0
      %p220 = por %p218, %p219
      %p221 = scmp.ne.s32.totalorder %s209, %s210
      %p222 = scmp.eq.s32.totalorder %s27, 1
      %p223 = por %p221, %p222
      %p225 = scmp.ne.s32.totalorder %s210, %s224
      %p226 = scmp.eq.s32.totalorder %s27, 0
      %p227 = por %p225, %p226
      %s229 = sadd.s32 %s228, 1
      %p232 = scmp.eq.s32.totalorder %s21, 1
      %p233 = scmp.ne.s32.totalorder %s228, %s230
      %p234 = scmp.eq.s32.totalorder %s21, 0
      %p235 = por %p233, %p234
      %p236 = scmp.ne.s32.totalorder %s228, %s230
      %p237 = scmp.eq.s32.totalorder %s26, 1
      %p238 = por %p236, %p237
      %p239 = scmp.ne.s32.totalorder %s230, %s231
      %p240 = scmp.eq.s32.totalorder %s26, 0
      %p241 = por %p239, %p240
      %p242 = scmp.ne.s32.totalorder %s230, %s231
      %p243 = scmp.eq.s32.totalorder %s27, 1
      %p244 = por %p242, %p243
      %p246 = scmp.ne.s32.totalorder %s231, %s245
      %p247 = scmp.eq.s32.totalorder %s27, 0
      %p248 = por %p246, %p247
      %s249 = ssub.s32 %s21, %s28
      %p250 = scmp.eq.s32.totalorder %s249, 0
      %s252 = sadd.s32 %s251, 1
      %s253 = scalar_select %p250, %s251, %s252
      %p256 = pneg %p250
      %p257 = scmp.eq.s32.totalorder %s21, 1
      %p258 = por %p256, %p257
      %p259 = scmp.ne.s32.totalorder %s251, %s254
      %p260 = scmp.eq.s32.totalorder %s21, 0
      %p261 = por %p259, %p260
      %p262 = scmp.ne.s32.totalorder %s251, %s254
      %p263 = scmp.eq.s32.totalorder %s26, 1
      %p264 = por %p262, %p263
      %p265 = scmp.ne.s32.totalorder %s254, %s255
      %p266 = scmp.eq.s32.totalorder %s26, 0
      %p267 = por %p265, %p266
      %p268 = scmp.ne.s32.totalorder %s254, %s255
      %p269 = scmp.eq.s32.totalorder %s27, 1
      %p270 = por %p268, %p269
      %p272 = scmp.ne.s32.totalorder %s255, %s271
      %p273 = scmp.eq.s32.totalorder %s27, 0
      %p274 = por %p272, %p273
      %p275 = scmp.le.s32.totalorder 1, %s21
      %p276 = scmp.lt.s32.totalorder %s21, 3
      %p277 = pnand %p275, %p276
      %p278 = pneg %p277
      // Predicated region
      $region9: #{tpu_custom_call.1} parent=5 // pred_check
        _
      $region10: #{tpu_custom_call.1} parent=5 // pred_check_branch
        %280 = sbr.rel (%p277) target = $region12
      $region11: #{tpu_custom_call.1} parent=5 // pred_region
        %s281 = ssub.s32 %s21, 1
        // Predicated region
        $region13: #{tpu_custom_call.1} parent=11 // pred_check
          %p282 = pneg %p94
        $region14: #{tpu_custom_call.1} parent=11 // pred_check_branch
          %284 = sbr.rel (%p282) target = $region16
        $region15: #{tpu_custom_call.1} parent=11 // pred_region
          _
        $region16: #{tpu_custom_call.1} parent=11 // pred_fallthru
          _
        // Predicated region
        $region17: #{tpu_custom_call.1} parent=11 // pred_check
          %p285 = pneg %p115
        $region18: #{tpu_custom_call.1} parent=11 // pred_check_branch
          %287 = sbr.rel (%p285) target = $region20
        $region19: #{tpu_custom_call.1} parent=11 // pred_region
          _
        $region20: #{tpu_custom_call.1} parent=11 // pred_fallthru
          _
        // Predicated region
        $region21: #{tpu_custom_call.1} parent=11 // pred_check
          %p288 = pneg %p136
        $region22: #{tpu_custom_call.1} parent=11 // pred_check_branch
          %290 = sbr.rel (%p288) target = $region24
        $region23: #{tpu_custom_call.1} parent=11 // pred_region
          _
        $region24: #{tpu_custom_call.1} parent=11 // pred_fallthru
          _
        // Predicated region
        $region25: #{tpu_custom_call.1} parent=11 // pred_check
          %p291 = pneg %p157
        $region26: #{tpu_custom_call.1} parent=11 // pred_check_branch
          %293 = sbr.rel (%p291) target = $region28
        $region27: #{tpu_custom_call.1} parent=11 // pred_region
          _
        $region28: #{tpu_custom_call.1} parent=11 // pred_fallthru
          _
        // Predicated region
        $region29: #{tpu_custom_call.1} parent=11 // pred_check
          %p294 = pneg %p178
        $region30: #{tpu_custom_call.1} parent=11 // pred_check_branch
          %296 = sbr.rel (%p294) target = $region32
        $region31: #{tpu_custom_call.1} parent=11 // pred_region
          _
        $region32: #{tpu_custom_call.1} parent=11 // pred_fallthru
          _
        // Predicated region
        $region33: #{tpu_custom_call.1} parent=11 // pred_check
          %p297 = pneg %p199
        $region34: #{tpu_custom_call.1} parent=11 // pred_check_branch
          %299 = sbr.rel (%p297) target = $region36
        $region35: #{tpu_custom_call.1} parent=11 // pred_region
          _
        $region36: #{tpu_custom_call.1} parent=11 // pred_fallthru
          _
        // Predicated region
        $region37: #{tpu_custom_call.1} parent=11 // pred_check
          %p300 = pneg %p220
        $region38: #{tpu_custom_call.1} parent=11 // pred_check_branch
          %302 = sbr.rel (%p300) target = $region40
        $region39: #{tpu_custom_call.1} parent=11 // pred_region
          _
        $region40: #{tpu_custom_call.1} parent=11 // pred_fallthru
          _
        // Predicated region
        $region41: #{tpu_custom_call.1} parent=11 // pred_check
          %p303 = pneg %p241
        $region42: #{tpu_custom_call.1} parent=11 // pred_check_branch
          %305 = sbr.rel (%p303) target = $region44
        $region43: #{tpu_custom_call.1} parent=11 // pred_region
          _
        $region44: #{tpu_custom_call.1} parent=11 // pred_fallthru
          _
      $region12: #{tpu_custom_call.1} parent=5 // pred_fallthru
        _
      %p306 = scmp.lt.s32.totalorder %s21, 2
      // Predicated region
      $region45: #{tpu_custom_call.1} parent=5 // pred_check
        %p307 = pneg %p306
      $region46: #{tpu_custom_call.1} parent=5 // pred_check_branch
        %309 = sbr.rel (%p307) target = $region48
      $region47: #{tpu_custom_call.1} parent=5 // pred_region
        // Predicated region
        $region49: #{tpu_custom_call.1} parent=47 // pred_check
          %p310 = pneg %p41
        $region50: #{tpu_custom_call.1} parent=47 // pred_check_branch
          %312 = sbr.rel (%p310) target = $region52
        $region51: #{tpu_custom_call.1} parent=47 // pred_region
          %s313 = smul.u32 32, %s21
          %p314 = scmp.lt.s32.totalorder %s313, 63
          %s315 = scalar_select %p314, %s313, 63
          %s316 = smul.addr %s315, 4
          %s317 = scalar_lea.vmem %s0, %s316
          %s318 = smul.u32 32, %s21
        $region52: #{tpu_custom_call.1} parent=47 // pred_fallthru
          _
        // Predicated region
        $region53: #{tpu_custom_call.1} parent=47 // pred_check
          %p319 = pneg %p67
        $region54: #{tpu_custom_call.1} parent=47 // pred_check_branch
          %321 = sbr.rel (%p319) target = $region56
        $region55: #{tpu_custom_call.1} parent=47 // pred_region
          %s322 = smul.u32 32, %s21
          %p323 = scmp.lt.s32.totalorder %s322, 63
          %s324 = scalar_select %p323, %s322, 63
          %s325 = smul.addr %s324, 4
          %s326 = scalar_lea.vmem %s1, %s325
          %s327 = smul.u32 32, %s21
        $region56: #{tpu_custom_call.1} parent=47 // pred_fallthru
          _
      $region48: #{tpu_custom_call.1} parent=5 // pred_fallthru
        _
      %p328 = scmp.le.s32.totalorder 1, %s21
      %p329 = scmp.lt.s32.totalorder %s21, 3
      %p330 = pnand %p328, %p329
      %p331 = pneg %p330
      // Predicated region
      $region57: #{tpu_custom_call.1} parent=5 // pred_check
        _
      $region58: #{tpu_custom_call.1} parent=5 // pred_check_branch
        %333 = sbr.rel (%p330) target = $region60
      $region59: #{tpu_custom_call.1} parent=5 // pred_region
        %s334 = ssub.s32 %s21, 1
        %s335 = smul.u32 32, %s26
        %p336 = scmp.lt.s32.totalorder %s335, 63
        %s337 = scalar_select %p336, %s335, 63
        %s338 = smul.addr %s337, 4
        %s339 = scalar_lea.vmem %s0, %s338
        %p340 = pneg %p47
        %p341 = pneg %p44
        %s342 = smul.u32 32, %s26
        %p343 = scmp.lt.s32.totalorder %s342, 63
        %s344 = scalar_select %p343, %s342, 63
        %s345 = smul.addr %s344, 4
        %s346 = scalar_lea.vmem %s1, %s345
        %p347 = pneg %p73
        %p348 = pneg %p70
        %p349 = pneg %p94
        %p350 = pneg %p91
        %p351 = pneg %p115
        %p352 = pneg %p112
        %p353 = pneg %p136
        %p354 = pneg %p133
        %p355 = pneg %p157
        %p356 = pneg %p154
        %p357 = pneg %p178
        %p358 = pneg %p175
        %p359 = pneg %p199
        %p360 = pneg %p196
        %p361 = pneg %p220
        %p362 = pneg %p217
        %p363 = pneg %p241
        %p364 = pneg %p238
        %p365 = pneg %p267
        %p366 = pneg %p264
        %s367 = sand.u32 %s254, 1
        %s368 = scalar_lea.sflag [#allocation4], %s367
        %s369 = sand.u32 %s254, 1
        %s370 = smul.addr %s369, 2
        %s371 = scalar_lea.vmem [#allocation3], %s370
        %s372 = smul.u32 32, %s26
        %p373 = scmp.lt.s32.totalorder %s372, 63
        %s374 = scalar_select %p373, %s372, 63
        %s375 = smul.addr %s374, 4
        %s376 = scalar_lea.vmem %s0, %s375
        %s377 = smul.u32 32, %s26
        %s378 = smul.u32 32, %s26
        %p379 = scmp.lt.s32.totalorder %s378, 63
        %s380 = scalar_select %p379, %s378, 63
        %s381 = smul.addr %s380, 4
        %s382 = scalar_lea.vmem %s1, %s381
        %s383 = smul.u32 32, %s26
        %s384 = smul.u32 2, %s26
        %v386 = vld [vmem:[%s376] sm:$0xf]
        %v387 = vld [vmem:[%s376 + $0x4] sm:$0xf]
        %v388 = vld [vmem:[%s376 + $0x8] sm:$0xf]
        %v389 = vld [vmem:[%s376 + $0xc] sm:$0xf]
        %v390 = vld [vmem:[%s376 + $0x10] sm:$0xf]
        %v391 = vld [vmem:[%s376 + $0x14] sm:$0xf]
        %v392 = vld [vmem:[%s376 + $0x18] sm:$0xf]
        %v393 = vld [vmem:[%s376 + $0x1c] sm:$0xf]
        %v394 = vld [vmem:[%s376 + $0x20] sm:$0xf]
        %v395 = vld [vmem:[%s376 + $0x24] sm:$0xf]
        %v396 = vld [vmem:[%s376 + $0x28] sm:$0xf]
        %v397 = vld [vmem:[%s376 + $0x2c] sm:$0xf]
        %v398 = vld [vmem:[%s376 + $0x30] sm:$0xf]
        %v399 = vld [vmem:[%s376 + $0x34] sm:$0xf]
        %v400 = vld [vmem:[%s376 + $0x38] sm:$0xf]
        %v401 = vld [vmem:[%s376 + $0x3c] sm:$0xf]
        %v402 = vld [vmem:[%s376 + $0x40] sm:$0xf]
        %v403 = vld [vmem:[%s376 + $0x44] sm:$0xf]
        %v404 = vld [vmem:[%s376 + $0x48] sm:$0xf]
        %v405 = vld [vmem:[%s376 + $0x4c] sm:$0xf]
        %v406 = vld [vmem:[%s376 + $0x50] sm:$0xf]
        %v407 = vld [vmem:[%s376 + $0x54] sm:$0xf]
        %v408 = vld [vmem:[%s376 + $0x58] sm:$0xf]
        %v409 = vld [vmem:[%s376 + $0x5c] sm:$0xf]
        %v410 = vld [vmem:[%s376 + $0x60] sm:$0xf]
        %v411 = vld [vmem:[%s376 + $0x64] sm:$0xf]
        %v412 = vld [vmem:[%s376 + $0x68] sm:$0xf]
        %v413 = vld [vmem:[%s376 + $0x6c] sm:$0xf]
        %v414 = vld [vmem:[%s376 + $0x70] sm:$0xf]
        %v415 = vld [vmem:[%s376 + $0x74] sm:$0xf]
        %v416 = vld [vmem:[%s376 + $0x78] sm:$0xf]
        %v417 = vld [vmem:[%s376 + $0x7c] sm:$0xf]
        %v418 = vunpack.c.l.bf16 %v386
        %v419 = vunpack.c.l.bf16 %v387
        %v420 = vunpack.c.l.bf16 %v388
        %v421 = vunpack.c.l.bf16 %v389
        %v422 = vunpack.c.l.bf16 %v390
        %v423 = vunpack.c.l.bf16 %v391
        %v424 = vunpack.c.l.bf16 %v392
        %v425 = vunpack.c.l.bf16 %v393
        %v426 = vunpack.c.l.bf16 %v394
        %v427 = vunpack.c.l.bf16 %v395
        %v428 = vunpack.c.l.bf16 %v396
        %v429 = vunpack.c.l.bf16 %v397
        %v430 = vunpack.c.l.bf16 %v398
        %v431 = vunpack.c.l.bf16 %v399
        %v432 = vunpack.c.l.bf16 %v400
        %v433 = vunpack.c.l.bf16 %v401
        %v434 = vunpack.c.l.bf16 %v402
        %v435 = vunpack.c.l.bf16 %v403
        %v436 = vunpack.c.l.bf16 %v404
        %v437 = vunpack.c.l.bf16 %v405
        %v438 = vunpack.c.l.bf16 %v406
        %v439 = vunpack.c.l.bf16 %v407
        %v440 = vunpack.c.l.bf16 %v408
        %v441 = vunpack.c.l.bf16 %v409
        %v442 = vunpack.c.l.bf16 %v410
        %v443 = vunpack.c.l.bf16 %v411
        %v444 = vunpack.c.l.bf16 %v412
        %v445 = vunpack.c.l.bf16 %v413
        %v446 = vunpack.c.l.bf16 %v414
        %v447 = vunpack.c.l.bf16 %v415
        %v448 = vunpack.c.l.bf16 %v416
        %v449 = vunpack.c.l.bf16 %v417
        %v450 = vld [vmem:[%s382] sm:$0xf]
        %v451 = vld [vmem:[%s382 + $0x4] sm:$0xf]
        %v452 = vld [vmem:[%s382 + $0x8] sm:$0xf]
        %v453 = vld [vmem:[%s382 + $0xc] sm:$0xf]
        %v454 = vld [vmem:[%s382 + $0x10] sm:$0xf]
        %v455 = vld [vmem:[%s382 + $0x14] sm:$0xf]
        %v456 = vld [vmem:[%s382 + $0x18] sm:$0xf]
        %v457 = vld [vmem:[%s382 + $0x1c] sm:$0xf]
        %v458 = vld [vmem:[%s382 + $0x20] sm:$0xf]
        %v459 = vld [vmem:[%s382 + $0x24] sm:$0xf]
        %v460 = vld [vmem:[%s382 + $0x28] sm:$0xf]
        %v461 = vld [vmem:[%s382 + $0x2c] sm:$0xf]
        %v462 = vld [vmem:[%s382 + $0x30] sm:$0xf]
        %v463 = vld [vmem:[%s382 + $0x34] sm:$0xf]
        %v464 = vld [vmem:[%s382 + $0x38] sm:$0xf]
        %v465 = vld [vmem:[%s382 + $0x3c] sm:$0xf]
        %v466 = vld [vmem:[%s382 + $0x40] sm:$0xf]
        %v467 = vld [vmem:[%s382 + $0x44] sm:$0xf]
        %v468 = vld [vmem:[%s382 + $0x48] sm:$0xf]
        %v469 = vld [vmem:[%s382 + $0x4c] sm:$0xf]
        %v470 = vld [vmem:[%s382 + $0x50] sm:$0xf]
        %v471 = vld [vmem:[%s382 + $0x54] sm:$0xf]
        %v472 = vld [vmem:[%s382 + $0x58] sm:$0xf]
        %v473 = vld [vmem:[%s382 + $0x5c] sm:$0xf]
        %v474 = vld [vmem:[%s382 + $0x60] sm:$0xf]
        %v475 = vld [vmem:[%s382 + $0x64] sm:$0xf]
        %v476 = vld [vmem:[%s382 + $0x68] sm:$0xf]
        %v477 = vld [vmem:[%s382 + $0x6c] sm:$0xf]
        %v478 = vld [vmem:[%s382 + $0x70] sm:$0xf]
        %v479 = vld [vmem:[%s382 + $0x74] sm:$0xf]
        %v480 = vld [vmem:[%s382 + $0x78] sm:$0xf]
        %v481 = vld [vmem:[%s382 + $0x7c] sm:$0xf]
        %v482 = vunpack.c.l.bf16 %v450
        %v483 = vunpack.c.l.bf16 %v451
        %v484 = vunpack.c.l.bf16 %v452
        %v485 = vunpack.c.l.bf16 %v453
        %v486 = vunpack.c.l.bf16 %v454
        %v487 = vunpack.c.l.bf16 %v455
        %v488 = vunpack.c.l.bf16 %v456
        %v489 = vunpack.c.l.bf16 %v457
        %v490 = vunpack.c.l.bf16 %v458
        %v491 = vunpack.c.l.bf16 %v459
        %v492 = vunpack.c.l.bf16 %v460
        %v493 = vunpack.c.l.bf16 %v461
        %v494 = vunpack.c.l.bf16 %v462
        %v495 = vunpack.c.l.bf16 %v463
        %v496 = vunpack.c.l.bf16 %v464
        %v497 = vunpack.c.l.bf16 %v465
        %v498 = vunpack.c.l.bf16 %v466
        %v499 = vunpack.c.l.bf16 %v467
        %v500 = vunpack.c.l.bf16 %v468
        %v501 = vunpack.c.l.bf16 %v469
        %v502 = vunpack.c.l.bf16 %v470
        %v503 = vunpack.c.l.bf16 %v471
        %v504 = vunpack.c.l.bf16 %v472
        %v505 = vunpack.c.l.bf16 %v473
        %v506 = vunpack.c.l.bf16 %v474
        %v507 = vunpack.c.l.bf16 %v475
        %v508 = vunpack.c.l.bf16 %v476
        %v509 = vunpack.c.l.bf16 %v477
        %v510 = vunpack.c.l.bf16 %v478
        %v511 = vunpack.c.l.bf16 %v479
        %v512 = vunpack.c.l.bf16 %v480
        %v513 = vunpack.c.l.bf16 %v481
        %v514 = vmul.f32 %v418, %v482
        %v515 = vmul.f32 %v419, %v483
        %v516 = vmul.f32 %v420, %v484
        %v517 = vmul.f32 %v421, %v485
        %v518 = vmul.f32 %v422, %v486
        %v519 = vmul.f32 %v423, %v487
        %v520 = vmul.f32 %v424, %v488
        %v521 = vmul.f32 %v425, %v489
        %v522 = vmul.f32 %v426, %v490
        %v523 = vmul.f32 %v427, %v491
        %v524 = vmul.f32 %v428, %v492
        %v525 = vmul.f32 %v429, %v493
        %v526 = vmul.f32 %v430, %v494
        %v527 = vmul.f32 %v431, %v495
        %v528 = vmul.f32 %v432, %v496
        %v529 = vmul.f32 %v433, %v497
        %v530 = vmul.f32 %v434, %v498
        %v531 = vmul.f32 %v435, %v499
        %v532 = vmul.f32 %v436, %v500
        %v533 = vmul.f32 %v437, %v501
        %v534 = vmul.f32 %v438, %v502
        %v535 = vmul.f32 %v439, %v503
        %v536 = vmul.f32 %v440, %v504
        %v537 = vmul.f32 %v441, %v505
        %v538 = vmul.f32 %v442, %v506
        %v539 = vmul.f32 %v443, %v507
        %v540 = vmul.f32 %v444, %v508
        %v541 = vmul.f32 %v445, %v509
        %v542 = vmul.f32 %v446, %v510
        %v543 = vmul.f32 %v447, %v511
        %v544 = vmul.f32 %v448, %v512
        %v545 = vmul.f32 %v449, %v513
        %v546 = vld [vmem:[%s2] sm:$0xff]
        %v547 = vld [vmem:[%s2 + $0x8] sm:$0xff]
        %v548 = vld [vmem:[%s3] sm:$0xff]
        %v549 = vld [vmem:[%s3 + $0x8] sm:$0xff]
        %vm550 = vcmask 130048
        %v552 = vsel %vm550, %v482, 0
        %v555 = vsel %vm550, %v483, 0
        %v558 = vsel %vm550, %v484, 0
        %v561 = vsel %vm550, %v485, 0
        %v564 = vsel %vm550, %v486, 0
        %v567 = vsel %vm550, %v487, 0
        %v570 = vsel %vm550, %v488, 0
        %v573 = vsel %vm550, %v489, 0
        %v576 = vsel %vm550, %v490, 0
        %v579 = vsel %vm550, %v491, 0
        %v582 = vsel %vm550, %v492, 0
        %v585 = vsel %vm550, %v493, 0
        %v588 = vsel %vm550, %v494, 0
        %v591 = vsel %vm550, %v495, 0
        %v594 = vsel %vm550, %v496, 0
        %v597 = vsel %vm550, %v497, 0
        %v600 = vsel %vm550, %v498, 0
        %v603 = vsel %vm550, %v499, 0
        %v606 = vsel %vm550, %v500, 0
        %v609 = vsel %vm550, %v501, 0
        %v612 = vsel %vm550, %v502, 0
        %v615 = vsel %vm550, %v503, 0
        %v618 = vsel %vm550, %v504, 0
        %v621 = vsel %vm550, %v505, 0
        %v624 = vsel %vm550, %v506, 0
        %v627 = vsel %vm550, %v507, 0
        %v630 = vsel %vm550, %v508, 0
        %v633 = vsel %vm550, %v509, 0
        %v636 = vsel %vm550, %v510, 0
        %v639 = vsel %vm550, %v511, 0
        %v642 = vsel %vm550, %v512, 0
        %v645 = vsel %vm550, %v513, 0
        %647 = vmatprep.subr.mxu0 0.0
        %648 = vmatpush1.msra.mxu0 %v548
        %649 = vmatprep.subr.mxu0 0.0
        %650 = vmatpush1.msra.mxu0 %v549
        %651 = vmatprep.subr.mxu0 0.0
        %652 = vmatpush1.msra.mxu0 0.0
        %653 = vmatprep.subr.mxu0 0.0
        %654 = vmatpush1.msra.mxu0 0.0
        %655 = vmatprep.subr.mxu0 0.0
        %656 = vmatpush1.msra.mxu0 0.0
        %657 = vmatprep.subr.mxu0 0.0
        %658 = vmatpush1.msra.mxu0 0.0
        %659 = vmatprep.subr.mxu0 0.0
        %660 = vmatpush1.msra.mxu0 0.0
        %661 = vmatprep.subr.mxu0 0.0
        %662 = vmatpush1.msra.mxu0 0.0
        %663 = vmatprep.subr.mxu0 0.0
        %664 = vmatpush1.msra.mxu0 0.0
        %665 = vmatprep.subr.mxu0 0.0
        %666 = vmatpush1.msra.mxu0 0.0
        %667 = vmatprep.subr.mxu0 0.0
        %668 = vmatpush1.msra.mxu0 0.0
        %669 = vmatprep.subr.mxu0 0.0
        %670 = vmatpush1.msra.mxu0 0.0
        %671 = vmatprep.subr.mxu0 0.0
        %672 = vmatpush1.msra.mxu0 0.0
        %673 = vmatprep.subr.mxu0 0.0
        %674 = vmatpush1.msra.mxu0 0.0
        %675 = vmatprep.subr.mxu0 0.0
        %676 = vmatpush1.msra.mxu0 0.0
        %677 = vmatprep.subr.mxu0 0.0
        %678 = vmatpush1.msra.mxu0 0.0
        %679 = vmatprep.subr.mxu0 0.0
        %680 = vmatpush1.msra.mxu0 0.0
        %681 = vmatprep.subr.mxu0 0.0
        %682 = vmatpush1.msra.mxu0 0.0
        %683 = vmatprep.subr.mxu0 0.0
        %684 = vmatpush1.msra.mxu0 0.0
        %685 = vmatprep.subr.mxu0 0.0
        %686 = vmatpush1.msra.mxu0 0.0
        %687 = vmatprep.subr.mxu0 0.0
        %688 = vmatpush1.msra.mxu0 0.0
        %689 = vmatprep.subr.mxu0 0.0
        %690 = vmatpush1.msra.mxu0 0.0
        %691 = vmatprep.subr.mxu0 0.0
        %692 = vmatpush1.msra.mxu0 0.0
        %693 = vmatprep.subr.mxu0 0.0
        %694 = vmatpush1.msra.mxu0 0.0
        %695 = vmatprep.subr.mxu0 0.0
        %696 = vmatpush1.msra.mxu0 0.0
        %697 = vmatprep.subr.mxu0 0.0
        %698 = vmatpush1.msra.mxu0 0.0
        %699 = vmatprep.subr.mxu0 0.0
        %700 = vmatpush1.msra.mxu0 0.0
        %701 = vmatprep.subr.mxu0 0.0
        %702 = vmatpush1.msra.mxu0 0.0
        %703 = vmatprep.subr.mxu0 0.0
        %704 = vmatpush1.msra.mxu0 0.0
        %705 = vmatprep.subr.mxu0 0.0
        %706 = vmatpush1.msra.mxu0 0.0
        %707 = vmatprep.subr.mxu0 0.0
        %708 = vmatpush1.msra.mxu0 0.0
        %709 = vmatprep.subr.mxu0 0.0
        %710 = vmatpush1.msra.mxu0 0.0
        %711 = vmatprep.mubr.f32.mxu0 0.0
        %712 = vmatmul.mubr.f32.gmra.mrb[0].mxu0 %v552
        %v713 = vpop.f32.mrb[0].mxu0
        %v714 = vadd.f32 0.0, %v713
        %v715 = vpop.f32.mrb[0].mxu0
        %716 = vmatprep.mubr.f32.mxu0 0.0
        %717 = vmatmul.mubr.f32.gmra.mrb[0].mxu0 %v555
        %v718 = vpop.f32.mrb[0].mxu0
        %v719 = vadd.f32 0.0, %v718
        %v720 = vpop.f32.mrb[0].mxu0
        %721 = vmatprep.mubr.f32.mxu0 0.0
        %722 = vmatmul.mubr.f32.gmra.mrb[0].mxu0 %v558
        %v723 = vpop.f32.mrb[0].mxu0
        %v724 = vadd.f32 0.0, %v723
        %v725 = vpop.f32.mrb[0].mxu0
        %726 = vmatprep.mubr.f32.mxu0 0.0
        %727 = vmatmul.mubr.f32.gmra.mrb[0].mxu0 %v561
        %v728 = vpop.f32.mrb[0].mxu0
        %v729 = vadd.f32 0.0, %v728
        %v730 = vpop.f32.mrb[0].mxu0
        %731 = vmatprep.mubr.f32.mxu0 0.0
        %732 = vmatmul.mubr.f32.gmra.mrb[0].mxu0 %v564
        %v733 = vpop.f32.mrb[0].mxu0
        %v734 = vadd.f32 0.0, %v733
        %v735 = vpop.f32.mrb[0].mxu0
        %736 = vmatprep.mubr.f32.mxu0 0.0
        %737 = vmatmul.mubr.f32.gmra.mrb[0].mxu0 %v567
        %v738 = vpop.f32.mrb[0].mxu0
        %v739 = vadd.f32 0.0, %v738
        %v740 = vpop.f32.mrb[0].mxu0
        %741 = vmatprep.mubr.f32.mxu0 0.0
        %742 = vmatmul.mubr.f32.gmra.mrb[0].mxu0 %v570
        %v743 = vpop.f32.mrb[0].mxu0
        %v744 = vadd.f32 0.0, %v743
        %v745 = vpop.f32.mrb[0].mxu0
        %746 = vmatprep.mubr.f32.mxu0 0.0
        %747 = vmatmul.mubr.f32.gmra.mrb[0].mxu0 %v573
        %v748 = vpop.f32.mrb[0].mxu0
        %v749 = vadd.f32 0.0, %v748
        %v750 = vpop.f32.mrb[0].mxu0
        %751 = vmatprep.mubr.f32.mxu0 0.0
        %752 = vmatmul.mubr.f32.gmra.mrb[0].mxu0 %v576
        %v753 = vpop.f32.mrb[0].mxu0
        %v754 = vadd.f32 0.0, %v753
        %v755 = vpop.f32.mrb[0].mxu0
        %756 = vmatprep.mubr.f32.mxu0 0.0
        %757 = vmatmul.mubr.f32.gmra.mrb[0].mxu0 %v579
        %v758 = vpop.f32.mrb[0].mxu0
        %v759 = vadd.f32 0.0, %v758
        %v760 = vpop.f32.mrb[0].mxu0
        %761 = vmatprep.mubr.f32.mxu0 0.0
        %762 = vmatmul.mubr.f32.gmra.mrb[0].mxu0 %v582
        %v763 = vpop.f32.mrb[0].mxu0
        %v764 = vadd.f32 0.0, %v763
        %v765 = vpop.f32.mrb[0].mxu0
        %766 = vmatprep.mubr.f32.mxu0 0.0
        %767 = vmatmul.mubr.f32.gmra.mrb[0].mxu0 %v585
        %v768 = vpop.f32.mrb[0].mxu0
        %v769 = vadd.f32 0.0, %v768
        %v770 = vpop.f32.mrb[0].mxu0
        %771 = vmatprep.mubr.f32.mxu0 0.0
        %772 = vmatmul.mubr.f32.gmra.mrb[0].mxu0 %v588
        %v773 = vpop.f32.mrb[0].mxu0
        %v774 = vadd.f32 0.0, %v773
        %v775 = vpop.f32.mrb[0].mxu0
        %776 = vmatprep.mubr.f32.mxu0 0.0
        %777 = vmatmul.mubr.f32.gmra.mrb[0].mxu0 %v591
        %v778 = vpop.f32.mrb[0].mxu0
        %v779 = vadd.f32 0.0, %v778
        %v780 = vpop.f32.mrb[0].mxu0
        %781 = vmatprep.mubr.f32.mxu0 0.0
        %782 = vmatmul.mubr.f32.gmra.mrb[0].mxu0 %v594
        %v783 = vpop.f32.mrb[0].mxu0
        %v784 = vadd.f32 0.0, %v783
        %v785 = vpop.f32.mrb[0].mxu0
        %786 = vmatprep.mubr.f32.mxu0 0.0
        %787 = vmatmul.mubr.f32.gmra.mrb[0].mxu0 %v597
        %v788 = vpop.f32.mrb[0].mxu0
        %v789 = vadd.f32 0.0, %v788
        %v790 = vpop.f32.mrb[0].mxu0
        %791 = vmatprep.mubr.f32.mxu0 0.0
        %792 = vmatmul.mubr.f32.gmra.mrb[0].mxu0 %v600
        %v793 = vpop.f32.mrb[0].mxu0
        %v794 = vadd.f32 0.0, %v793
        %v795 = vpop.f32.mrb[0].mxu0
        %796 = vmatprep.mubr.f32.mxu0 0.0
        %797 = vmatmul.mubr.f32.gmra.mrb[0].mxu0 %v603
        %v798 = vpop.f32.mrb[0].mxu0
        %v799 = vadd.f32 0.0, %v798
        %v800 = vpop.f32.mrb[0].mxu0
        %801 = vmatprep.mubr.f32.mxu0 0.0
        %802 = vmatmul.mubr.f32.gmra.mrb[0].mxu0 %v606
        %v803 = vpop.f32.mrb[0].mxu0
        %v804 = vadd.f32 0.0, %v803
        %v805 = vpop.f32.mrb[0].mxu0
        %806 = vmatprep.mubr.f32.mxu0 0.0
        %807 = vmatmul.mubr.f32.gmra.mrb[0].mxu0 %v609
        %v808 = vpop.f32.mrb[0].mxu0
        %v809 = vadd.f32 0.0, %v808
        %v810 = vpop.f32.mrb[0].mxu0
        %811 = vmatprep.mubr.f32.mxu0 0.0
        %812 = vmatmul.mubr.f32.gmra.mrb[0].mxu0 %v612
        %v813 = vpop.f32.mrb[0].mxu0
        %v814 = vadd.f32 0.0, %v813
        %v815 = vpop.f32.mrb[0].mxu0
        %816 = vmatprep.mubr.f32.mxu0 0.0
        %817 = vmatmul.mubr.f32.gmra.mrb[0].mxu0 %v615
        %v818 = vpop.f32.mrb[0].mxu0
        %v819 = vadd.f32 0.0, %v818
        %v820 = vpop.f32.mrb[0].mxu0
        %821 = vmatprep.mubr.f32.mxu0 0.0
        %822 = vmatmul.mubr.f32.gmra.mrb[0].mxu0 %v618
        %v823 = vpop.f32.mrb[0].mxu0
        %v824 = vadd.f32 0.0, %v823
        %v825 = vpop.f32.mrb[0].mxu0
        %826 = vmatprep.mubr.f32.mxu0 0.0
        %827 = vmatmul.mubr.f32.gmra.mrb[0].mxu0 %v621
        %v828 = vpop.f32.mrb[0].mxu0
        %v829 = vadd.f32 0.0, %v828
        %v830 = vpop.f32.mrb[0].mxu0
        %831 = vmatprep.mubr.f32.mxu0 0.0
        %832 = vmatmul.mubr.f32.gmra.mrb[0].mxu0 %v624
        %v833 = vpop.f32.mrb[0].mxu0
        %v834 = vadd.f32 0.0, %v833
        %v835 = vpop.f32.mrb[0].mxu0
        %836 = vmatprep.mubr.f32.mxu0 0.0
        %837 = vmatmul.mubr.f32.gmra.mrb[0].mxu0 %v627
        %v838 = vpop.f32.mrb[0].mxu0
        %v839 = vadd.f32 0.0, %v838
        %v840 = vpop.f32.mrb[0].mxu0
        %841 = vmatprep.mubr.f32.mxu0 0.0
        %842 = vmatmul.mubr.f32.gmra.mrb[0].mxu0 %v630
        %v843 = vpop.f32.mrb[0].mxu0
        %v844 = vadd.f32 0.0, %v843
        %v845 = vpop.f32.mrb[0].mxu0
        %846 = vmatprep.mubr.f32.mxu0 0.0
        %847 = vmatmul.mubr.f32.gmra.mrb[0].mxu0 %v633
        %v848 = vpop.f32.mrb[0].mxu0
        %v849 = vadd.f32 0.0, %v848
        %v850 = vpop.f32.mrb[0].mxu0
        %851 = vmatprep.mubr.f32.mxu0 0.0
        %852 = vmatmul.mubr.f32.gmra.mrb[0].mxu0 %v636
        %v853 = vpop.f32.mrb[0].mxu0
        %v854 = vadd.f32 0.0, %v853
        %v855 = vpop.f32.mrb[0].mxu0
        %856 = vmatprep.mubr.f32.mxu0 0.0
        %857 = vmatmul.mubr.f32.gmra.mrb[0].mxu0 %v639
        %v858 = vpop.f32.mrb[0].mxu0
        %v859 = vadd.f32 0.0, %v858
        %v860 = vpop.f32.mrb[0].mxu0
        %861 = vmatprep.mubr.f32.mxu0 0.0
        %862 = vmatmul.mubr.f32.gmra.mrb[0].mxu0 %v642
        %v863 = vpop.f32.mrb[0].mxu0
        %v864 = vadd.f32 0.0, %v863
        %v865 = vpop.f32.mrb[0].mxu0
        %866 = vmatprep.mubr.f32.mxu0 0.0
        %867 = vmatmul.mubr.f32.gmra.mrb[0].mxu0 %v645
        %v868 = vpop.f32.mrb[0].mxu0
        %v869 = vadd.f32 0.0, %v868
        %v870 = vpop.f32.mrb[0].mxu0
        %871 = vdwg.mxu0
        %v873 = vsel %vm550, %v418, 0
        %v876 = vsel %vm550, %v419, 0
        %v879 = vsel %vm550, %v420, 0
        %v882 = vsel %vm550, %v421, 0
        %v885 = vsel %vm550, %v422, 0
        %v888 = vsel %vm550, %v423, 0
        %v891 = vsel %vm550, %v424, 0
        %v894 = vsel %vm550, %v425, 0
        %v897 = vsel %vm550, %v426, 0
        %v900 = vsel %vm550, %v427, 0
        %v903 = vsel %vm550, %v428, 0
        %v906 = vsel %vm550, %v429, 0
        %v909 = vsel %vm550, %v430, 0
        %v912 = vsel %vm550, %v431, 0
        %v915 = vsel %vm550, %v432, 0
        %v918 = vsel %vm550, %v433, 0
        %v921 = vsel %vm550, %v434, 0
        %v924 = vsel %vm550, %v435, 0
        %v927 = vsel %vm550, %v436, 0
        %v930 = vsel %vm550, %v437, 0
        %v933 = vsel %vm550, %v438, 0
        %v936 = vsel %vm550, %v439, 0
        %v939 = vsel %vm550, %v440, 0
        %v942 = vsel %vm550, %v441, 0
        %v945 = vsel %vm550, %v442, 0
        %v948 = vsel %vm550, %v443, 0
        %v951 = vsel %vm550, %v444, 0
        %v954 = vsel %vm550, %v445, 0
        %v957 = vsel %vm550, %v446, 0
        %v960 = vsel %vm550, %v447, 0
        %v963 = vsel %vm550, %v448, 0
        %v966 = vsel %vm550, %v449, 0
        %968 = vmatprep.subr.mxu0 0.0
        %969 = vmatpush1.msra.mxu0 %v546
        %970 = vmatprep.subr.mxu0 0.0
        %971 = vmatpush1.msra.mxu0 %v547
        %972 = vmatprep.subr.mxu0 0.0
        %973 = vmatpush1.msra.mxu0 0.0
        %974 = vmatprep.subr.mxu0 0.0
        %975 = vmatpush1.msra.mxu0 0.0
        %976 = vmatprep.subr.mxu0 0.0
        %977 = vmatpush1.msra.mxu0 0.0
        %978 = vmatprep.subr.mxu0 0.0
        %979 = vmatpush1.msra.mxu0 0.0
        %980 = vmatprep.subr.mxu0 0.0
        %981 = vmatpush1.msra.mxu0 0.0
        %982 = vmatprep.subr.mxu0 0.0
        %983 = vmatpush1.msra.mxu0 0.0
        %984 = vmatprep.subr.mxu0 0.0
        %985 = vmatpush1.msra.mxu0 0.0
        %986 = vmatprep.subr.mxu0 0.0
        %987 = vmatpush1.msra.mxu0 0.0
        %988 = vmatprep.subr.mxu0 0.0
        %989 = vmatpush1.msra.mxu0 0.0
        %990 = vmatprep.subr.mxu0 0.0
        %991 = vmatpush1.msra.mxu0 0.0
        %992 = vmatprep.subr.mxu0 0.0
        %993 = vmatpush1.msra.mxu0 0.0
        %994 = vmatprep.subr.mxu0 0.0
        %995 = vmatpush1.msra.mxu0 0.0
        %996 = vmatprep.subr.mxu0 0.0
        %997 = vmatpush1.msra.mxu0 0.0
        %998 = vmatprep.subr.mxu0 0.0
        %999 = vmatpush1.msra.mxu0 0.0
        %1000 = vmatprep.subr.mxu0 0.0
        %1001 = vmatpush1.msra.mxu0 0.0
        %1002 = vmatprep.subr.mxu0 0.0
        %1003 = vmatpush1.msra.mxu0 0.0
        %1004 = vmatprep.subr.mxu0 0.0
        %1005 = vmatpush1.msra.mxu0 0.0
        %1006 = vmatprep.subr.mxu0 0.0
        %1007 = vmatpush1.msra.mxu0 0.0
        %1008 = vmatprep.subr.mxu0 0.0
        %1009 = vmatpush1.msra.mxu0 0.0
        %1010 = vmatprep.subr.mxu0 0.0
        %1011 = vmatpush1.msra.mxu0 0.0
        %1012 = vmatprep.subr.mxu0 0.0
        %1013 = vmatpush1.msra.mxu0 0.0
        %1014 = vmatprep.subr.mxu0 0.0
        %1015 = vmatpush1.msra.mxu0 0.0
        %1016 = vmatprep.subr.mxu0 0.0
        %1017 = vmatpush1.msra.mxu0 0.0
        %1018 = vmatprep.subr.mxu0 0.0
        %1019 = vmatpush1.msra.mxu0 0.0
        %1020 = vmatprep.subr.mxu0 0.0
        %1021 = vmatpush1.msra.mxu0 0.0
        %1022 = vmatprep.subr.mxu0 0.0
        %1023 = vmatpush1.msra.mxu0 0.0
        %1024 = vmatprep.subr.mxu0 0.0
        %1025 = vmatpush1.msra.mxu0 0.0
        %1026 = vmatprep.subr.mxu0 0.0
        %1027 = vmatpush1.msra.mxu0 0.0
        %1028 = vmatprep.subr.mxu0 0.0
        %1029 = vmatpush1.msra.mxu0 0.0
        %1030 = vmatprep.subr.mxu0 0.0
        %1031 = vmatpush1.msra.mxu0 0.0
        %1032 = vmatprep.mubr.f32.mxu0 0.0
        %1033 = vmatmul.mubr.f32.gmra.mrb[0].mxu0 %v873
        %v1034 = vpop.f32.mrb[0].mxu0
        %v1035 = vadd.f32 %v714, %v1034
        %v1036 = vpop.f32.mrb[0].mxu0
        %1037 = vmatprep.mubr.f32.mxu0 0.0
        %1038 = vmatmul.mubr.f32.gmra.mrb[0].mxu0 %v876
        %v1039 = vpop.f32.mrb[0].mxu0
        %v1040 = vadd.f32 %v719, %v1039
        %v1041 = vpop.f32.mrb[0].mxu0
        %1042 = vmatprep.mubr.f32.mxu0 0.0
        %1043 = vmatmul.mubr.f32.gmra.mrb[0].mxu0 %v879
        %v1044 = vpop.f32.mrb[0].mxu0
        %v1045 = vadd.f32 %v724, %v1044
        %v1046 = vpop.f32.mrb[0].mxu0
        %1047 = vmatprep.mubr.f32.mxu0 0.0
        %1048 = vmatmul.mubr.f32.gmra.mrb[0].mxu0 %v882
        %v1049 = vpop.f32.mrb[0].mxu0
        %v1050 = vadd.f32 %v729, %v1049
        %v1051 = vpop.f32.mrb[0].mxu0
        %1052 = vmatprep.mubr.f32.mxu0 0.0
        %1053 = vmatmul.mubr.f32.gmra.mrb[0].mxu0 %v885
        %v1054 = vpop.f32.mrb[0].mxu0
        %v1055 = vadd.f32 %v734, %v1054
        %v1056 = vpop.f32.mrb[0].mxu0
        %1057 = vmatprep.mubr.f32.mxu0 0.0
        %1058 = vmatmul.mubr.f32.gmra.mrb[0].mxu0 %v888
        %v1059 = vpop.f32.mrb[0].mxu0
        %v1060 = vadd.f32 %v739, %v1059
        %v1061 = vpop.f32.mrb[0].mxu0
        %1062 = vmatprep.mubr.f32.mxu0 0.0
        %1063 = vmatmul.mubr.f32.gmra.mrb[0].mxu0 %v891
        %v1064 = vpop.f32.mrb[0].mxu0
        %v1065 = vadd.f32 %v744, %v1064
        %v1066 = vpop.f32.mrb[0].mxu0
        %1067 = vmatprep.mubr.f32.mxu0 0.0
        %1068 = vmatmul.mubr.f32.gmra.mrb[0].mxu0 %v894
        %v1069 = vpop.f32.mrb[0].mxu0
        %v1070 = vadd.f32 %v749, %v1069
        %v1071 = vpop.f32.mrb[0].mxu0
        %1072 = vmatprep.mubr.f32.mxu0 0.0
        %1073 = vmatmul.mubr.f32.gmra.mrb[0].mxu0 %v897
        %v1074 = vpop.f32.mrb[0].mxu0
        %v1075 = vadd.f32 %v754, %v1074
        %v1076 = vpop.f32.mrb[0].mxu0
        %1077 = vmatprep.mubr.f32.mxu0 0.0
        %1078 = vmatmul.mubr.f32.gmra.mrb[0].mxu0 %v900
        %v1079 = vpop.f32.mrb[0].mxu0
        %v1080 = vadd.f32 %v759, %v1079
        %v1081 = vpop.f32.mrb[0].mxu0
        %1082 = vmatprep.mubr.f32.mxu0 0.0
        %1083 = vmatmul.mubr.f32.gmra.mrb[0].mxu0 %v903
        %v1084 = vpop.f32.mrb[0].mxu0
        %v1085 = vadd.f32 %v764, %v1084
        %v1086 = vpop.f32.mrb[0].mxu0
        %1087 = vmatprep.mubr.f32.mxu0 0.0
        %1088 = vmatmul.mubr.f32.gmra.mrb[0].mxu0 %v906
        %v1089 = vpop.f32.mrb[0].mxu0
        %v1090 = vadd.f32 %v769, %v1089
        %v1091 = vpop.f32.mrb[0].mxu0
        %1092 = vmatprep.mubr.f32.mxu0 0.0
        %1093 = vmatmul.mubr.f32.gmra.mrb[0].mxu0 %v909
        %v1094 = vpop.f32.mrb[0].mxu0
        %v1095 = vadd.f32 %v774, %v1094
        %v1096 = vpop.f32.mrb[0].mxu0
        %1097 = vmatprep.mubr.f32.mxu0 0.0
        %1098 = vmatmul.mubr.f32.gmra.mrb[0].mxu0 %v912
        %v1099 = vpop.f32.mrb[0].mxu0
        %v1100 = vadd.f32 %v779, %v1099
        %v1101 = vpop.f32.mrb[0].mxu0
        %1102 = vmatprep.mubr.f32.mxu0 0.0
        %1103 = vmatmul.mubr.f32.gmra.mrb[0].mxu0 %v915
        %v1104 = vpop.f32.mrb[0].mxu0
        %v1105 = vadd.f32 %v784, %v1104
        %v1106 = vpop.f32.mrb[0].mxu0
        %1107 = vmatprep.mubr.f32.mxu0 0.0
        %1108 = vmatmul.mubr.f32.gmra.mrb[0].mxu0 %v918
        %v1109 = vpop.f32.mrb[0].mxu0
        %v1110 = vadd.f32 %v789, %v1109
        %v1111 = vpop.f32.mrb[0].mxu0
        %1112 = vmatprep.mubr.f32.mxu0 0.0
        %1113 = vmatmul.mubr.f32.gmra.mrb[0].mxu0 %v921
        %v1114 = vpop.f32.mrb[0].mxu0
        %v1115 = vadd.f32 %v794, %v1114
        %v1116 = vpop.f32.mrb[0].mxu0
        %1117 = vmatprep.mubr.f32.mxu0 0.0
        %1118 = vmatmul.mubr.f32.gmra.mrb[0].mxu0 %v924
        %v1119 = vpop.f32.mrb[0].mxu0
        %v1120 = vadd.f32 %v799, %v1119
        %v1121 = vpop.f32.mrb[0].mxu0
        %1122 = vmatprep.mubr.f32.mxu0 0.0
        %1123 = vmatmul.mubr.f32.gmra.mrb[0].mxu0 %v927
        %v1124 = vpop.f32.mrb[0].mxu0
        %v1125 = vadd.f32 %v804, %v1124
        %v1126 = vpop.f32.mrb[0].mxu0
        %1127 = vmatprep.mubr.f32.mxu0 0.0
        %1128 = vmatmul.mubr.f32.gmra.mrb[0].mxu0 %v930
        %v1129 = vpop.f32.mrb[0].mxu0
        %v1130 = vadd.f32 %v809, %v1129
        %v1131 = vpop.f32.mrb[0].mxu0
        %1132 = vmatprep.mubr.f32.mxu0 0.0
        %1133 = vmatmul.mubr.f32.gmra.mrb[0].mxu0 %v933
        %v1134 = vpop.f32.mrb[0].mxu0
        %v1135 = vadd.f32 %v814, %v1134
        %v1136 = vpop.f32.mrb[0].mxu0
        %1137 = vmatprep.mubr.f32.mxu0 0.0
        %1138 = vmatmul.mubr.f32.gmra.mrb[0].mxu0 %v936
        %v1139 = vpop.f32.mrb[0].mxu0
        %v1140 = vadd.f32 %v819, %v1139
        %v1141 = vpop.f32.mrb[0].mxu0
        %1142 = vmatprep.mubr.f32.mxu0 0.0
        %1143 = vmatmul.mubr.f32.gmra.mrb[0].mxu0 %v939
        %v1144 = vpop.f32.mrb[0].mxu0
        %v1145 = vadd.f32 %v824, %v1144
        %v1146 = vpop.f32.mrb[0].mxu0
        %1147 = vmatprep.mubr.f32.mxu0 0.0
        %1148 = vmatmul.mubr.f32.gmra.mrb[0].mxu0 %v942
        %v1149 = vpop.f32.mrb[0].mxu0
        %v1150 = vadd.f32 %v829, %v1149
        %v1151 = vpop.f32.mrb[0].mxu0
        %1152 = vmatprep.mubr.f32.mxu0 0.0
        %1153 = vmatmul.mubr.f32.gmra.mrb[0].mxu0 %v945
        %v1154 = vpop.f32.mrb[0].mxu0
        %v1155 = vadd.f32 %v834, %v1154
        %v1156 = vpop.f32.mrb[0].mxu0
        %1157 = vmatprep.mubr.f32.mxu0 0.0
        %1158 = vmatmul.mubr.f32.gmra.mrb[0].mxu0 %v948
        %v1159 = vpop.f32.mrb[0].mxu0
        %v1160 = vadd.f32 %v839, %v1159
        %v1161 = vpop.f32.mrb[0].mxu0
        %1162 = vmatprep.mubr.f32.mxu0 0.0
        %1163 = vmatmul.mubr.f32.gmra.mrb[0].mxu0 %v951
        %v1164 = vpop.f32.mrb[0].mxu0
        %v1165 = vadd.f32 %v844, %v1164
        %v1166 = vpop.f32.mrb[0].mxu0
        %1167 = vmatprep.mubr.f32.mxu0 0.0
        %1168 = vmatmul.mubr.f32.gmra.mrb[0].mxu0 %v954
        %v1169 = vpop.f32.mrb[0].mxu0
        %v1170 = vadd.f32 %v849, %v1169
        %v1171 = vpop.f32.mrb[0].mxu0
        %1172 = vmatprep.mubr.f32.mxu0 0.0
        %1173 = vmatmul.mubr.f32.gmra.mrb[0].mxu0 %v957
        %v1174 = vpop.f32.mrb[0].mxu0
        %v1175 = vadd.f32 %v854, %v1174
        %v1176 = vpop.f32.mrb[0].mxu0
        %1177 = vmatprep.mubr.f32.mxu0 0.0
        %1178 = vmatmul.mubr.f32.gmra.mrb[0].mxu0 %v960
        %v1179 = vpop.f32.mrb[0].mxu0
        %v1180 = vadd.f32 %v859, %v1179
        %v1181 = vpop.f32.mrb[0].mxu0
        %1182 = vmatprep.mubr.f32.mxu0 0.0
        %1183 = vmatmul.mubr.f32.gmra.mrb[0].mxu0 %v963
        %v1184 = vpop.f32.mrb[0].mxu0
        %v1185 = vadd.f32 %v864, %v1184
        %v1186 = vpop.f32.mrb[0].mxu0
        %1187 = vmatprep.mubr.f32.mxu0 0.0
        %1188 = vmatmul.mubr.f32.gmra.mrb[0].mxu0 %v966
        %v1189 = vpop.f32.mrb[0].mxu0
        %v1190 = vadd.f32 %v869, %v1189
        %v1191 = vpop.f32.mrb[0].mxu0
        %1192 = vdwg.mxu0
        %v1193 = vld [vmem:[%s4] sm:$0x1]
        %v1195 = vlaneseq
        %v1196 = vshrl.u32 %v1195, 7
        %v1197 = vsub.s32 0, %v1196
        %v1198 = vrot.slane %v1193, %v1197
        %v1200 = vadd.f32 %v1035, %v1198
        %v1201 = vadd.f32 %v1040, %v1198
        %v1202 = vadd.f32 %v1045, %v1198
        %v1203 = vadd.f32 %v1050, %v1198
        %v1204 = vadd.f32 %v1055, %v1198
        %v1205 = vadd.f32 %v1060, %v1198
        %v1206 = vadd.f32 %v1065, %v1198
        %v1207 = vadd.f32 %v1070, %v1198
        %v1208 = vadd.f32 %v1075, %v1198
        %v1209 = vadd.f32 %v1080, %v1198
        %v1210 = vadd.f32 %v1085, %v1198
        %v1211 = vadd.f32 %v1090, %v1198
        %v1212 = vadd.f32 %v1095, %v1198
        %v1213 = vadd.f32 %v1100, %v1198
        %v1214 = vadd.f32 %v1105, %v1198
        %v1215 = vadd.f32 %v1110, %v1198
        %v1216 = vadd.f32 %v1115, %v1198
        %v1217 = vadd.f32 %v1120, %v1198
        %v1218 = vadd.f32 %v1125, %v1198
        %v1219 = vadd.f32 %v1130, %v1198
        %v1220 = vadd.f32 %v1135, %v1198
        %v1221 = vadd.f32 %v1140, %v1198
        %v1222 = vadd.f32 %v1145, %v1198
        %v1223 = vadd.f32 %v1150, %v1198
        %v1224 = vadd.f32 %v1155, %v1198
        %v1225 = vadd.f32 %v1160, %v1198
        %v1226 = vadd.f32 %v1165, %v1198
        %v1227 = vadd.f32 %v1170, %v1198
        %v1228 = vadd.f32 %v1175, %v1198
        %v1229 = vadd.f32 %v1180, %v1198
        %v1230 = vadd.f32 %v1185, %v1198
        %v1231 = vadd.f32 %v1190, %v1198
        %v1232 = vmax.f32 %v1200, 0.0
        %v1233 = vmax.f32 %v1201, 0.0
        %v1234 = vmax.f32 %v1202, 0.0
        %v1235 = vmax.f32 %v1203, 0.0
        %v1236 = vmax.f32 %v1204, 0.0
        %v1237 = vmax.f32 %v1205, 0.0
        %v1238 = vmax.f32 %v1206, 0.0
        %v1239 = vmax.f32 %v1207, 0.0
        %v1240 = vmax.f32 %v1208, 0.0
        %v1241 = vmax.f32 %v1209, 0.0
        %v1242 = vmax.f32 %v1210, 0.0
        %v1243 = vmax.f32 %v1211, 0.0
        %v1244 = vmax.f32 %v1212, 0.0
        %v1245 = vmax.f32 %v1213, 0.0
        %v1246 = vmax.f32 %v1214, 0.0
        %v1247 = vmax.f32 %v1215, 0.0
        %v1248 = vmax.f32 %v1216, 0.0
        %v1249 = vmax.f32 %v1217, 0.0
        %v1250 = vmax.f32 %v1218, 0.0
        %v1251 = vmax.f32 %v1219, 0.0
        %v1252 = vmax.f32 %v1220, 0.0
        %v1253 = vmax.f32 %v1221, 0.0
        %v1254 = vmax.f32 %v1222, 0.0
        %v1255 = vmax.f32 %v1223, 0.0
        %v1256 = vmax.f32 %v1224, 0.0
        %v1257 = vmax.f32 %v1225, 0.0
        %v1258 = vmax.f32 %v1226, 0.0
        %v1259 = vmax.f32 %v1227, 0.0
        %v1260 = vmax.f32 %v1228, 0.0
        %v1261 = vmax.f32 %v1229, 0.0
        %v1262 = vmax.f32 %v1230, 0.0
        %v1263 = vmax.f32 %v1231, 0.0
        %v1264 = vpack.c.bf16 %v1233, %v1232
        %v1265 = vpack.c.bf16 %v1235, %v1234
        %v1266 = vpack.c.bf16 %v1237, %v1236
        %v1267 = vpack.c.bf16 %v1239, %v1238
        %v1268 = vpack.c.bf16 %v1241, %v1240
        %v1269 = vpack.c.bf16 %v1243, %v1242
        %v1270 = vpack.c.bf16 %v1245, %v1244
        %v1271 = vpack.c.bf16 %v1247, %v1246
        %v1272 = vpack.c.bf16 %v1249, %v1248
        %v1273 = vpack.c.bf16 %v1251, %v1250
        %v1274 = vpack.c.bf16 %v1253, %v1252
        %v1275 = vpack.c.bf16 %v1255, %v1254
        %v1276 = vpack.c.bf16 %v1257, %v1256
        %v1277 = vpack.c.bf16 %v1259, %v1258
        %v1278 = vpack.c.bf16 %v1261, %v1260
        %v1279 = vpack.c.bf16 %v1263, %v1262
        %v1280 = vld [vmem:[%s5] sm:$0xf]
        %v1281 = vld [vmem:[%s5 + $0x4] sm:$0xf]
        %v1282 = vld [vmem:[%s5 + $0x8] sm:$0xf]
        %v1283 = vld [vmem:[%s5 + $0xc] sm:$0xf]
        %v1284 = vld [vmem:[%s6] sm:$0x1]
        %v1286 = vlaneseq
        %v1287 = vshrl.u32 %v1286, 7
        %v1288 = vsub.s32 0, %v1287
        %v1289 = vrot.slane %v1284, %v1288
        %v1295 = vunpack.c.l.b16 %v1280
        %v1296 = vunpack.c.l.b16 %v1281
        %v1297 = vunpack.c.l.b16 %v1282
        %v1298 = vunpack.c.l.b16 %v1283
        %v1299 = vpack.c.b16 %v1296, %v1295
        %v1300 = vpack.c.b16 %v1298, %v1297
        %vm1303 = vcmask 261120
        %v1305 = vsel %vm1303, %v1264, 0
        %v1308 = vsel %vm1303, %v1265, 0
        %v1311 = vsel %vm1303, %v1266, 0
        %v1314 = vsel %vm1303, %v1267, 0
        %v1317 = vsel %vm1303, %v1268, 0
        %v1320 = vsel %vm1303, %v1269, 0
        %v1323 = vsel %vm1303, %v1270, 0
        %v1326 = vsel %vm1303, %v1271, 0
        %v1329 = vsel %vm1303, %v1272, 0
        %v1332 = vsel %vm1303, %v1273, 0
        %v1335 = vsel %vm1303, %v1274, 0
        %v1338 = vsel %vm1303, %v1275, 0
        %v1341 = vsel %vm1303, %v1276, 0
        %v1344 = vsel %vm1303, %v1277, 0
        %v1347 = vsel %vm1303, %v1278, 0
        %v1350 = vsel %vm1303, %v1279, 0
        %1352 = vmatprep.subr.bf16.mxu0 0
        %1353 = vmatpush1.bf16.msra.mxu0 %v1299
        %1354 = vmatprep.subr.bf16.mxu0 0
        %1355 = vmatpush1.bf16.msra.mxu0 %v1300
        %1356 = vmatprep.subr.bf16.mxu0 0
        %1357 = vmatpush1.bf16.msra.mxu0 0
        %1358 = vmatprep.subr.bf16.mxu0 0
        %1359 = vmatpush1.bf16.msra.mxu0 0
        %1360 = vmatprep.subr.bf16.mxu0 0
        %1361 = vmatpush1.bf16.msra.mxu0 0
        %1362 = vmatprep.subr.bf16.mxu0 0
        %1363 = vmatpush1.bf16.msra.mxu0 0
        %1364 = vmatprep.subr.bf16.mxu0 0
        %1365 = vmatpush1.bf16.msra.mxu0 0
        %1366 = vmatprep.subr.bf16.mxu0 0
        %1367 = vmatpush1.bf16.msra.mxu0 0
        %1368 = vmatprep.subr.bf16.mxu0 0
        %1369 = vmatpush1.bf16.msra.mxu0 0
        %1370 = vmatprep.subr.bf16.mxu0 0
        %1371 = vmatpush1.bf16.msra.mxu0 0
        %1372 = vmatprep.subr.bf16.mxu0 0
        %1373 = vmatpush1.bf16.msra.mxu0 0
        %1374 = vmatprep.subr.bf16.mxu0 0
        %1375 = vmatpush1.bf16.msra.mxu0 0
        %1376 = vmatprep.subr.bf16.mxu0 0
        %1377 = vmatpush1.bf16.msra.mxu0 0
        %1378 = vmatprep.subr.bf16.mxu0 0
        %1379 = vmatpush1.bf16.msra.mxu0 0
        %1380 = vmatprep.subr.bf16.mxu0 0
        %1381 = vmatpush1.bf16.msra.mxu0 0
        %1382 = vmatprep.subr.bf16.mxu0 0
        %1383 = vmatpush1.bf16.msra.mxu0 0
        %1384 = vmatprep.mubr.bf16.mxu0 0
        %1385 = vmatmul.mubr.bf16.gmra.mrb[0].mxu0 %v1305
        %v1386 = vpop.f32.mrb[0].mxu0
        %v1387 = vadd.f32 %v1289, %v1386
        %v1388 = vpop.f32.mrb[0].mxu0
        %v1389 = vpop.f32.mrb[0].mxu0
        %v1390 = vadd.f32 %v1289, %v1389
        %v1391 = vpop.f32.mrb[0].mxu0
        %1392 = vmatprep.mubr.bf16.mxu0 0
        %1393 = vmatmul.mubr.bf16.gmra.mrb[0].mxu0 %v1308
        %v1394 = vpop.f32.mrb[0].mxu0
        %v1395 = vadd.f32 %v1289, %v1394
        %v1396 = vpop.f32.mrb[0].mxu0
        %v1397 = vpop.f32.mrb[0].mxu0
        %v1398 = vadd.f32 %v1289, %v1397
        %v1399 = vpop.f32.mrb[0].mxu0
        %1400 = vmatprep.mubr.bf16.mxu0 0
        %1401 = vmatmul.mubr.bf16.gmra.mrb[0].mxu0 %v1311
        %v1402 = vpop.f32.mrb[0].mxu0
        %v1403 = vadd.f32 %v1289, %v1402
        %v1404 = vpop.f32.mrb[0].mxu0
        %v1405 = vpop.f32.mrb[0].mxu0
        %v1406 = vadd.f32 %v1289, %v1405
        %v1407 = vpop.f32.mrb[0].mxu0
        %1408 = vmatprep.mubr.bf16.mxu0 0
        %1409 = vmatmul.mubr.bf16.gmra.mrb[0].mxu0 %v1314
        %v1410 = vpop.f32.mrb[0].mxu0
        %v1411 = vadd.f32 %v1289, %v1410
        %v1412 = vpop.f32.mrb[0].mxu0
        %v1413 = vpop.f32.mrb[0].mxu0
        %v1414 = vadd.f32 %v1289, %v1413
        %v1415 = vpop.f32.mrb[0].mxu0
        %1416 = vmatprep.mubr.bf16.mxu0 0
        %1417 = vmatmul.mubr.bf16.gmra.mrb[0].mxu0 %v1317
        %v1418 = vpop.f32.mrb[0].mxu0
        %v1419 = vadd.f32 %v1289, %v1418
        %v1420 = vpop.f32.mrb[0].mxu0
        %v1421 = vpop.f32.mrb[0].mxu0
        %v1422 = vadd.f32 %v1289, %v1421
        %v1423 = vpop.f32.mrb[0].mxu0
        %1424 = vmatprep.mubr.bf16.mxu0 0
        %1425 = vmatmul.mubr.bf16.gmra.mrb[0].mxu0 %v1320
        %v1426 = vpop.f32.mrb[0].mxu0
        %v1427 = vadd.f32 %v1289, %v1426
        %v1428 = vpop.f32.mrb[0].mxu0
        %v1429 = vpop.f32.mrb[0].mxu0
        %v1430 = vadd.f32 %v1289, %v1429
        %v1431 = vpop.f32.mrb[0].mxu0
        %1432 = vmatprep.mubr.bf16.mxu0 0
        %1433 = vmatmul.mubr.bf16.gmra.mrb[0].mxu0 %v1323
        %v1434 = vpop.f32.mrb[0].mxu0
        %v1435 = vadd.f32 %v1289, %v1434
        %v1436 = vpop.f32.mrb[0].mxu0
        %v1437 = vpop.f32.mrb[0].mxu0
        %v1438 = vadd.f32 %v1289, %v1437
        %v1439 = vpop.f32.mrb[0].mxu0
        %1440 = vmatprep.mubr.bf16.mxu0 0
        %1441 = vmatmul.mubr.bf16.gmra.mrb[0].mxu0 %v1326
        %v1442 = vpop.f32.mrb[0].mxu0
        %v1443 = vadd.f32 %v1289, %v1442
        %v1444 = vpop.f32.mrb[0].mxu0
        %v1445 = vpop.f32.mrb[0].mxu0
        %v1446 = vadd.f32 %v1289, %v1445
        %v1447 = vpop.f32.mrb[0].mxu0
        %1448 = vmatprep.mubr.bf16.mxu0 0
        %1449 = vmatmul.mubr.bf16.gmra.mrb[0].mxu0 %v1329
        %v1450 = vpop.f32.mrb[0].mxu0
        %v1451 = vadd.f32 %v1289, %v1450
        %v1452 = vpop.f32.mrb[0].mxu0
        %v1453 = vpop.f32.mrb[0].mxu0
        %v1454 = vadd.f32 %v1289, %v1453
        %v1455 = vpop.f32.mrb[0].mxu0
        %1456 = vmatprep.mubr.bf16.mxu0 0
        %1457 = vmatmul.mubr.bf16.gmra.mrb[0].mxu0 %v1332
        %v1458 = vpop.f32.mrb[0].mxu0
        %v1459 = vadd.f32 %v1289, %v1458
        %v1460 = vpop.f32.mrb[0].mxu0
        %v1461 = vpop.f32.mrb[0].mxu0
        %v1462 = vadd.f32 %v1289, %v1461
        %v1463 = vpop.f32.mrb[0].mxu0
        %1464 = vmatprep.mubr.bf16.mxu0 0
        %1465 = vmatmul.mubr.bf16.gmra.mrb[0].mxu0 %v1335
        %v1466 = vpop.f32.mrb[0].mxu0
        %v1467 = vadd.f32 %v1289, %v1466
        %v1468 = vpop.f32.mrb[0].mxu0
        %v1469 = vpop.f32.mrb[0].mxu0
        %v1470 = vadd.f32 %v1289, %v1469
        %v1471 = vpop.f32.mrb[0].mxu0
        %1472 = vmatprep.mubr.bf16.mxu0 0
        %1473 = vmatmul.mubr.bf16.gmra.mrb[0].mxu0 %v1338
        %v1474 = vpop.f32.mrb[0].mxu0
        %v1475 = vadd.f32 %v1289, %v1474
        %v1476 = vpop.f32.mrb[0].mxu0
        %v1477 = vpop.f32.mrb[0].mxu0
        %v1478 = vadd.f32 %v1289, %v1477
        %v1479 = vpop.f32.mrb[0].mxu0
        %1480 = vmatprep.mubr.bf16.mxu0 0
        %1481 = vmatmul.mubr.bf16.gmra.mrb[0].mxu0 %v1341
        %v1482 = vpop.f32.mrb[0].mxu0
        %v1483 = vadd.f32 %v1289, %v1482
        %v1484 = vpop.f32.mrb[0].mxu0
        %v1485 = vpop.f32.mrb[0].mxu0
        %v1486 = vadd.f32 %v1289, %v1485
        %v1487 = vpop.f32.mrb[0].mxu0
        %1488 = vmatprep.mubr.bf16.mxu0 0
        %1489 = vmatmul.mubr.bf16.gmra.mrb[0].mxu0 %v1344
        %v1490 = vpop.f32.mrb[0].mxu0
        %v1491 = vadd.f32 %v1289, %v1490
        %v1492 = vpop.f32.mrb[0].mxu0
        %v1493 = vpop.f32.mrb[0].mxu0
        %v1494 = vadd.f32 %v1289, %v1493
        %v1495 = vpop.f32.mrb[0].mxu0
        %1496 = vmatprep.mubr.bf16.mxu0 0
        %1497 = vmatmul.mubr.bf16.gmra.mrb[0].mxu0 %v1347
        %v1498 = vpop.f32.mrb[0].mxu0
        %v1499 = vadd.f32 %v1289, %v1498
        %v1500 = vpop.f32.mrb[0].mxu0
        %v1501 = vpop.f32.mrb[0].mxu0
        %v1502 = vadd.f32 %v1289, %v1501
        %v1503 = vpop.f32.mrb[0].mxu0
        %1504 = vmatprep.mubr.bf16.mxu0 0
        %1505 = vmatmul.mubr.bf16.gmra.mrb[0].mxu0 %v1350
        %v1506 = vpop.f32.mrb[0].mxu0
        %v1507 = vadd.f32 %v1289, %v1506
        %v1508 = vpop.f32.mrb[0].mxu0
        %v1509 = vpop.f32.mrb[0].mxu0
        %v1510 = vadd.f32 %v1289, %v1509
        %v1511 = vpop.f32.mrb[0].mxu0
        %1512 = vdwg.mxu0
        %v1513 = vmax.f32 %v1387, 0.0
        %v1514 = vmax.f32 %v1390, 0.0
        %v1515 = vmax.f32 %v1395, 0.0
        %v1516 = vmax.f32 %v1398, 0.0
        %v1517 = vmax.f32 %v1403, 0.0
        %v1518 = vmax.f32 %v1406, 0.0
        %v1519 = vmax.f32 %v1411, 0.0
        %v1520 = vmax.f32 %v1414, 0.0
        %v1521 = vmax.f32 %v1419, 0.0
        %v1522 = vmax.f32 %v1422, 0.0
        %v1523 = vmax.f32 %v1427, 0.0
        %v1524 = vmax.f32 %v1430, 0.0
        %v1525 = vmax.f32 %v1435, 0.0
        %v1526 = vmax.f32 %v1438, 0.0
        %v1527 = vmax.f32 %v1443, 0.0
        %v1528 = vmax.f32 %v1446, 0.0
        %v1529 = vmax.f32 %v1451, 0.0
        %v1530 = vmax.f32 %v1454, 0.0
        %v1531 = vmax.f32 %v1459, 0.0
        %v1532 = vmax.f32 %v1462, 0.0
        %v1533 = vmax.f32 %v1467, 0.0
        %v1534 = vmax.f32 %v1470, 0.0
        %v1535 = vmax.f32 %v1475, 0.0
        %v1536 = vmax.f32 %v1478, 0.0
        %v1537 = vmax.f32 %v1483, 0.0
        %v1538 = vmax.f32 %v1486, 0.0
        %v1539 = vmax.f32 %v1491, 0.0
        %v1540 = vmax.f32 %v1494, 0.0
        %v1541 = vmax.f32 %v1499, 0.0
        %v1542 = vmax.f32 %v1502, 0.0
        %v1543 = vmax.f32 %v1507, 0.0
        %v1544 = vmax.f32 %v1510, 0.0
        %v1545 = vld [vmem:[%s7] sm:$0x1]
        %v1547 = vlaneseq
        %v1548 = vshrl.u32 %v1547, 7
        %v1549 = vsub.s32 0, %v1548
        %v1550 = vrot.slane %v1545, %v1549
        %v1552 = vmul.f32 %v514, %v1550
        %v1553 = vmul.f32 %v515, %v1550
        %v1554 = vmul.f32 %v516, %v1550
        %v1555 = vmul.f32 %v517, %v1550
        %v1556 = vmul.f32 %v518, %v1550
        %v1557 = vmul.f32 %v519, %v1550
        %v1558 = vmul.f32 %v520, %v1550
        %v1559 = vmul.f32 %v521, %v1550
        %v1560 = vmul.f32 %v522, %v1550
        %v1561 = vmul.f32 %v523, %v1550
        %v1562 = vmul.f32 %v524, %v1550
        %v1563 = vmul.f32 %v525, %v1550
        %v1564 = vmul.f32 %v526, %v1550
        %v1565 = vmul.f32 %v527, %v1550
        %v1566 = vmul.f32 %v528, %v1550
        %v1567 = vmul.f32 %v529, %v1550
        %v1568 = vmul.f32 %v530, %v1550
        %v1569 = vmul.f32 %v531, %v1550
        %v1570 = vmul.f32 %v532, %v1550
        %v1571 = vmul.f32 %v533, %v1550
        %v1572 = vmul.f32 %v534, %v1550
        %v1573 = vmul.f32 %v535, %v1550
        %v1574 = vmul.f32 %v536, %v1550
        %v1575 = vmul.f32 %v537, %v1550
        %v1576 = vmul.f32 %v538, %v1550
        %v1577 = vmul.f32 %v539, %v1550
        %v1578 = vmul.f32 %v540, %v1550
        %v1579 = vmul.f32 %v541, %v1550
        %v1580 = vmul.f32 %v542, %v1550
        %v1581 = vmul.f32 %v543, %v1550
        %v1582 = vmul.f32 %v544, %v1550
        %v1583 = vmul.f32 %v545, %v1550
        %v1584 = vld [vmem:[%s8] sm:$0x1]
        %v1586 = vlaneseq
        %v1587 = vshrl.u32 %v1586, 7
        %v1588 = vsub.s32 0, %v1587
        %v1589 = vrot.slane %v1584, %v1588
        %v1591 = vmul.f32 %v1513, %v1589
        %v1592 = vmul.f32 %v1514, %v1589
        %v1593 = vmul.f32 %v1515, %v1589
        %v1594 = vmul.f32 %v1516, %v1589
        %v1595 = vmul.f32 %v1517, %v1589
        %v1596 = vmul.f32 %v1518, %v1589
        %v1597 = vmul.f32 %v1519, %v1589
        %v1598 = vmul.f32 %v1520, %v1589
        %v1599 = vmul.f32 %v1521, %v1589
        %v1600 = vmul.f32 %v1522, %v1589
        %v1601 = vmul.f32 %v1523, %v1589
        %v1602 = vmul.f32 %v1524, %v1589
        %v1603 = vmul.f32 %v1525, %v1589
        %v1604 = vmul.f32 %v1526, %v1589
        %v1605 = vmul.f32 %v1527, %v1589
        %v1606 = vmul.f32 %v1528, %v1589
        %v1607 = vmul.f32 %v1529, %v1589
        %v1608 = vmul.f32 %v1530, %v1589
        %v1609 = vmul.f32 %v1531, %v1589
        %v1610 = vmul.f32 %v1532, %v1589
        %v1611 = vmul.f32 %v1533, %v1589
        %v1612 = vmul.f32 %v1534, %v1589
        %v1613 = vmul.f32 %v1535, %v1589
        %v1614 = vmul.f32 %v1536, %v1589
        %v1615 = vmul.f32 %v1537, %v1589
        %v1616 = vmul.f32 %v1538, %v1589
        %v1617 = vmul.f32 %v1539, %v1589
        %v1618 = vmul.f32 %v1540, %v1589
        %v1619 = vmul.f32 %v1541, %v1589
        %v1620 = vmul.f32 %v1542, %v1589
        %v1621 = vmul.f32 %v1543, %v1589
        %v1622 = vmul.f32 %v1544, %v1589
        %v1623 = vadd.f32 %v1552, %v1591
        %v1624 = vadd.f32 %v1553, %v1592
        %v1625 = vadd.f32 %v1554, %v1593
        %v1626 = vadd.f32 %v1555, %v1594
        %v1627 = vadd.f32 %v1556, %v1595
        %v1628 = vadd.f32 %v1557, %v1596
        %v1629 = vadd.f32 %v1558, %v1597
        %v1630 = vadd.f32 %v1559, %v1598
        %v1631 = vadd.f32 %v1560, %v1599
        %v1632 = vadd.f32 %v1561, %v1600
        %v1633 = vadd.f32 %v1562, %v1601
        %v1634 = vadd.f32 %v1563, %v1602
        %v1635 = vadd.f32 %v1564, %v1603
        %v1636 = vadd.f32 %v1565, %v1604
        %v1637 = vadd.f32 %v1566, %v1605
        %v1638 = vadd.f32 %v1567, %v1606
        %v1639 = vadd.f32 %v1568, %v1607
        %v1640 = vadd.f32 %v1569, %v1608
        %v1641 = vadd.f32 %v1570, %v1609
        %v1642 = vadd.f32 %v1571, %v1610
        %v1643 = vadd.f32 %v1572, %v1611
        %v1644 = vadd.f32 %v1573, %v1612
        %v1645 = vadd.f32 %v1574, %v1613
        %v1646 = vadd.f32 %v1575, %v1614
        %v1647 = vadd.f32 %v1576, %v1615
        %v1648 = vadd.f32 %v1577, %v1616
        %v1649 = vadd.f32 %v1578, %v1617
        %v1650 = vadd.f32 %v1579, %v1618
        %v1651 = vadd.f32 %v1580, %v1619
        %v1652 = vadd.f32 %v1581, %v1620
        %v1653 = vadd.f32 %v1582, %v1621
        %v1654 = vadd.f32 %v1583, %v1622
        %v1655 = vsel %vm550, %v1623, 0.0
        %1656 = vadd.xlane.f32.xlu0 %v1655
        %v1657 = vpop.xlane.xlu0 %1656
        %v1658 = vsel %vm550, %v1624, 0.0
        %1659 = vadd.xlane.f32.xlu0 %v1658
        %v1660 = vpop.xlane.xlu0 %1659
        %v1661 = vsel %vm550, %v1625, 0.0
        %1662 = vadd.xlane.f32.xlu0 %v1661
        %v1663 = vpop.xlane.xlu0 %1662
        %v1664 = vsel %vm550, %v1626, 0.0
        %1665 = vadd.xlane.f32.xlu0 %v1664
        %v1666 = vpop.xlane.xlu0 %1665
        %v1667 = vsel %vm550, %v1627, 0.0
        %1668 = vadd.xlane.f32.xlu0 %v1667
        %v1669 = vpop.xlane.xlu0 %1668
        %v1670 = vsel %vm550, %v1628, 0.0
        %1671 = vadd.xlane.f32.xlu0 %v1670
        %v1672 = vpop.xlane.xlu0 %1671
        %v1673 = vsel %vm550, %v1629, 0.0
        %1674 = vadd.xlane.f32.xlu0 %v1673
        %v1675 = vpop.xlane.xlu0 %1674
        %v1676 = vsel %vm550, %v1630, 0.0
        %1677 = vadd.xlane.f32.xlu0 %v1676
        %v1678 = vpop.xlane.xlu0 %1677
        %v1679 = vsel %vm550, %v1631, 0.0
        %1680 = vadd.xlane.f32.xlu0 %v1679
        %v1681 = vpop.xlane.xlu0 %1680
        %v1682 = vsel %vm550, %v1632, 0.0
        %1683 = vadd.xlane.f32.xlu0 %v1682
        %v1684 = vpop.xlane.xlu0 %1683
        %v1685 = vsel %vm550, %v1633, 0.0
        %1686 = vadd.xlane.f32.xlu0 %v1685
        %v1687 = vpop.xlane.xlu0 %1686
        %v1688 = vsel %vm550, %v1634, 0.0
        %1689 = vadd.xlane.f32.xlu0 %v1688
        %v1690 = vpop.xlane.xlu0 %1689
        %v1691 = vsel %vm550, %v1635, 0.0
        %1692 = vadd.xlane.f32.xlu0 %v1691
        %v1693 = vpop.xlane.xlu0 %1692
        %v1694 = vsel %vm550, %v1636, 0.0
        %1695 = vadd.xlane.f32.xlu0 %v1694
        %v1696 = vpop.xlane.xlu0 %1695
        %v1697 = vsel %vm550, %v1637, 0.0
        %1698 = vadd.xlane.f32.xlu0 %v1697
        %v1699 = vpop.xlane.xlu0 %1698
        %v1700 = vsel %vm550, %v1638, 0.0
        %1701 = vadd.xlane.f32.xlu0 %v1700
        %v1702 = vpop.xlane.xlu0 %1701
        %v1703 = vsel %vm550, %v1639, 0.0
        %1704 = vadd.xlane.f32.xlu0 %v1703
        %v1705 = vpop.xlane.xlu0 %1704
        %v1706 = vsel %vm550, %v1640, 0.0
        %1707 = vadd.xlane.f32.xlu0 %v1706
        %v1708 = vpop.xlane.xlu0 %1707
        %v1709 = vsel %vm550, %v1641, 0.0
        %1710 = vadd.xlane.f32.xlu0 %v1709
        %v1711 = vpop.xlane.xlu0 %1710
        %v1712 = vsel %vm550, %v1642, 0.0
        %1713 = vadd.xlane.f32.xlu0 %v1712
        %v1714 = vpop.xlane.xlu0 %1713
        %v1715 = vsel %vm550, %v1643, 0.0
        %1716 = vadd.xlane.f32.xlu0 %v1715
        %v1717 = vpop.xlane.xlu0 %1716
        %v1718 = vsel %vm550, %v1644, 0.0
        %1719 = vadd.xlane.f32.xlu0 %v1718
        %v1720 = vpop.xlane.xlu0 %1719
        %v1721 = vsel %vm550, %v1645, 0.0
        %1722 = vadd.xlane.f32.xlu0 %v1721
        %v1723 = vpop.xlane.xlu0 %1722
        %v1724 = vsel %vm550, %v1646, 0.0
        %1725 = vadd.xlane.f32.xlu0 %v1724
        %v1726 = vpop.xlane.xlu0 %1725
        %v1727 = vsel %vm550, %v1647, 0.0
        %1728 = vadd.xlane.f32.xlu0 %v1727
        %v1729 = vpop.xlane.xlu0 %1728
        %v1730 = vsel %vm550, %v1648, 0.0
        %1731 = vadd.xlane.f32.xlu0 %v1730
        %v1732 = vpop.xlane.xlu0 %1731
        %v1733 = vsel %vm550, %v1649, 0.0
        %1734 = vadd.xlane.f32.xlu0 %v1733
        %v1735 = vpop.xlane.xlu0 %1734
        %v1736 = vsel %vm550, %v1650, 0.0
        %1737 = vadd.xlane.f32.xlu0 %v1736
        %v1738 = vpop.xlane.xlu0 %1737
        %v1739 = vsel %vm550, %v1651, 0.0
        %1740 = vadd.xlane.f32.xlu0 %v1739
        %v1741 = vpop.xlane.xlu0 %1740
        %v1742 = vsel %vm550, %v1652, 0.0
        %1743 = vadd.xlane.f32.xlu0 %v1742
        %v1744 = vpop.xlane.xlu0 %1743
        %v1745 = vsel %vm550, %v1653, 0.0
        %1746 = vadd.xlane.f32.xlu0 %v1745
        %v1747 = vpop.xlane.xlu0 %1746
        %v1748 = vsel %vm550, %v1654, 0.0
        %1749 = vadd.xlane.f32.xlu0 %v1748
        %v1750 = vpop.xlane.xlu0 %1749
        %v1751 = vld [vmem:[#allocation2] sm:$0x1]
        %v1753 = vlaneseq
        %v1754 = vshrl.u32 %v1753, 7
        %v1755 = vsub.s32 0, %v1754
        %v1756 = vrot.slane %v1751, %v1755
        %v1758 = vadd.f32 %v1657, %v1756
        %v1759 = vadd.f32 %v1660, %v1756
        %v1760 = vadd.f32 %v1663, %v1756
        %v1761 = vadd.f32 %v1666, %v1756
        %v1762 = vadd.f32 %v1669, %v1756
        %v1763 = vadd.f32 %v1672, %v1756
        %v1764 = vadd.f32 %v1675, %v1756
        %v1765 = vadd.f32 %v1678, %v1756
        %v1766 = vadd.f32 %v1681, %v1756
        %v1767 = vadd.f32 %v1684, %v1756
        %v1768 = vadd.f32 %v1687, %v1756
        %v1769 = vadd.f32 %v1690, %v1756
        %v1770 = vadd.f32 %v1693, %v1756
        %v1771 = vadd.f32 %v1696, %v1756
        %v1772 = vadd.f32 %v1699, %v1756
        %v1773 = vadd.f32 %v1702, %v1756
        %v1774 = vadd.f32 %v1705, %v1756
        %v1775 = vadd.f32 %v1708, %v1756
        %v1776 = vadd.f32 %v1711, %v1756
        %v1777 = vadd.f32 %v1714, %v1756
        %v1778 = vadd.f32 %v1717, %v1756
        %v1779 = vadd.f32 %v1720, %v1756
        %v1780 = vadd.f32 %v1723, %v1756
        %v1781 = vadd.f32 %v1726, %v1756
        %v1782 = vadd.f32 %v1729, %v1756
        %v1783 = vadd.f32 %v1732, %v1756
        %v1784 = vadd.f32 %v1735, %v1756
        %v1785 = vadd.f32 %v1738, %v1756
        %v1786 = vadd.f32 %v1741, %v1756
        %v1787 = vadd.f32 %v1744, %v1756
        %v1788 = vadd.f32 %v1747, %v1756
        %v1789 = vadd.f32 %v1750, %v1756
        %v1822 = vcombine.high %v1758, %v1758
        %v1824 = vunpack.c.l.s4 1966171168
        %v1825 = vunpack.c.0.s8 %v1824
        %v1826 = vlaneseq
        %v1827 = vshrl.u32 %v1826, 7
        %v1828 = vsub.s32 %v1825, %v1827
        %v1829 = vrot.slane %v1758, %v1828
        %v1831 = vunpack.c.l.s4 1966171168
        %v1832 = vunpack.c.0.s8 %v1831
        %v1833 = vlaneseq
        %v1834 = vshrl.u32 %v1833, 7
        %v1835 = vsub.s32 %v1832, %v1834
        %v1836 = vrot.slane %v1822, %v1835
        %v1837 = vcombine.high %v1829, %v1829
        %v1838 = vcombine.high %v1836, %v1836
        %v1840 = vunpack.c.l.s4 1966171168
        %v1841 = vunpack.c.0.s8 %v1840
        %v1842 = vlaneseq
        %v1843 = vshrl.u32 %v1842, 7
        %v1844 = vsub.s32 %v1841, %v1843
        %v1845 = vrot.slane %v1829, %v1844
        %v1847 = vunpack.c.l.s4 1966171168
        %v1848 = vunpack.c.0.s8 %v1847
        %v1849 = vlaneseq
        %v1850 = vshrl.u32 %v1849, 7
        %v1851 = vsub.s32 %v1848, %v1850
        %v1852 = vrot.slane %v1836, %v1851
        %v1854 = vunpack.c.l.s4 1966171168
        %v1855 = vunpack.c.0.s8 %v1854
        %v1856 = vlaneseq
        %v1857 = vshrl.u32 %v1856, 7
        %v1858 = vsub.s32 %v1855, %v1857
        %v1859 = vrot.slane %v1837, %v1858
        %v1861 = vunpack.c.l.s4 1966171168
        %v1862 = vunpack.c.0.s8 %v1861
        %v1863 = vlaneseq
        %v1864 = vshrl.u32 %v1863, 7
        %v1865 = vsub.s32 %v1862, %v1864
        %v1866 = vrot.slane %v1838, %v1865
        %v1867 = vcombine.high %v1845, %v1845
        %v1868 = vcombine.high %v1852, %v1852
        %v1869 = vcombine.high %v1859, %v1859
        %v1870 = vcombine.high %v1866, %v1866
        %v1871 = vcombine.high %v1759, %v1759
        %v1873 = vunpack.c.l.s4 1966171168
        %v1874 = vunpack.c.0.s8 %v1873
        %v1875 = vlaneseq
        %v1876 = vshrl.u32 %v1875, 7
        %v1877 = vsub.s32 %v1874, %v1876
        %v1878 = vrot.slane %v1759, %v1877
        %v1880 = vunpack.c.l.s4 1966171168
        %v1881 = vunpack.c.0.s8 %v1880
        %v1882 = vlaneseq
        %v1883 = vshrl.u32 %v1882, 7
        %v1884 = vsub.s32 %v1881, %v1883
        %v1885 = vrot.slane %v1871, %v1884
        %v1886 = vcombine.high %v1878, %v1878
        %v1887 = vcombine.high %v1885, %v1885
        %v1889 = vunpack.c.l.s4 1966171168
        %v1890 = vunpack.c.0.s8 %v1889
        %v1891 = vlaneseq
        %v1892 = vshrl.u32 %v1891, 7
        %v1893 = vsub.s32 %v1890, %v1892
        %v1894 = vrot.slane %v1878, %v1893
        %v1896 = vunpack.c.l.s4 1966171168
        %v1897 = vunpack.c.0.s8 %v1896
        %v1898 = vlaneseq
        %v1899 = vshrl.u32 %v1898, 7
        %v1900 = vsub.s32 %v1897, %v1899
        %v1901 = vrot.slane %v1885, %v1900
        %v1903 = vunpack.c.l.s4 1966171168
        %v1904 = vunpack.c.0.s8 %v1903
        %v1905 = vlaneseq
        %v1906 = vshrl.u32 %v1905, 7
        %v1907 = vsub.s32 %v1904, %v1906
        %v1908 = vrot.slane %v1886, %v1907
        %v1910 = vunpack.c.l.s4 1966171168
        %v1911 = vunpack.c.0.s8 %v1910
        %v1912 = vlaneseq
        %v1913 = vshrl.u32 %v1912, 7
        %v1914 = vsub.s32 %v1911, %v1913
        %v1915 = vrot.slane %v1887, %v1914
        %v1916 = vcombine.high %v1894, %v1894
        %v1917 = vcombine.high %v1901, %v1901
        %v1918 = vcombine.high %v1908, %v1908
        %v1919 = vcombine.high %v1915, %v1915
        %v1920 = vcombine.high %v1760, %v1760
        %v1922 = vunpack.c.l.s4 1966171168
        %v1923 = vunpack.c.0.s8 %v1922
        %v1924 = vlaneseq
        %v1925 = vshrl.u32 %v1924, 7
        %v1926 = vsub.s32 %v1923, %v1925
        %v1927 = vrot.slane %v1760, %v1926
        %v1929 = vunpack.c.l.s4 1966171168
        %v1930 = vunpack.c.0.s8 %v1929
        %v1931 = vlaneseq
        %v1932 = vshrl.u32 %v1931, 7
        %v1933 = vsub.s32 %v1930, %v1932
        %v1934 = vrot.slane %v1920, %v1933
        %v1935 = vcombine.high %v1927, %v1927
        %v1936 = vcombine.high %v1934, %v1934
        %v1938 = vunpack.c.l.s4 1966171168
        %v1939 = vunpack.c.0.s8 %v1938
        %v1940 = vlaneseq
        %v1941 = vshrl.u32 %v1940, 7
        %v1942 = vsub.s32 %v1939, %v1941
        %v1943 = vrot.slane %v1927, %v1942
        %v1945 = vunpack.c.l.s4 1966171168
        %v1946 = vunpack.c.0.s8 %v1945
        %v1947 = vlaneseq
        %v1948 = vshrl.u32 %v1947, 7
        %v1949 = vsub.s32 %v1946, %v1948
        %v1950 = vrot.slane %v1934, %v1949
        %v1952 = vunpack.c.l.s4 1966171168
        %v1953 = vunpack.c.0.s8 %v1952
        %v1954 = vlaneseq
        %v1955 = vshrl.u32 %v1954, 7
        %v1956 = vsub.s32 %v1953, %v1955
        %v1957 = vrot.slane %v1935, %v1956
        %v1959 = vunpack.c.l.s4 1966171168
        %v1960 = vunpack.c.0.s8 %v1959
        %v1961 = vlaneseq
        %v1962 = vshrl.u32 %v1961, 7
        %v1963 = vsub.s32 %v1960, %v1962
        %v1964 = vrot.slane %v1936, %v1963
        %v1965 = vcombine.high %v1943, %v1943
        %v1966 = vcombine.high %v1950, %v1950
        %v1967 = vcombine.high %v1957, %v1957
        %v1968 = vcombine.high %v1964, %v1964
        %v1969 = vcombine.high %v1761, %v1761
        %v1971 = vunpack.c.l.s4 1966171168
        %v1972 = vunpack.c.0.s8 %v1971
        %v1973 = vlaneseq
        %v1974 = vshrl.u32 %v1973, 7
        %v1975 = vsub.s32 %v1972, %v1974
        %v1976 = vrot.slane %v1761, %v1975
        %v1978 = vunpack.c.l.s4 1966171168
        %v1979 = vunpack.c.0.s8 %v1978
        %v1980 = vlaneseq
        %v1981 = vshrl.u32 %v1980, 7
        %v1982 = vsub.s32 %v1979, %v1981
        %v1983 = vrot.slane %v1969, %v1982
        %v1984 = vcombine.high %v1976, %v1976
        %v1985 = vcombine.high %v1983, %v1983
        %v1987 = vunpack.c.l.s4 1966171168
        %v1988 = vunpack.c.0.s8 %v1987
        %v1989 = vlaneseq
        %v1990 = vshrl.u32 %v1989, 7
        %v1991 = vsub.s32 %v1988, %v1990
        %v1992 = vrot.slane %v1976, %v1991
        %v1994 = vunpack.c.l.s4 1966171168
        %v1995 = vunpack.c.0.s8 %v1994
        %v1996 = vlaneseq
        %v1997 = vshrl.u32 %v1996, 7
        %v1998 = vsub.s32 %v1995, %v1997
        %v1999 = vrot.slane %v1983, %v1998
        %v2001 = vunpack.c.l.s4 1966171168
        %v2002 = vunpack.c.0.s8 %v2001
        %v2003 = vlaneseq
        %v2004 = vshrl.u32 %v2003, 7
        %v2005 = vsub.s32 %v2002, %v2004
        %v2006 = vrot.slane %v1984, %v2005
        %v2008 = vunpack.c.l.s4 1966171168
        %v2009 = vunpack.c.0.s8 %v2008
        %v2010 = vlaneseq
        %v2011 = vshrl.u32 %v2010, 7
        %v2012 = vsub.s32 %v2009, %v2011
        %v2013 = vrot.slane %v1985, %v2012
        %v2014 = vcombine.high %v1992, %v1992
        %v2015 = vcombine.high %v1999, %v1999
        %v2016 = vcombine.high %v2006, %v2006
        %v2017 = vcombine.high %v2013, %v2013
        %v2018 = vcombine.high %v1762, %v1762
        %v2020 = vunpack.c.l.s4 1966171168
        %v2021 = vunpack.c.0.s8 %v2020
        %v2022 = vlaneseq
        %v2023 = vshrl.u32 %v2022, 7
        %v2024 = vsub.s32 %v2021, %v2023
        %v2025 = vrot.slane %v1762, %v2024
        %v2027 = vunpack.c.l.s4 1966171168
        %v2028 = vunpack.c.0.s8 %v2027
        %v2029 = vlaneseq
        %v2030 = vshrl.u32 %v2029, 7
        %v2031 = vsub.s32 %v2028, %v2030
        %v2032 = vrot.slane %v2018, %v2031
        %v2033 = vcombine.high %v2025, %v2025
        %v2034 = vcombine.high %v2032, %v2032
        %v2036 = vunpack.c.l.s4 1966171168
        %v2037 = vunpack.c.0.s8 %v2036
        %v2038 = vlaneseq
        %v2039 = vshrl.u32 %v2038, 7
        %v2040 = vsub.s32 %v2037, %v2039
        %v2041 = vrot.slane %v2025, %v2040
        %v2043 = vunpack.c.l.s4 1966171168
        %v2044 = vunpack.c.0.s8 %v2043
        %v2045 = vlaneseq
        %v2046 = vshrl.u32 %v2045, 7
        %v2047 = vsub.s32 %v2044, %v2046
        %v2048 = vrot.slane %v2032, %v2047
        %v2050 = vunpack.c.l.s4 1966171168
        %v2051 = vunpack.c.0.s8 %v2050
        %v2052 = vlaneseq
        %v2053 = vshrl.u32 %v2052, 7
        %v2054 = vsub.s32 %v2051, %v2053
        %v2055 = vrot.slane %v2033, %v2054
        %v2057 = vunpack.c.l.s4 1966171168
        %v2058 = vunpack.c.0.s8 %v2057
        %v2059 = vlaneseq
        %v2060 = vshrl.u32 %v2059, 7
        %v2061 = vsub.s32 %v2058, %v2060
        %v2062 = vrot.slane %v2034, %v2061
        %v2063 = vcombine.high %v2041, %v2041
        %v2064 = vcombine.high %v2048, %v2048
        %v2065 = vcombine.high %v2055, %v2055
        %v2066 = vcombine.high %v2062, %v2062
        %v2067 = vcombine.high %v1763, %v1763
        %v2069 = vunpack.c.l.s4 1966171168
        %v2070 = vunpack.c.0.s8 %v2069
        %v2071 = vlaneseq
        %v2072 = vshrl.u32 %v2071, 7
        %v2073 = vsub.s32 %v2070, %v2072
        %v2074 = vrot.slane %v1763, %v2073
        %v2076 = vunpack.c.l.s4 1966171168
        %v2077 = vunpack.c.0.s8 %v2076
        %v2078 = vlaneseq
        %v2079 = vshrl.u32 %v2078, 7
        %v2080 = vsub.s32 %v2077, %v2079
        %v2081 = vrot.slane %v2067, %v2080
        %v2082 = vcombine.high %v2074, %v2074
        %v2083 = vcombine.high %v2081, %v2081
        %v2085 = vunpack.c.l.s4 1966171168
        %v2086 = vunpack.c.0.s8 %v2085
        %v2087 = vlaneseq
        %v2088 = vshrl.u32 %v2087, 7
        %v2089 = vsub.s32 %v2086, %v2088
        %v2090 = vrot.slane %v2074, %v2089
        %v2092 = vunpack.c.l.s4 1966171168
        %v2093 = vunpack.c.0.s8 %v2092
        %v2094 = vlaneseq
        %v2095 = vshrl.u32 %v2094, 7
        %v2096 = vsub.s32 %v2093, %v2095
        %v2097 = vrot.slane %v2081, %v2096
        %v2099 = vunpack.c.l.s4 1966171168
        %v2100 = vunpack.c.0.s8 %v2099
        %v2101 = vlaneseq
        %v2102 = vshrl.u32 %v2101, 7
        %v2103 = vsub.s32 %v2100, %v2102
        %v2104 = vrot.slane %v2082, %v2103
        %v2106 = vunpack.c.l.s4 1966171168
        %v2107 = vunpack.c.0.s8 %v2106
        %v2108 = vlaneseq
        %v2109 = vshrl.u32 %v2108, 7
        %v2110 = vsub.s32 %v2107, %v2109
        %v2111 = vrot.slane %v2083, %v2110
        %v2112 = vcombine.high %v2090, %v2090
        %v2113 = vcombine.high %v2097, %v2097
        %v2114 = vcombine.high %v2104, %v2104
        %v2115 = vcombine.high %v2111, %v2111
        %v2116 = vcombine.high %v1764, %v1764
        %v2118 = vunpack.c.l.s4 1966171168
        %v2119 = vunpack.c.0.s8 %v2118
        %v2120 = vlaneseq
        %v2121 = vshrl.u32 %v2120, 7
        %v2122 = vsub.s32 %v2119, %v2121
        %v2123 = vrot.slane %v1764, %v2122
        %v2125 = vunpack.c.l.s4 1966171168
        %v2126 = vunpack.c.0.s8 %v2125
        %v2127 = vlaneseq
        %v2128 = vshrl.u32 %v2127, 7
        %v2129 = vsub.s32 %v2126, %v2128
        %v2130 = vrot.slane %v2116, %v2129
        %v2131 = vcombine.high %v2123, %v2123
        %v2132 = vcombine.high %v2130, %v2130
        %v2134 = vunpack.c.l.s4 1966171168
        %v2135 = vunpack.c.0.s8 %v2134
        %v2136 = vlaneseq
        %v2137 = vshrl.u32 %v2136, 7
        %v2138 = vsub.s32 %v2135, %v2137
        %v2139 = vrot.slane %v2123, %v2138
        %v2141 = vunpack.c.l.s4 1966171168
        %v2142 = vunpack.c.0.s8 %v2141
        %v2143 = vlaneseq
        %v2144 = vshrl.u32 %v2143, 7
        %v2145 = vsub.s32 %v2142, %v2144
        %v2146 = vrot.slane %v2130, %v2145
        %v2148 = vunpack.c.l.s4 1966171168
        %v2149 = vunpack.c.0.s8 %v2148
        %v2150 = vlaneseq
        %v2151 = vshrl.u32 %v2150, 7
        %v2152 = vsub.s32 %v2149, %v2151
        %v2153 = vrot.slane %v2131, %v2152
        %v2155 = vunpack.c.l.s4 1966171168
        %v2156 = vunpack.c.0.s8 %v2155
        %v2157 = vlaneseq
        %v2158 = vshrl.u32 %v2157, 7
        %v2159 = vsub.s32 %v2156, %v2158
        %v2160 = vrot.slane %v2132, %v2159
        %v2161 = vcombine.high %v2139, %v2139
        %v2162 = vcombine.high %v2146, %v2146
        %v2163 = vcombine.high %v2153, %v2153
        %v2164 = vcombine.high %v2160, %v2160
        %v2165 = vcombine.high %v1765, %v1765
        %v2167 = vunpack.c.l.s4 1966171168
        %v2168 = vunpack.c.0.s8 %v2167
        %v2169 = vlaneseq
        %v2170 = vshrl.u32 %v2169, 7
        %v2171 = vsub.s32 %v2168, %v2170
        %v2172 = vrot.slane %v1765, %v2171
        %v2174 = vunpack.c.l.s4 1966171168
        %v2175 = vunpack.c.0.s8 %v2174
        %v2176 = vlaneseq
        %v2177 = vshrl.u32 %v2176, 7
        %v2178 = vsub.s32 %v2175, %v2177
        %v2179 = vrot.slane %v2165, %v2178
        %v2180 = vcombine.high %v2172, %v2172
        %v2181 = vcombine.high %v2179, %v2179
        %v2183 = vunpack.c.l.s4 1966171168
        %v2184 = vunpack.c.0.s8 %v2183
        %v2185 = vlaneseq
        %v2186 = vshrl.u32 %v2185, 7
        %v2187 = vsub.s32 %v2184, %v2186
        %v2188 = vrot.slane %v2172, %v2187
        %v2190 = vunpack.c.l.s4 1966171168
        %v2191 = vunpack.c.0.s8 %v2190
        %v2192 = vlaneseq
        %v2193 = vshrl.u32 %v2192, 7
        %v2194 = vsub.s32 %v2191, %v2193
        %v2195 = vrot.slane %v2179, %v2194
        %v2197 = vunpack.c.l.s4 1966171168
        %v2198 = vunpack.c.0.s8 %v2197
        %v2199 = vlaneseq
        %v2200 = vshrl.u32 %v2199, 7
        %v2201 = vsub.s32 %v2198, %v2200
        %v2202 = vrot.slane %v2180, %v2201
        %v2204 = vunpack.c.l.s4 1966171168
        %v2205 = vunpack.c.0.s8 %v2204
        %v2206 = vlaneseq
        %v2207 = vshrl.u32 %v2206, 7
        %v2208 = vsub.s32 %v2205, %v2207
        %v2209 = vrot.slane %v2181, %v2208
        %v2210 = vcombine.high %v2188, %v2188
        %v2211 = vcombine.high %v2195, %v2195
        %v2212 = vcombine.high %v2202, %v2202
        %v2213 = vcombine.high %v2209, %v2209
        %v2214 = vcombine.high %v1766, %v1766
        %v2216 = vunpack.c.l.s4 1966171168
        %v2217 = vunpack.c.0.s8 %v2216
        %v2218 = vlaneseq
        %v2219 = vshrl.u32 %v2218, 7
        %v2220 = vsub.s32 %v2217, %v2219
        %v2221 = vrot.slane %v1766, %v2220
        %v2223 = vunpack.c.l.s4 1966171168
        %v2224 = vunpack.c.0.s8 %v2223
        %v2225 = vlaneseq
        %v2226 = vshrl.u32 %v2225, 7
        %v2227 = vsub.s32 %v2224, %v2226
        %v2228 = vrot.slane %v2214, %v2227
        %v2229 = vcombine.high %v2221, %v2221
        %v2230 = vcombine.high %v2228, %v2228
        %v2232 = vunpack.c.l.s4 1966171168
        %v2233 = vunpack.c.0.s8 %v2232
        %v2234 = vlaneseq
        %v2235 = vshrl.u32 %v2234, 7
        %v2236 = vsub.s32 %v2233, %v2235
        %v2237 = vrot.slane %v2221, %v2236
        %v2239 = vunpack.c.l.s4 1966171168
        %v2240 = vunpack.c.0.s8 %v2239
        %v2241 = vlaneseq
        %v2242 = vshrl.u32 %v2241, 7
        %v2243 = vsub.s32 %v2240, %v2242
        %v2244 = vrot.slane %v2228, %v2243
        %v2246 = vunpack.c.l.s4 1966171168
        %v2247 = vunpack.c.0.s8 %v2246
        %v2248 = vlaneseq
        %v2249 = vshrl.u32 %v2248, 7
        %v2250 = vsub.s32 %v2247, %v2249
        %v2251 = vrot.slane %v2229, %v2250
        %v2253 = vunpack.c.l.s4 1966171168
        %v2254 = vunpack.c.0.s8 %v2253
        %v2255 = vlaneseq
        %v2256 = vshrl.u32 %v2255, 7
        %v2257 = vsub.s32 %v2254, %v2256
        %v2258 = vrot.slane %v2230, %v2257
        %v2259 = vcombine.high %v2237, %v2237
        %v2260 = vcombine.high %v2244, %v2244
        %v2261 = vcombine.high %v2251, %v2251
        %v2262 = vcombine.high %v2258, %v2258
        %v2263 = vcombine.high %v1767, %v1767
        %v2265 = vunpack.c.l.s4 1966171168
        %v2266 = vunpack.c.0.s8 %v2265
        %v2267 = vlaneseq
        %v2268 = vshrl.u32 %v2267, 7
        %v2269 = vsub.s32 %v2266, %v2268
        %v2270 = vrot.slane %v1767, %v2269
        %v2272 = vunpack.c.l.s4 1966171168
        %v2273 = vunpack.c.0.s8 %v2272
        %v2274 = vlaneseq
        %v2275 = vshrl.u32 %v2274, 7
        %v2276 = vsub.s32 %v2273, %v2275
        %v2277 = vrot.slane %v2263, %v2276
        %v2278 = vcombine.high %v2270, %v2270
        %v2279 = vcombine.high %v2277, %v2277
        %v2281 = vunpack.c.l.s4 1966171168
        %v2282 = vunpack.c.0.s8 %v2281
        %v2283 = vlaneseq
        %v2284 = vshrl.u32 %v2283, 7
        %v2285 = vsub.s32 %v2282, %v2284
        %v2286 = vrot.slane %v2270, %v2285
        %v2288 = vunpack.c.l.s4 1966171168
        %v2289 = vunpack.c.0.s8 %v2288
        %v2290 = vlaneseq
        %v2291 = vshrl.u32 %v2290, 7
        %v2292 = vsub.s32 %v2289, %v2291
        %v2293 = vrot.slane %v2277, %v2292
        %v2295 = vunpack.c.l.s4 1966171168
        %v2296 = vunpack.c.0.s8 %v2295
        %v2297 = vlaneseq
        %v2298 = vshrl.u32 %v2297, 7
        %v2299 = vsub.s32 %v2296, %v2298
        %v2300 = vrot.slane %v2278, %v2299
        %v2302 = vunpack.c.l.s4 1966171168
        %v2303 = vunpack.c.0.s8 %v2302
        %v2304 = vlaneseq
        %v2305 = vshrl.u32 %v2304, 7
        %v2306 = vsub.s32 %v2303, %v2305
        %v2307 = vrot.slane %v2279, %v2306
        %v2308 = vcombine.high %v2286, %v2286
        %v2309 = vcombine.high %v2293, %v2293
        %v2310 = vcombine.high %v2300, %v2300
        %v2311 = vcombine.high %v2307, %v2307
        %v2312 = vcombine.high %v1768, %v1768
        %v2314 = vunpack.c.l.s4 1966171168
        %v2315 = vunpack.c.0.s8 %v2314
        %v2316 = vlaneseq
        %v2317 = vshrl.u32 %v2316, 7
        %v2318 = vsub.s32 %v2315, %v2317
        %v2319 = vrot.slane %v1768, %v2318
        %v2321 = vunpack.c.l.s4 1966171168
        %v2322 = vunpack.c.0.s8 %v2321
        %v2323 = vlaneseq
        %v2324 = vshrl.u32 %v2323, 7
        %v2325 = vsub.s32 %v2322, %v2324
        %v2326 = vrot.slane %v2312, %v2325
        %v2327 = vcombine.high %v2319, %v2319
        %v2328 = vcombine.high %v2326, %v2326
        %v2330 = vunpack.c.l.s4 1966171168
        %v2331 = vunpack.c.0.s8 %v2330
        %v2332 = vlaneseq
        %v2333 = vshrl.u32 %v2332, 7
        %v2334 = vsub.s32 %v2331, %v2333
        %v2335 = vrot.slane %v2319, %v2334
        %v2337 = vunpack.c.l.s4 1966171168
        %v2338 = vunpack.c.0.s8 %v2337
        %v2339 = vlaneseq
        %v2340 = vshrl.u32 %v2339, 7
        %v2341 = vsub.s32 %v2338, %v2340
        %v2342 = vrot.slane %v2326, %v2341
        %v2344 = vunpack.c.l.s4 1966171168
        %v2345 = vunpack.c.0.s8 %v2344
        %v2346 = vlaneseq
        %v2347 = vshrl.u32 %v2346, 7
        %v2348 = vsub.s32 %v2345, %v2347
        %v2349 = vrot.slane %v2327, %v2348
        %v2351 = vunpack.c.l.s4 1966171168
        %v2352 = vunpack.c.0.s8 %v2351
        %v2353 = vlaneseq
        %v2354 = vshrl.u32 %v2353, 7
        %v2355 = vsub.s32 %v2352, %v2354
        %v2356 = vrot.slane %v2328, %v2355
        %v2357 = vcombine.high %v2335, %v2335
        %v2358 = vcombine.high %v2342, %v2342
        %v2359 = vcombine.high %v2349, %v2349
        %v2360 = vcombine.high %v2356, %v2356
        %v2361 = vcombine.high %v1769, %v1769
        %v2363 = vunpack.c.l.s4 1966171168
        %v2364 = vunpack.c.0.s8 %v2363
        %v2365 = vlaneseq
        %v2366 = vshrl.u32 %v2365, 7
        %v2367 = vsub.s32 %v2364, %v2366
        %v2368 = vrot.slane %v1769, %v2367
        %v2370 = vunpack.c.l.s4 1966171168
        %v2371 = vunpack.c.0.s8 %v2370
        %v2372 = vlaneseq
        %v2373 = vshrl.u32 %v2372, 7
        %v2374 = vsub.s32 %v2371, %v2373
        %v2375 = vrot.slane %v2361, %v2374
        %v2376 = vcombine.high %v2368, %v2368
        %v2377 = vcombine.high %v2375, %v2375
        %v2379 = vunpack.c.l.s4 1966171168
        %v2380 = vunpack.c.0.s8 %v2379
        %v2381 = vlaneseq
        %v2382 = vshrl.u32 %v2381, 7
        %v2383 = vsub.s32 %v2380, %v2382
        %v2384 = vrot.slane %v2368, %v2383
        %v2386 = vunpack.c.l.s4 1966171168
        %v2387 = vunpack.c.0.s8 %v2386
        %v2388 = vlaneseq
        %v2389 = vshrl.u32 %v2388, 7
        %v2390 = vsub.s32 %v2387, %v2389
        %v2391 = vrot.slane %v2375, %v2390
        %v2393 = vunpack.c.l.s4 1966171168
        %v2394 = vunpack.c.0.s8 %v2393
        %v2395 = vlaneseq
        %v2396 = vshrl.u32 %v2395, 7
        %v2397 = vsub.s32 %v2394, %v2396
        %v2398 = vrot.slane %v2376, %v2397
        %v2400 = vunpack.c.l.s4 1966171168
        %v2401 = vunpack.c.0.s8 %v2400
        %v2402 = vlaneseq
        %v2403 = vshrl.u32 %v2402, 7
        %v2404 = vsub.s32 %v2401, %v2403
        %v2405 = vrot.slane %v2377, %v2404
        %v2406 = vcombine.high %v2384, %v2384
        %v2407 = vcombine.high %v2391, %v2391
        %v2408 = vcombine.high %v2398, %v2398
        %v2409 = vcombine.high %v2405, %v2405
        %v2410 = vcombine.high %v1770, %v1770
        %v2412 = vunpack.c.l.s4 1966171168
        %v2413 = vunpack.c.0.s8 %v2412
        %v2414 = vlaneseq
        %v2415 = vshrl.u32 %v2414, 7
        %v2416 = vsub.s32 %v2413, %v2415
        %v2417 = vrot.slane %v1770, %v2416
        %v2419 = vunpack.c.l.s4 1966171168
        %v2420 = vunpack.c.0.s8 %v2419
        %v2421 = vlaneseq
        %v2422 = vshrl.u32 %v2421, 7
        %v2423 = vsub.s32 %v2420, %v2422
        %v2424 = vrot.slane %v2410, %v2423
        %v2425 = vcombine.high %v2417, %v2417
        %v2426 = vcombine.high %v2424, %v2424
        %v2428 = vunpack.c.l.s4 1966171168
        %v2429 = vunpack.c.0.s8 %v2428
        %v2430 = vlaneseq
        %v2431 = vshrl.u32 %v2430, 7
        %v2432 = vsub.s32 %v2429, %v2431
        %v2433 = vrot.slane %v2417, %v2432
        %v2435 = vunpack.c.l.s4 1966171168
        %v2436 = vunpack.c.0.s8 %v2435
        %v2437 = vlaneseq
        %v2438 = vshrl.u32 %v2437, 7
        %v2439 = vsub.s32 %v2436, %v2438
        %v2440 = vrot.slane %v2424, %v2439
        %v2442 = vunpack.c.l.s4 1966171168
        %v2443 = vunpack.c.0.s8 %v2442
        %v2444 = vlaneseq
        %v2445 = vshrl.u32 %v2444, 7
        %v2446 = vsub.s32 %v2443, %v2445
        %v2447 = vrot.slane %v2425, %v2446
        %v2449 = vunpack.c.l.s4 1966171168
        %v2450 = vunpack.c.0.s8 %v2449
        %v2451 = vlaneseq
        %v2452 = vshrl.u32 %v2451, 7
        %v2453 = vsub.s32 %v2450, %v2452
        %v2454 = vrot.slane %v2426, %v2453
        %v2455 = vcombine.high %v2433, %v2433
        %v2456 = vcombine.high %v2440, %v2440
        %v2457 = vcombine.high %v2447, %v2447
        %v2458 = vcombine.high %v2454, %v2454
        %v2459 = vcombine.high %v1771, %v1771
        %v2461 = vunpack.c.l.s4 1966171168
        %v2462 = vunpack.c.0.s8 %v2461
        %v2463 = vlaneseq
        %v2464 = vshrl.u32 %v2463, 7
        %v2465 = vsub.s32 %v2462, %v2464
        %v2466 = vrot.slane %v1771, %v2465
        %v2468 = vunpack.c.l.s4 1966171168
        %v2469 = vunpack.c.0.s8 %v2468
        %v2470 = vlaneseq
        %v2471 = vshrl.u32 %v2470, 7
        %v2472 = vsub.s32 %v2469, %v2471
        %v2473 = vrot.slane %v2459, %v2472
        %v2474 = vcombine.high %v2466, %v2466
        %v2475 = vcombine.high %v2473, %v2473
        %v2477 = vunpack.c.l.s4 1966171168
        %v2478 = vunpack.c.0.s8 %v2477
        %v2479 = vlaneseq
        %v2480 = vshrl.u32 %v2479, 7
        %v2481 = vsub.s32 %v2478, %v2480
        %v2482 = vrot.slane %v2466, %v2481
        %v2484 = vunpack.c.l.s4 1966171168
        %v2485 = vunpack.c.0.s8 %v2484
        %v2486 = vlaneseq
        %v2487 = vshrl.u32 %v2486, 7
        %v2488 = vsub.s32 %v2485, %v2487
        %v2489 = vrot.slane %v2473, %v2488
        %v2491 = vunpack.c.l.s4 1966171168
        %v2492 = vunpack.c.0.s8 %v2491
        %v2493 = vlaneseq
        %v2494 = vshrl.u32 %v2493, 7
        %v2495 = vsub.s32 %v2492, %v2494
        %v2496 = vrot.slane %v2474, %v2495
        %v2498 = vunpack.c.l.s4 1966171168
        %v2499 = vunpack.c.0.s8 %v2498
        %v2500 = vlaneseq
        %v2501 = vshrl.u32 %v2500, 7
        %v2502 = vsub.s32 %v2499, %v2501
        %v2503 = vrot.slane %v2475, %v2502
        %v2504 = vcombine.high %v2482, %v2482
        %v2505 = vcombine.high %v2489, %v2489
        %v2506 = vcombine.high %v2496, %v2496
        %v2507 = vcombine.high %v2503, %v2503
        %v2508 = vcombine.high %v1772, %v1772
        %v2510 = vunpack.c.l.s4 1966171168
        %v2511 = vunpack.c.0.s8 %v2510
        %v2512 = vlaneseq
        %v2513 = vshrl.u32 %v2512, 7
        %v2514 = vsub.s32 %v2511, %v2513
        %v2515 = vrot.slane %v1772, %v2514
        %v2517 = vunpack.c.l.s4 1966171168
        %v2518 = vunpack.c.0.s8 %v2517
        %v2519 = vlaneseq
        %v2520 = vshrl.u32 %v2519, 7
        %v2521 = vsub.s32 %v2518, %v2520
        %v2522 = vrot.slane %v2508, %v2521
        %v2523 = vcombine.high %v2515, %v2515
        %v2524 = vcombine.high %v2522, %v2522
        %v2526 = vunpack.c.l.s4 1966171168
        %v2527 = vunpack.c.0.s8 %v2526
        %v2528 = vlaneseq
        %v2529 = vshrl.u32 %v2528, 7
        %v2530 = vsub.s32 %v2527, %v2529
        %v2531 = vrot.slane %v2515, %v2530
        %v2533 = vunpack.c.l.s4 1966171168
        %v2534 = vunpack.c.0.s8 %v2533
        %v2535 = vlaneseq
        %v2536 = vshrl.u32 %v2535, 7
        %v2537 = vsub.s32 %v2534, %v2536
        %v2538 = vrot.slane %v2522, %v2537
        %v2540 = vunpack.c.l.s4 1966171168
        %v2541 = vunpack.c.0.s8 %v2540
        %v2542 = vlaneseq
        %v2543 = vshrl.u32 %v2542, 7
        %v2544 = vsub.s32 %v2541, %v2543
        %v2545 = vrot.slane %v2523, %v2544
        %v2547 = vunpack.c.l.s4 1966171168
        %v2548 = vunpack.c.0.s8 %v2547
        %v2549 = vlaneseq
        %v2550 = vshrl.u32 %v2549, 7
        %v2551 = vsub.s32 %v2548, %v2550
        %v2552 = vrot.slane %v2524, %v2551
        %v2553 = vcombine.high %v2531, %v2531
        %v2554 = vcombine.high %v2538, %v2538
        %v2555 = vcombine.high %v2545, %v2545
        %v2556 = vcombine.high %v2552, %v2552
        %v2557 = vcombine.high %v1773, %v1773
        %v2559 = vunpack.c.l.s4 1966171168
        %v2560 = vunpack.c.0.s8 %v2559
        %v2561 = vlaneseq
        %v2562 = vshrl.u32 %v2561, 7
        %v2563 = vsub.s32 %v2560, %v2562
        %v2564 = vrot.slane %v1773, %v2563
        %v2566 = vunpack.c.l.s4 1966171168
        %v2567 = vunpack.c.0.s8 %v2566
        %v2568 = vlaneseq
        %v2569 = vshrl.u32 %v2568, 7
        %v2570 = vsub.s32 %v2567, %v2569
        %v2571 = vrot.slane %v2557, %v2570
        %v2572 = vcombine.high %v2564, %v2564
        %v2573 = vcombine.high %v2571, %v2571
        %v2575 = vunpack.c.l.s4 1966171168
        %v2576 = vunpack.c.0.s8 %v2575
        %v2577 = vlaneseq
        %v2578 = vshrl.u32 %v2577, 7
        %v2579 = vsub.s32 %v2576, %v2578
        %v2580 = vrot.slane %v2564, %v2579
        %v2582 = vunpack.c.l.s4 1966171168
        %v2583 = vunpack.c.0.s8 %v2582
        %v2584 = vlaneseq
        %v2585 = vshrl.u32 %v2584, 7
        %v2586 = vsub.s32 %v2583, %v2585
        %v2587 = vrot.slane %v2571, %v2586
        %v2589 = vunpack.c.l.s4 1966171168
        %v2590 = vunpack.c.0.s8 %v2589
        %v2591 = vlaneseq
        %v2592 = vshrl.u32 %v2591, 7
        %v2593 = vsub.s32 %v2590, %v2592
        %v2594 = vrot.slane %v2572, %v2593
        %v2596 = vunpack.c.l.s4 1966171168
        %v2597 = vunpack.c.0.s8 %v2596
        %v2598 = vlaneseq
        %v2599 = vshrl.u32 %v2598, 7
        %v2600 = vsub.s32 %v2597, %v2599
        %v2601 = vrot.slane %v2573, %v2600
        %v2602 = vcombine.high %v2580, %v2580
        %v2603 = vcombine.high %v2587, %v2587
        %v2604 = vcombine.high %v2594, %v2594
        %v2605 = vcombine.high %v2601, %v2601
        %v2606 = vcombine.high %v1774, %v1774
        %v2608 = vunpack.c.l.s4 1966171168
        %v2609 = vunpack.c.0.s8 %v2608
        %v2610 = vlaneseq
        %v2611 = vshrl.u32 %v2610, 7
        %v2612 = vsub.s32 %v2609, %v2611
        %v2613 = vrot.slane %v1774, %v2612
        %v2615 = vunpack.c.l.s4 1966171168
        %v2616 = vunpack.c.0.s8 %v2615
        %v2617 = vlaneseq
        %v2618 = vshrl.u32 %v2617, 7
        %v2619 = vsub.s32 %v2616, %v2618
        %v2620 = vrot.slane %v2606, %v2619
        %v2621 = vcombine.high %v2613, %v2613
        %v2622 = vcombine.high %v2620, %v2620
        %v2624 = vunpack.c.l.s4 1966171168
        %v2625 = vunpack.c.0.s8 %v2624
        %v2626 = vlaneseq
        %v2627 = vshrl.u32 %v2626, 7
        %v2628 = vsub.s32 %v2625, %v2627
        %v2629 = vrot.slane %v2613, %v2628
        %v2631 = vunpack.c.l.s4 1966171168
        %v2632 = vunpack.c.0.s8 %v2631
        %v2633 = vlaneseq
        %v2634 = vshrl.u32 %v2633, 7
        %v2635 = vsub.s32 %v2632, %v2634
        %v2636 = vrot.slane %v2620, %v2635
        %v2638 = vunpack.c.l.s4 1966171168
        %v2639 = vunpack.c.0.s8 %v2638
        %v2640 = vlaneseq
        %v2641 = vshrl.u32 %v2640, 7
        %v2642 = vsub.s32 %v2639, %v2641
        %v2643 = vrot.slane %v2621, %v2642
        %v2645 = vunpack.c.l.s4 1966171168
        %v2646 = vunpack.c.0.s8 %v2645
        %v2647 = vlaneseq
        %v2648 = vshrl.u32 %v2647, 7
        %v2649 = vsub.s32 %v2646, %v2648
        %v2650 = vrot.slane %v2622, %v2649
        %v2651 = vcombine.high %v2629, %v2629
        %v2652 = vcombine.high %v2636, %v2636
        %v2653 = vcombine.high %v2643, %v2643
        %v2654 = vcombine.high %v2650, %v2650
        %v2655 = vcombine.high %v1775, %v1775
        %v2657 = vunpack.c.l.s4 1966171168
        %v2658 = vunpack.c.0.s8 %v2657
        %v2659 = vlaneseq
        %v2660 = vshrl.u32 %v2659, 7
        %v2661 = vsub.s32 %v2658, %v2660
        %v2662 = vrot.slane %v1775, %v2661
        %v2664 = vunpack.c.l.s4 1966171168
        %v2665 = vunpack.c.0.s8 %v2664
        %v2666 = vlaneseq
        %v2667 = vshrl.u32 %v2666, 7
        %v2668 = vsub.s32 %v2665, %v2667
        %v2669 = vrot.slane %v2655, %v2668
        %v2670 = vcombine.high %v2662, %v2662
        %v2671 = vcombine.high %v2669, %v2669
        %v2673 = vunpack.c.l.s4 1966171168
        %v2674 = vunpack.c.0.s8 %v2673
        %v2675 = vlaneseq
        %v2676 = vshrl.u32 %v2675, 7
        %v2677 = vsub.s32 %v2674, %v2676
        %v2678 = vrot.slane %v2662, %v2677
        %v2680 = vunpack.c.l.s4 1966171168
        %v2681 = vunpack.c.0.s8 %v2680
        %v2682 = vlaneseq
        %v2683 = vshrl.u32 %v2682, 7
        %v2684 = vsub.s32 %v2681, %v2683
        %v2685 = vrot.slane %v2669, %v2684
        %v2687 = vunpack.c.l.s4 1966171168
        %v2688 = vunpack.c.0.s8 %v2687
        %v2689 = vlaneseq
        %v2690 = vshrl.u32 %v2689, 7
        %v2691 = vsub.s32 %v2688, %v2690
        %v2692 = vrot.slane %v2670, %v2691
        %v2694 = vunpack.c.l.s4 1966171168
        %v2695 = vunpack.c.0.s8 %v2694
        %v2696 = vlaneseq
        %v2697 = vshrl.u32 %v2696, 7
        %v2698 = vsub.s32 %v2695, %v2697
        %v2699 = vrot.slane %v2671, %v2698
        %v2700 = vcombine.high %v2678, %v2678
        %v2701 = vcombine.high %v2685, %v2685
        %v2702 = vcombine.high %v2692, %v2692
        %v2703 = vcombine.high %v2699, %v2699
        %v2704 = vcombine.high %v1776, %v1776
        %v2706 = vunpack.c.l.s4 1966171168
        %v2707 = vunpack.c.0.s8 %v2706
        %v2708 = vlaneseq
        %v2709 = vshrl.u32 %v2708, 7
        %v2710 = vsub.s32 %v2707, %v2709
        %v2711 = vrot.slane %v1776, %v2710
        %v2713 = vunpack.c.l.s4 1966171168
        %v2714 = vunpack.c.0.s8 %v2713
        %v2715 = vlaneseq
        %v2716 = vshrl.u32 %v2715, 7
        %v2717 = vsub.s32 %v2714, %v2716
        %v2718 = vrot.slane %v2704, %v2717
        %v2719 = vcombine.high %v2711, %v2711
        %v2720 = vcombine.high %v2718, %v2718
        %v2722 = vunpack.c.l.s4 1966171168
        %v2723 = vunpack.c.0.s8 %v2722
        %v2724 = vlaneseq
        %v2725 = vshrl.u32 %v2724, 7
        %v2726 = vsub.s32 %v2723, %v2725
        %v2727 = vrot.slane %v2711, %v2726
        %v2729 = vunpack.c.l.s4 1966171168
        %v2730 = vunpack.c.0.s8 %v2729
        %v2731 = vlaneseq
        %v2732 = vshrl.u32 %v2731, 7
        %v2733 = vsub.s32 %v2730, %v2732
        %v2734 = vrot.slane %v2718, %v2733
        %v2736 = vunpack.c.l.s4 1966171168
        %v2737 = vunpack.c.0.s8 %v2736
        %v2738 = vlaneseq
        %v2739 = vshrl.u32 %v2738, 7
        %v2740 = vsub.s32 %v2737, %v2739
        %v2741 = vrot.slane %v2719, %v2740
        %v2743 = vunpack.c.l.s4 1966171168
        %v2744 = vunpack.c.0.s8 %v2743
        %v2745 = vlaneseq
        %v2746 = vshrl.u32 %v2745, 7
        %v2747 = vsub.s32 %v2744, %v2746
        %v2748 = vrot.slane %v2720, %v2747
        %v2749 = vcombine.high %v2727, %v2727
        %v2750 = vcombine.high %v2734, %v2734
        %v2751 = vcombine.high %v2741, %v2741
        %v2752 = vcombine.high %v2748, %v2748
        %v2753 = vcombine.high %v1777, %v1777
        %v2755 = vunpack.c.l.s4 1966171168
        %v2756 = vunpack.c.0.s8 %v2755
        %v2757 = vlaneseq
        %v2758 = vshrl.u32 %v2757, 7
        %v2759 = vsub.s32 %v2756, %v2758
        %v2760 = vrot.slane %v1777, %v2759
        %v2762 = vunpack.c.l.s4 1966171168
        %v2763 = vunpack.c.0.s8 %v2762
        %v2764 = vlaneseq
        %v2765 = vshrl.u32 %v2764, 7
        %v2766 = vsub.s32 %v2763, %v2765
        %v2767 = vrot.slane %v2753, %v2766
        %v2768 = vcombine.high %v2760, %v2760
        %v2769 = vcombine.high %v2767, %v2767
        %v2771 = vunpack.c.l.s4 1966171168
        %v2772 = vunpack.c.0.s8 %v2771
        %v2773 = vlaneseq
        %v2774 = vshrl.u32 %v2773, 7
        %v2775 = vsub.s32 %v2772, %v2774
        %v2776 = vrot.slane %v2760, %v2775
        %v2778 = vunpack.c.l.s4 1966171168
        %v2779 = vunpack.c.0.s8 %v2778
        %v2780 = vlaneseq
        %v2781 = vshrl.u32 %v2780, 7
        %v2782 = vsub.s32 %v2779, %v2781
        %v2783 = vrot.slane %v2767, %v2782
        %v2785 = vunpack.c.l.s4 1966171168
        %v2786 = vunpack.c.0.s8 %v2785
        %v2787 = vlaneseq
        %v2788 = vshrl.u32 %v2787, 7
        %v2789 = vsub.s32 %v2786, %v2788
        %v2790 = vrot.slane %v2768, %v2789
        %v2792 = vunpack.c.l.s4 1966171168
        %v2793 = vunpack.c.0.s8 %v2792
        %v2794 = vlaneseq
        %v2795 = vshrl.u32 %v2794, 7
        %v2796 = vsub.s32 %v2793, %v2795
        %v2797 = vrot.slane %v2769, %v2796
        %v2798 = vcombine.high %v2776, %v2776
        %v2799 = vcombine.high %v2783, %v2783
        %v2800 = vcombine.high %v2790, %v2790
        %v2801 = vcombine.high %v2797, %v2797
        %v2802 = vcombine.high %v1778, %v1778
        %v2804 = vunpack.c.l.s4 1966171168
        %v2805 = vunpack.c.0.s8 %v2804
        %v2806 = vlaneseq
        %v2807 = vshrl.u32 %v2806, 7
        %v2808 = vsub.s32 %v2805, %v2807
        %v2809 = vrot.slane %v1778, %v2808
        %v2811 = vunpack.c.l.s4 1966171168
        %v2812 = vunpack.c.0.s8 %v2811
        %v2813 = vlaneseq
        %v2814 = vshrl.u32 %v2813, 7
        %v2815 = vsub.s32 %v2812, %v2814
        %v2816 = vrot.slane %v2802, %v2815
        %v2817 = vcombine.high %v2809, %v2809
        %v2818 = vcombine.high %v2816, %v2816
        %v2820 = vunpack.c.l.s4 1966171168
        %v2821 = vunpack.c.0.s8 %v2820
        %v2822 = vlaneseq
        %v2823 = vshrl.u32 %v2822, 7
        %v2824 = vsub.s32 %v2821, %v2823
        %v2825 = vrot.slane %v2809, %v2824
        %v2827 = vunpack.c.l.s4 1966171168
        %v2828 = vunpack.c.0.s8 %v2827
        %v2829 = vlaneseq
        %v2830 = vshrl.u32 %v2829, 7
        %v2831 = vsub.s32 %v2828, %v2830
        %v2832 = vrot.slane %v2816, %v2831
        %v2834 = vunpack.c.l.s4 1966171168
        %v2835 = vunpack.c.0.s8 %v2834
        %v2836 = vlaneseq
        %v2837 = vshrl.u32 %v2836, 7
        %v2838 = vsub.s32 %v2835, %v2837
        %v2839 = vrot.slane %v2817, %v2838
        %v2841 = vunpack.c.l.s4 1966171168
        %v2842 = vunpack.c.0.s8 %v2841
        %v2843 = vlaneseq
        %v2844 = vshrl.u32 %v2843, 7
        %v2845 = vsub.s32 %v2842, %v2844
        %v2846 = vrot.slane %v2818, %v2845
        %v2847 = vcombine.high %v2825, %v2825
        %v2848 = vcombine.high %v2832, %v2832
        %v2849 = vcombine.high %v2839, %v2839
        %v2850 = vcombine.high %v2846, %v2846
        %v2851 = vcombine.high %v1779, %v1779
        %v2853 = vunpack.c.l.s4 1966171168
        %v2854 = vunpack.c.0.s8 %v2853
        %v2855 = vlaneseq
        %v2856 = vshrl.u32 %v2855, 7
        %v2857 = vsub.s32 %v2854, %v2856
        %v2858 = vrot.slane %v1779, %v2857
        %v2860 = vunpack.c.l.s4 1966171168
        %v2861 = vunpack.c.0.s8 %v2860
        %v2862 = vlaneseq
        %v2863 = vshrl.u32 %v2862, 7
        %v2864 = vsub.s32 %v2861, %v2863
        %v2865 = vrot.slane %v2851, %v2864
        %v2866 = vcombine.high %v2858, %v2858
        %v2867 = vcombine.high %v2865, %v2865
        %v2869 = vunpack.c.l.s4 1966171168
        %v2870 = vunpack.c.0.s8 %v2869
        %v2871 = vlaneseq
        %v2872 = vshrl.u32 %v2871, 7
        %v2873 = vsub.s32 %v2870, %v2872
        %v2874 = vrot.slane %v2858, %v2873
        %v2876 = vunpack.c.l.s4 1966171168
        %v2877 = vunpack.c.0.s8 %v2876
        %v2878 = vlaneseq
        %v2879 = vshrl.u32 %v2878, 7
        %v2880 = vsub.s32 %v2877, %v2879
        %v2881 = vrot.slane %v2865, %v2880
        %v2883 = vunpack.c.l.s4 1966171168
        %v2884 = vunpack.c.0.s8 %v2883
        %v2885 = vlaneseq
        %v2886 = vshrl.u32 %v2885, 7
        %v2887 = vsub.s32 %v2884, %v2886
        %v2888 = vrot.slane %v2866, %v2887
        %v2890 = vunpack.c.l.s4 1966171168
        %v2891 = vunpack.c.0.s8 %v2890
        %v2892 = vlaneseq
        %v2893 = vshrl.u32 %v2892, 7
        %v2894 = vsub.s32 %v2891, %v2893
        %v2895 = vrot.slane %v2867, %v2894
        %v2896 = vcombine.high %v2874, %v2874
        %v2897 = vcombine.high %v2881, %v2881
        %v2898 = vcombine.high %v2888, %v2888
        %v2899 = vcombine.high %v2895, %v2895
        %v2900 = vcombine.high %v1780, %v1780
        %v2902 = vunpack.c.l.s4 1966171168
        %v2903 = vunpack.c.0.s8 %v2902
        %v2904 = vlaneseq
        %v2905 = vshrl.u32 %v2904, 7
        %v2906 = vsub.s32 %v2903, %v2905
        %v2907 = vrot.slane %v1780, %v2906
        %v2909 = vunpack.c.l.s4 1966171168
        %v2910 = vunpack.c.0.s8 %v2909
        %v2911 = vlaneseq
        %v2912 = vshrl.u32 %v2911, 7
        %v2913 = vsub.s32 %v2910, %v2912
        %v2914 = vrot.slane %v2900, %v2913
        %v2915 = vcombine.high %v2907, %v2907
        %v2916 = vcombine.high %v2914, %v2914
        %v2918 = vunpack.c.l.s4 1966171168
        %v2919 = vunpack.c.0.s8 %v2918
        %v2920 = vlaneseq
        %v2921 = vshrl.u32 %v2920, 7
        %v2922 = vsub.s32 %v2919, %v2921
        %v2923 = vrot.slane %v2907, %v2922
        %v2925 = vunpack.c.l.s4 1966171168
        %v2926 = vunpack.c.0.s8 %v2925
        %v2927 = vlaneseq
        %v2928 = vshrl.u32 %v2927, 7
        %v2929 = vsub.s32 %v2926, %v2928
        %v2930 = vrot.slane %v2914, %v2929
        %v2932 = vunpack.c.l.s4 1966171168
        %v2933 = vunpack.c.0.s8 %v2932
        %v2934 = vlaneseq
        %v2935 = vshrl.u32 %v2934, 7
        %v2936 = vsub.s32 %v2933, %v2935
        %v2937 = vrot.slane %v2915, %v2936
        %v2939 = vunpack.c.l.s4 1966171168
        %v2940 = vunpack.c.0.s8 %v2939
        %v2941 = vlaneseq
        %v2942 = vshrl.u32 %v2941, 7
        %v2943 = vsub.s32 %v2940, %v2942
        %v2944 = vrot.slane %v2916, %v2943
        %v2945 = vcombine.high %v2923, %v2923
        %v2946 = vcombine.high %v2930, %v2930
        %v2947 = vcombine.high %v2937, %v2937
        %v2948 = vcombine.high %v2944, %v2944
        %v2949 = vcombine.high %v1781, %v1781
        %v2951 = vunpack.c.l.s4 1966171168
        %v2952 = vunpack.c.0.s8 %v2951
        %v2953 = vlaneseq
        %v2954 = vshrl.u32 %v2953, 7
        %v2955 = vsub.s32 %v2952, %v2954
        %v2956 = vrot.slane %v1781, %v2955
        %v2958 = vunpack.c.l.s4 1966171168
        %v2959 = vunpack.c.0.s8 %v2958
        %v2960 = vlaneseq
        %v2961 = vshrl.u32 %v2960, 7
        %v2962 = vsub.s32 %v2959, %v2961
        %v2963 = vrot.slane %v2949, %v2962
        %v2964 = vcombine.high %v2956, %v2956
        %v2965 = vcombine.high %v2963, %v2963
        %v2967 = vunpack.c.l.s4 1966171168
        %v2968 = vunpack.c.0.s8 %v2967
        %v2969 = vlaneseq
        %v2970 = vshrl.u32 %v2969, 7
        %v2971 = vsub.s32 %v2968, %v2970
        %v2972 = vrot.slane %v2956, %v2971
        %v2974 = vunpack.c.l.s4 1966171168
        %v2975 = vunpack.c.0.s8 %v2974
        %v2976 = vlaneseq
        %v2977 = vshrl.u32 %v2976, 7
        %v2978 = vsub.s32 %v2975, %v2977
        %v2979 = vrot.slane %v2963, %v2978
        %v2981 = vunpack.c.l.s4 1966171168
        %v2982 = vunpack.c.0.s8 %v2981
        %v2983 = vlaneseq
        %v2984 = vshrl.u32 %v2983, 7
        %v2985 = vsub.s32 %v2982, %v2984
        %v2986 = vrot.slane %v2964, %v2985
        %v2988 = vunpack.c.l.s4 1966171168
        %v2989 = vunpack.c.0.s8 %v2988
        %v2990 = vlaneseq
        %v2991 = vshrl.u32 %v2990, 7
        %v2992 = vsub.s32 %v2989, %v2991
        %v2993 = vrot.slane %v2965, %v2992
        %v2994 = vcombine.high %v2972, %v2972
        %v2995 = vcombine.high %v2979, %v2979
        %v2996 = vcombine.high %v2986, %v2986
        %v2997 = vcombine.high %v2993, %v2993
        %v2998 = vcombine.high %v1782, %v1782
        %v3000 = vunpack.c.l.s4 1966171168
        %v3001 = vunpack.c.0.s8 %v3000
        %v3002 = vlaneseq
        %v3003 = vshrl.u32 %v3002, 7
        %v3004 = vsub.s32 %v3001, %v3003
        %v3005 = vrot.slane %v1782, %v3004
        %v3007 = vunpack.c.l.s4 1966171168
        %v3008 = vunpack.c.0.s8 %v3007
        %v3009 = vlaneseq
        %v3010 = vshrl.u32 %v3009, 7
        %v3011 = vsub.s32 %v3008, %v3010
        %v3012 = vrot.slane %v2998, %v3011
        %v3013 = vcombine.high %v3005, %v3005
        %v3014 = vcombine.high %v3012, %v3012
        %v3016 = vunpack.c.l.s4 1966171168
        %v3017 = vunpack.c.0.s8 %v3016
        %v3018 = vlaneseq
        %v3019 = vshrl.u32 %v3018, 7
        %v3020 = vsub.s32 %v3017, %v3019
        %v3021 = vrot.slane %v3005, %v3020
        %v3023 = vunpack.c.l.s4 1966171168
        %v3024 = vunpack.c.0.s8 %v3023
        %v3025 = vlaneseq
        %v3026 = vshrl.u32 %v3025, 7
        %v3027 = vsub.s32 %v3024, %v3026
        %v3028 = vrot.slane %v3012, %v3027
        %v3030 = vunpack.c.l.s4 1966171168
        %v3031 = vunpack.c.0.s8 %v3030
        %v3032 = vlaneseq
        %v3033 = vshrl.u32 %v3032, 7
        %v3034 = vsub.s32 %v3031, %v3033
        %v3035 = vrot.slane %v3013, %v3034
        %v3037 = vunpack.c.l.s4 1966171168
        %v3038 = vunpack.c.0.s8 %v3037
        %v3039 = vlaneseq
        %v3040 = vshrl.u32 %v3039, 7
        %v3041 = vsub.s32 %v3038, %v3040
        %v3042 = vrot.slane %v3014, %v3041
        %v3043 = vcombine.high %v3021, %v3021
        %v3044 = vcombine.high %v3028, %v3028
        %v3045 = vcombine.high %v3035, %v3035
        %v3046 = vcombine.high %v3042, %v3042
        %v3047 = vcombine.high %v1783, %v1783
        %v3049 = vunpack.c.l.s4 1966171168
        %v3050 = vunpack.c.0.s8 %v3049
        %v3051 = vlaneseq
        %v3052 = vshrl.u32 %v3051, 7
        %v3053 = vsub.s32 %v3050, %v3052
        %v3054 = vrot.slane %v1783, %v3053
        %v3056 = vunpack.c.l.s4 1966171168
        %v3057 = vunpack.c.0.s8 %v3056
        %v3058 = vlaneseq
        %v3059 = vshrl.u32 %v3058, 7
        %v3060 = vsub.s32 %v3057, %v3059
        %v3061 = vrot.slane %v3047, %v3060
        %v3062 = vcombine.high %v3054, %v3054
        %v3063 = vcombine.high %v3061, %v3061
        %v3065 = vunpack.c.l.s4 1966171168
        %v3066 = vunpack.c.0.s8 %v3065
        %v3067 = vlaneseq
        %v3068 = vshrl.u32 %v3067, 7
        %v3069 = vsub.s32 %v3066, %v3068
        %v3070 = vrot.slane %v3054, %v3069
        %v3072 = vunpack.c.l.s4 1966171168
        %v3073 = vunpack.c.0.s8 %v3072
        %v3074 = vlaneseq
        %v3075 = vshrl.u32 %v3074, 7
        %v3076 = vsub.s32 %v3073, %v3075
        %v3077 = vrot.slane %v3061, %v3076
        %v3079 = vunpack.c.l.s4 1966171168
        %v3080 = vunpack.c.0.s8 %v3079
        %v3081 = vlaneseq
        %v3082 = vshrl.u32 %v3081, 7
        %v3083 = vsub.s32 %v3080, %v3082
        %v3084 = vrot.slane %v3062, %v3083
        %v3086 = vunpack.c.l.s4 1966171168
        %v3087 = vunpack.c.0.s8 %v3086
        %v3088 = vlaneseq
        %v3089 = vshrl.u32 %v3088, 7
        %v3090 = vsub.s32 %v3087, %v3089
        %v3091 = vrot.slane %v3063, %v3090
        %v3092 = vcombine.high %v3070, %v3070
        %v3093 = vcombine.high %v3077, %v3077
        %v3094 = vcombine.high %v3084, %v3084
        %v3095 = vcombine.high %v3091, %v3091
        %v3096 = vcombine.high %v1784, %v1784
        %v3098 = vunpack.c.l.s4 1966171168
        %v3099 = vunpack.c.0.s8 %v3098
        %v3100 = vlaneseq
        %v3101 = vshrl.u32 %v3100, 7
        %v3102 = vsub.s32 %v3099, %v3101
        %v3103 = vrot.slane %v1784, %v3102
        %v3105 = vunpack.c.l.s4 1966171168
        %v3106 = vunpack.c.0.s8 %v3105
        %v3107 = vlaneseq
        %v3108 = vshrl.u32 %v3107, 7
        %v3109 = vsub.s32 %v3106, %v3108
        %v3110 = vrot.slane %v3096, %v3109
        %v3111 = vcombine.high %v3103, %v3103
        %v3112 = vcombine.high %v3110, %v3110
        %v3114 = vunpack.c.l.s4 1966171168
        %v3115 = vunpack.c.0.s8 %v3114
        %v3116 = vlaneseq
        %v3117 = vshrl.u32 %v3116, 7
        %v3118 = vsub.s32 %v3115, %v3117
        %v3119 = vrot.slane %v3103, %v3118
        %v3121 = vunpack.c.l.s4 1966171168
        %v3122 = vunpack.c.0.s8 %v3121
        %v3123 = vlaneseq
        %v3124 = vshrl.u32 %v3123, 7
        %v3125 = vsub.s32 %v3122, %v3124
        %v3126 = vrot.slane %v3110, %v3125
        %v3128 = vunpack.c.l.s4 1966171168
        %v3129 = vunpack.c.0.s8 %v3128
        %v3130 = vlaneseq
        %v3131 = vshrl.u32 %v3130, 7
        %v3132 = vsub.s32 %v3129, %v3131
        %v3133 = vrot.slane %v3111, %v3132
        %v3135 = vunpack.c.l.s4 1966171168
        %v3136 = vunpack.c.0.s8 %v3135
        %v3137 = vlaneseq
        %v3138 = vshrl.u32 %v3137, 7
        %v3139 = vsub.s32 %v3136, %v3138
        %v3140 = vrot.slane %v3112, %v3139
        %v3141 = vcombine.high %v3119, %v3119
        %v3142 = vcombine.high %v3126, %v3126
        %v3143 = vcombine.high %v3133, %v3133
        %v3144 = vcombine.high %v3140, %v3140
        %v3145 = vcombine.high %v1785, %v1785
        %v3147 = vunpack.c.l.s4 1966171168
        %v3148 = vunpack.c.0.s8 %v3147
        %v3149 = vlaneseq
        %v3150 = vshrl.u32 %v3149, 7
        %v3151 = vsub.s32 %v3148, %v3150
        %v3152 = vrot.slane %v1785, %v3151
        %v3154 = vunpack.c.l.s4 1966171168
        %v3155 = vunpack.c.0.s8 %v3154
        %v3156 = vlaneseq
        %v3157 = vshrl.u32 %v3156, 7
        %v3158 = vsub.s32 %v3155, %v3157
        %v3159 = vrot.slane %v3145, %v3158
        %v3160 = vcombine.high %v3152, %v3152
        %v3161 = vcombine.high %v3159, %v3159
        %v3163 = vunpack.c.l.s4 1966171168
        %v3164 = vunpack.c.0.s8 %v3163
        %v3165 = vlaneseq
        %v3166 = vshrl.u32 %v3165, 7
        %v3167 = vsub.s32 %v3164, %v3166
        %v3168 = vrot.slane %v3152, %v3167
        %v3170 = vunpack.c.l.s4 1966171168
        %v3171 = vunpack.c.0.s8 %v3170
        %v3172 = vlaneseq
        %v3173 = vshrl.u32 %v3172, 7
        %v3174 = vsub.s32 %v3171, %v3173
        %v3175 = vrot.slane %v3159, %v3174
        %v3177 = vunpack.c.l.s4 1966171168
        %v3178 = vunpack.c.0.s8 %v3177
        %v3179 = vlaneseq
        %v3180 = vshrl.u32 %v3179, 7
        %v3181 = vsub.s32 %v3178, %v3180
        %v3182 = vrot.slane %v3160, %v3181
        %v3184 = vunpack.c.l.s4 1966171168
        %v3185 = vunpack.c.0.s8 %v3184
        %v3186 = vlaneseq
        %v3187 = vshrl.u32 %v3186, 7
        %v3188 = vsub.s32 %v3185, %v3187
        %v3189 = vrot.slane %v3161, %v3188
        %v3190 = vcombine.high %v3168, %v3168
        %v3191 = vcombine.high %v3175, %v3175
        %v3192 = vcombine.high %v3182, %v3182
        %v3193 = vcombine.high %v3189, %v3189
        %v3194 = vcombine.high %v1786, %v1786
        %v3196 = vunpack.c.l.s4 1966171168
        %v3197 = vunpack.c.0.s8 %v3196
        %v3198 = vlaneseq
        %v3199 = vshrl.u32 %v3198, 7
        %v3200 = vsub.s32 %v3197, %v3199
        %v3201 = vrot.slane %v1786, %v3200
        %v3203 = vunpack.c.l.s4 1966171168
        %v3204 = vunpack.c.0.s8 %v3203
        %v3205 = vlaneseq
        %v3206 = vshrl.u32 %v3205, 7
        %v3207 = vsub.s32 %v3204, %v3206
        %v3208 = vrot.slane %v3194, %v3207
        %v3209 = vcombine.high %v3201, %v3201
        %v3210 = vcombine.high %v3208, %v3208
        %v3212 = vunpack.c.l.s4 1966171168
        %v3213 = vunpack.c.0.s8 %v3212
        %v3214 = vlaneseq
        %v3215 = vshrl.u32 %v3214, 7
        %v3216 = vsub.s32 %v3213, %v3215
        %v3217 = vrot.slane %v3201, %v3216
        %v3219 = vunpack.c.l.s4 1966171168
        %v3220 = vunpack.c.0.s8 %v3219
        %v3221 = vlaneseq
        %v3222 = vshrl.u32 %v3221, 7
        %v3223 = vsub.s32 %v3220, %v3222
        %v3224 = vrot.slane %v3208, %v3223
        %v3226 = vunpack.c.l.s4 1966171168
        %v3227 = vunpack.c.0.s8 %v3226
        %v3228 = vlaneseq
        %v3229 = vshrl.u32 %v3228, 7
        %v3230 = vsub.s32 %v3227, %v3229
        %v3231 = vrot.slane %v3209, %v3230
        %v3233 = vunpack.c.l.s4 1966171168
        %v3234 = vunpack.c.0.s8 %v3233
        %v3235 = vlaneseq
        %v3236 = vshrl.u32 %v3235, 7
        %v3237 = vsub.s32 %v3234, %v3236
        %v3238 = vrot.slane %v3210, %v3237
        %v3239 = vcombine.high %v3217, %v3217
        %v3240 = vcombine.high %v3224, %v3224
        %v3241 = vcombine.high %v3231, %v3231
        %v3242 = vcombine.high %v3238, %v3238
        %v3243 = vcombine.high %v1787, %v1787
        %v3245 = vunpack.c.l.s4 1966171168
        %v3246 = vunpack.c.0.s8 %v3245
        %v3247 = vlaneseq
        %v3248 = vshrl.u32 %v3247, 7
        %v3249 = vsub.s32 %v3246, %v3248
        %v3250 = vrot.slane %v1787, %v3249
        %v3252 = vunpack.c.l.s4 1966171168
        %v3253 = vunpack.c.0.s8 %v3252
        %v3254 = vlaneseq
        %v3255 = vshrl.u32 %v3254, 7
        %v3256 = vsub.s32 %v3253, %v3255
        %v3257 = vrot.slane %v3243, %v3256
        %v3258 = vcombine.high %v3250, %v3250
        %v3259 = vcombine.high %v3257, %v3257
        %v3261 = vunpack.c.l.s4 1966171168
        %v3262 = vunpack.c.0.s8 %v3261
        %v3263 = vlaneseq
        %v3264 = vshrl.u32 %v3263, 7
        %v3265 = vsub.s32 %v3262, %v3264
        %v3266 = vrot.slane %v3250, %v3265
        %v3268 = vunpack.c.l.s4 1966171168
        %v3269 = vunpack.c.0.s8 %v3268
        %v3270 = vlaneseq
        %v3271 = vshrl.u32 %v3270, 7
        %v3272 = vsub.s32 %v3269, %v3271
        %v3273 = vrot.slane %v3257, %v3272
        %v3275 = vunpack.c.l.s4 1966171168
        %v3276 = vunpack.c.0.s8 %v3275
        %v3277 = vlaneseq
        %v3278 = vshrl.u32 %v3277, 7
        %v3279 = vsub.s32 %v3276, %v3278
        %v3280 = vrot.slane %v3258, %v3279
        %v3282 = vunpack.c.l.s4 1966171168
        %v3283 = vunpack.c.0.s8 %v3282
        %v3284 = vlaneseq
        %v3285 = vshrl.u32 %v3284, 7
        %v3286 = vsub.s32 %v3283, %v3285
        %v3287 = vrot.slane %v3259, %v3286
        %v3288 = vcombine.high %v3266, %v3266
        %v3289 = vcombine.high %v3273, %v3273
        %v3290 = vcombine.high %v3280, %v3280
        %v3291 = vcombine.high %v3287, %v3287
        %v3292 = vcombine.high %v1788, %v1788
        %v3294 = vunpack.c.l.s4 1966171168
        %v3295 = vunpack.c.0.s8 %v3294
        %v3296 = vlaneseq
        %v3297 = vshrl.u32 %v3296, 7
        %v3298 = vsub.s32 %v3295, %v3297
        %v3299 = vrot.slane %v1788, %v3298
        %v3301 = vunpack.c.l.s4 1966171168
        %v3302 = vunpack.c.0.s8 %v3301
        %v3303 = vlaneseq
        %v3304 = vshrl.u32 %v3303, 7
        %v3305 = vsub.s32 %v3302, %v3304
        %v3306 = vrot.slane %v3292, %v3305
        %v3307 = vcombine.high %v3299, %v3299
        %v3308 = vcombine.high %v3306, %v3306
        %v3310 = vunpack.c.l.s4 1966171168
        %v3311 = vunpack.c.0.s8 %v3310
        %v3312 = vlaneseq
        %v3313 = vshrl.u32 %v3312, 7
        %v3314 = vsub.s32 %v3311, %v3313
        %v3315 = vrot.slane %v3299, %v3314
        %v3317 = vunpack.c.l.s4 1966171168
        %v3318 = vunpack.c.0.s8 %v3317
        %v3319 = vlaneseq
        %v3320 = vshrl.u32 %v3319, 7
        %v3321 = vsub.s32 %v3318, %v3320
        %v3322 = vrot.slane %v3306, %v3321
        %v3324 = vunpack.c.l.s4 1966171168
        %v3325 = vunpack.c.0.s8 %v3324
        %v3326 = vlaneseq
        %v3327 = vshrl.u32 %v3326, 7
        %v3328 = vsub.s32 %v3325, %v3327
        %v3329 = vrot.slane %v3307, %v3328
        %v3331 = vunpack.c.l.s4 1966171168
        %v3332 = vunpack.c.0.s8 %v3331
        %v3333 = vlaneseq
        %v3334 = vshrl.u32 %v3333, 7
        %v3335 = vsub.s32 %v3332, %v3334
        %v3336 = vrot.slane %v3308, %v3335
        %v3337 = vcombine.high %v3315, %v3315
        %v3338 = vcombine.high %v3322, %v3322
        %v3339 = vcombine.high %v3329, %v3329
        %v3340 = vcombine.high %v3336, %v3336
        %v3341 = vcombine.high %v1789, %v1789
        %v3343 = vunpack.c.l.s4 1966171168
        %v3344 = vunpack.c.0.s8 %v3343
        %v3345 = vlaneseq
        %v3346 = vshrl.u32 %v3345, 7
        %v3347 = vsub.s32 %v3344, %v3346
        %v3348 = vrot.slane %v1789, %v3347
        %v3350 = vunpack.c.l.s4 1966171168
        %v3351 = vunpack.c.0.s8 %v3350
        %v3352 = vlaneseq
        %v3353 = vshrl.u32 %v3352, 7
        %v3354 = vsub.s32 %v3351, %v3353
        %v3355 = vrot.slane %v3341, %v3354
        %v3356 = vcombine.high %v3348, %v3348
        %v3357 = vcombine.high %v3355, %v3355
        %v3359 = vunpack.c.l.s4 1966171168
        %v3360 = vunpack.c.0.s8 %v3359
        %v3361 = vlaneseq
        %v3362 = vshrl.u32 %v3361, 7
        %v3363 = vsub.s32 %v3360, %v3362
        %v3364 = vrot.slane %v3348, %v3363
        %v3366 = vunpack.c.l.s4 1966171168
        %v3367 = vunpack.c.0.s8 %v3366
        %v3368 = vlaneseq
        %v3369 = vshrl.u32 %v3368, 7
        %v3370 = vsub.s32 %v3367, %v3369
        %v3371 = vrot.slane %v3355, %v3370
        %v3373 = vunpack.c.l.s4 1966171168
        %v3374 = vunpack.c.0.s8 %v3373
        %v3375 = vlaneseq
        %v3376 = vshrl.u32 %v3375, 7
        %v3377 = vsub.s32 %v3374, %v3376
        %v3378 = vrot.slane %v3356, %v3377
        %v3380 = vunpack.c.l.s4 1966171168
        %v3381 = vunpack.c.0.s8 %v3380
        %v3382 = vlaneseq
        %v3383 = vshrl.u32 %v3382, 7
        %v3384 = vsub.s32 %v3381, %v3383
        %v3385 = vrot.slane %v3357, %v3384
        %v3386 = vcombine.high %v3364, %v3364
        %v3387 = vcombine.high %v3371, %v3371
        %v3388 = vcombine.high %v3378, %v3378
        %v3389 = vcombine.high %v3385, %v3385
        %v3390 = vcombine.low %v1845, %v1859
        %v3391 = vcombine.low %v1867, %v1869
        %v3392 = vcombine.low %v1852, %v1866
        %v3393 = vcombine.low %v1868, %v1870
        %v3395 = vunpack.c.l.s4 1966171168
        %v3396 = vunpack.c.0.s8 %v3395
        %v3397 = vlaneseq
        %v3398 = vshrl.u32 %v3397, 7
        %v3399 = vsub.s32 %v3396, %v3398
        %v3400 = vrot.slane %v3390, %v3399
        %v3402 = vunpack.c.l.s4 1966171168
        %v3403 = vunpack.c.0.s8 %v3402
        %v3404 = vlaneseq
        %v3405 = vshrl.u32 %v3404, 7
        %v3406 = vsub.s32 %v3403, %v3405
        %v3407 = vrot.slane %v3391, %v3406
        %v3409 = vunpack.c.l.s4 1966171168
        %v3410 = vunpack.c.0.s8 %v3409
        %v3411 = vlaneseq
        %v3412 = vshrl.u32 %v3411, 7
        %v3413 = vsub.s32 %v3410, %v3412
        %v3414 = vrot.slane %v3392, %v3413
        %v3416 = vunpack.c.l.s4 1966171168
        %v3417 = vunpack.c.0.s8 %v3416
        %v3418 = vlaneseq
        %v3419 = vshrl.u32 %v3418, 7
        %v3420 = vsub.s32 %v3417, %v3419
        %v3421 = vrot.slane %v3393, %v3420
        %v3422 = vcombine.low %v3400, %v3407
        %v3423 = vcombine.low %v3414, %v3421
        %v3425 = vunpack.c.l.s4 1966171168
        %v3426 = vunpack.c.0.s8 %v3425
        %v3427 = vlaneseq
        %v3428 = vshrl.u32 %v3427, 7
        %v3429 = vsub.s32 %v3426, %v3428
        %v3430 = vrot.slane %v3422, %v3429
        %v3432 = vunpack.c.l.s4 1966171168
        %v3433 = vunpack.c.0.s8 %v3432
        %v3434 = vlaneseq
        %v3435 = vshrl.u32 %v3434, 7
        %v3436 = vsub.s32 %v3433, %v3435
        %v3437 = vrot.slane %v3423, %v3436
        %v3438 = vcombine.low %v3430, %v3437
        %v3439 = vcombine.low %v1894, %v1908
        %v3440 = vcombine.low %v1916, %v1918
        %v3441 = vcombine.low %v1901, %v1915
        %v3442 = vcombine.low %v1917, %v1919
        %v3444 = vunpack.c.l.s4 1966171168
        %v3445 = vunpack.c.0.s8 %v3444
        %v3446 = vlaneseq
        %v3447 = vshrl.u32 %v3446, 7
        %v3448 = vsub.s32 %v3445, %v3447
        %v3449 = vrot.slane %v3439, %v3448
        %v3451 = vunpack.c.l.s4 1966171168
        %v3452 = vunpack.c.0.s8 %v3451
        %v3453 = vlaneseq
        %v3454 = vshrl.u32 %v3453, 7
        %v3455 = vsub.s32 %v3452, %v3454
        %v3456 = vrot.slane %v3440, %v3455
        %v3458 = vunpack.c.l.s4 1966171168
        %v3459 = vunpack.c.0.s8 %v3458
        %v3460 = vlaneseq
        %v3461 = vshrl.u32 %v3460, 7
        %v3462 = vsub.s32 %v3459, %v3461
        %v3463 = vrot.slane %v3441, %v3462
        %v3465 = vunpack.c.l.s4 1966171168
        %v3466 = vunpack.c.0.s8 %v3465
        %v3467 = vlaneseq
        %v3468 = vshrl.u32 %v3467, 7
        %v3469 = vsub.s32 %v3466, %v3468
        %v3470 = vrot.slane %v3442, %v3469
        %v3471 = vcombine.low %v3449, %v3456
        %v3472 = vcombine.low %v3463, %v3470
        %v3474 = vunpack.c.l.s4 1966171168
        %v3475 = vunpack.c.0.s8 %v3474
        %v3476 = vlaneseq
        %v3477 = vshrl.u32 %v3476, 7
        %v3478 = vsub.s32 %v3475, %v3477
        %v3479 = vrot.slane %v3471, %v3478
        %v3481 = vunpack.c.l.s4 1966171168
        %v3482 = vunpack.c.0.s8 %v3481
        %v3483 = vlaneseq
        %v3484 = vshrl.u32 %v3483, 7
        %v3485 = vsub.s32 %v3482, %v3484
        %v3486 = vrot.slane %v3472, %v3485
        %v3487 = vcombine.low %v3479, %v3486
        %v3488 = vcombine.low %v1943, %v1957
        %v3489 = vcombine.low %v1965, %v1967
        %v3490 = vcombine.low %v1950, %v1964
        %v3491 = vcombine.low %v1966, %v1968
        %v3493 = vunpack.c.l.s4 1966171168
        %v3494 = vunpack.c.0.s8 %v3493
        %v3495 = vlaneseq
        %v3496 = vshrl.u32 %v3495, 7
        %v3497 = vsub.s32 %v3494, %v3496
        %v3498 = vrot.slane %v3488, %v3497
        %v3500 = vunpack.c.l.s4 1966171168
        %v3501 = vunpack.c.0.s8 %v3500
        %v3502 = vlaneseq
        %v3503 = vshrl.u32 %v3502, 7
        %v3504 = vsub.s32 %v3501, %v3503
        %v3505 = vrot.slane %v3489, %v3504
        %v3507 = vunpack.c.l.s4 1966171168
        %v3508 = vunpack.c.0.s8 %v3507
        %v3509 = vlaneseq
        %v3510 = vshrl.u32 %v3509, 7
        %v3511 = vsub.s32 %v3508, %v3510
        %v3512 = vrot.slane %v3490, %v3511
        %v3514 = vunpack.c.l.s4 1966171168
        %v3515 = vunpack.c.0.s8 %v3514
        %v3516 = vlaneseq
        %v3517 = vshrl.u32 %v3516, 7
        %v3518 = vsub.s32 %v3515, %v3517
        %v3519 = vrot.slane %v3491, %v3518
        %v3520 = vcombine.low %v3498, %v3505
        %v3521 = vcombine.low %v3512, %v3519
        %v3523 = vunpack.c.l.s4 1966171168
        %v3524 = vunpack.c.0.s8 %v3523
        %v3525 = vlaneseq
        %v3526 = vshrl.u32 %v3525, 7
        %v3527 = vsub.s32 %v3524, %v3526
        %v3528 = vrot.slane %v3520, %v3527
        %v3530 = vunpack.c.l.s4 1966171168
        %v3531 = vunpack.c.0.s8 %v3530
        %v3532 = vlaneseq
        %v3533 = vshrl.u32 %v3532, 7
        %v3534 = vsub.s32 %v3531, %v3533
        %v3535 = vrot.slane %v3521, %v3534
        %v3536 = vcombine.low %v3528, %v3535
        %v3537 = vcombine.low %v1992, %v2006
        %v3538 = vcombine.low %v2014, %v2016
        %v3539 = vcombine.low %v1999, %v2013
        %v3540 = vcombine.low %v2015, %v2017
        %v3542 = vunpack.c.l.s4 1966171168
        %v3543 = vunpack.c.0.s8 %v3542
        %v3544 = vlaneseq
        %v3545 = vshrl.u32 %v3544, 7
        %v3546 = vsub.s32 %v3543, %v3545
        %v3547 = vrot.slane %v3537, %v3546
        %v3549 = vunpack.c.l.s4 1966171168
        %v3550 = vunpack.c.0.s8 %v3549
        %v3551 = vlaneseq
        %v3552 = vshrl.u32 %v3551, 7
        %v3553 = vsub.s32 %v3550, %v3552
        %v3554 = vrot.slane %v3538, %v3553
        %v3556 = vunpack.c.l.s4 1966171168
        %v3557 = vunpack.c.0.s8 %v3556
        %v3558 = vlaneseq
        %v3559 = vshrl.u32 %v3558, 7
        %v3560 = vsub.s32 %v3557, %v3559
        %v3561 = vrot.slane %v3539, %v3560
        %v3563 = vunpack.c.l.s4 1966171168
        %v3564 = vunpack.c.0.s8 %v3563
        %v3565 = vlaneseq
        %v3566 = vshrl.u32 %v3565, 7
        %v3567 = vsub.s32 %v3564, %v3566
        %v3568 = vrot.slane %v3540, %v3567
        %v3569 = vcombine.low %v3547, %v3554
        %v3570 = vcombine.low %v3561, %v3568
        %v3572 = vunpack.c.l.s4 1966171168
        %v3573 = vunpack.c.0.s8 %v3572
        %v3574 = vlaneseq
        %v3575 = vshrl.u32 %v3574, 7
        %v3576 = vsub.s32 %v3573, %v3575
        %v3577 = vrot.slane %v3569, %v3576
        %v3579 = vunpack.c.l.s4 1966171168
        %v3580 = vunpack.c.0.s8 %v3579
        %v3581 = vlaneseq
        %v3582 = vshrl.u32 %v3581, 7
        %v3583 = vsub.s32 %v3580, %v3582
        %v3584 = vrot.slane %v3570, %v3583
        %v3585 = vcombine.low %v3577, %v3584
        %v3586 = vcombine.low %v2041, %v2055
        %v3587 = vcombine.low %v2063, %v2065
        %v3588 = vcombine.low %v2048, %v2062
        %v3589 = vcombine.low %v2064, %v2066
        %v3591 = vunpack.c.l.s4 1966171168
        %v3592 = vunpack.c.0.s8 %v3591
        %v3593 = vlaneseq
        %v3594 = vshrl.u32 %v3593, 7
        %v3595 = vsub.s32 %v3592, %v3594
        %v3596 = vrot.slane %v3586, %v3595
        %v3598 = vunpack.c.l.s4 1966171168
        %v3599 = vunpack.c.0.s8 %v3598
        %v3600 = vlaneseq
        %v3601 = vshrl.u32 %v3600, 7
        %v3602 = vsub.s32 %v3599, %v3601
        %v3603 = vrot.slane %v3587, %v3602
        %v3605 = vunpack.c.l.s4 1966171168
        %v3606 = vunpack.c.0.s8 %v3605
        %v3607 = vlaneseq
        %v3608 = vshrl.u32 %v3607, 7
        %v3609 = vsub.s32 %v3606, %v3608
        %v3610 = vrot.slane %v3588, %v3609
        %v3612 = vunpack.c.l.s4 1966171168
        %v3613 = vunpack.c.0.s8 %v3612
        %v3614 = vlaneseq
        %v3615 = vshrl.u32 %v3614, 7
        %v3616 = vsub.s32 %v3613, %v3615
        %v3617 = vrot.slane %v3589, %v3616
        %v3618 = vcombine.low %v3596, %v3603
        %v3619 = vcombine.low %v3610, %v3617
        %v3621 = vunpack.c.l.s4 1966171168
        %v3622 = vunpack.c.0.s8 %v3621
        %v3623 = vlaneseq
        %v3624 = vshrl.u32 %v3623, 7
        %v3625 = vsub.s32 %v3622, %v3624
        %v3626 = vrot.slane %v3618, %v3625
        %v3628 = vunpack.c.l.s4 1966171168
        %v3629 = vunpack.c.0.s8 %v3628
        %v3630 = vlaneseq
        %v3631 = vshrl.u32 %v3630, 7
        %v3632 = vsub.s32 %v3629, %v3631
        %v3633 = vrot.slane %v3619, %v3632
        %v3634 = vcombine.low %v3626, %v3633
        %v3635 = vcombine.low %v2090, %v2104
        %v3636 = vcombine.low %v2112, %v2114
        %v3637 = vcombine.low %v2097, %v2111
        %v3638 = vcombine.low %v2113, %v2115
        %v3640 = vunpack.c.l.s4 1966171168
        %v3641 = vunpack.c.0.s8 %v3640
        %v3642 = vlaneseq
        %v3643 = vshrl.u32 %v3642, 7
        %v3644 = vsub.s32 %v3641, %v3643
        %v3645 = vrot.slane %v3635, %v3644
        %v3647 = vunpack.c.l.s4 1966171168
        %v3648 = vunpack.c.0.s8 %v3647
        %v3649 = vlaneseq
        %v3650 = vshrl.u32 %v3649, 7
        %v3651 = vsub.s32 %v3648, %v3650
        %v3652 = vrot.slane %v3636, %v3651
        %v3654 = vunpack.c.l.s4 1966171168
        %v3655 = vunpack.c.0.s8 %v3654
        %v3656 = vlaneseq
        %v3657 = vshrl.u32 %v3656, 7
        %v3658 = vsub.s32 %v3655, %v3657
        %v3659 = vrot.slane %v3637, %v3658
        %v3661 = vunpack.c.l.s4 1966171168
        %v3662 = vunpack.c.0.s8 %v3661
        %v3663 = vlaneseq
        %v3664 = vshrl.u32 %v3663, 7
        %v3665 = vsub.s32 %v3662, %v3664
        %v3666 = vrot.slane %v3638, %v3665
        %v3667 = vcombine.low %v3645, %v3652
        %v3668 = vcombine.low %v3659, %v3666
        %v3670 = vunpack.c.l.s4 1966171168
        %v3671 = vunpack.c.0.s8 %v3670
        %v3672 = vlaneseq
        %v3673 = vshrl.u32 %v3672, 7
        %v3674 = vsub.s32 %v3671, %v3673
        %v3675 = vrot.slane %v3667, %v3674
        %v3677 = vunpack.c.l.s4 1966171168
        %v3678 = vunpack.c.0.s8 %v3677
        %v3679 = vlaneseq
        %v3680 = vshrl.u32 %v3679, 7
        %v3681 = vsub.s32 %v3678, %v3680
        %v3682 = vrot.slane %v3668, %v3681
        %v3683 = vcombine.low %v3675, %v3682
        %v3684 = vcombine.low %v2139, %v2153
        %v3685 = vcombine.low %v2161, %v2163
        %v3686 = vcombine.low %v2146, %v2160
        %v3687 = vcombine.low %v2162, %v2164
        %v3689 = vunpack.c.l.s4 1966171168
        %v3690 = vunpack.c.0.s8 %v3689
        %v3691 = vlaneseq
        %v3692 = vshrl.u32 %v3691, 7
        %v3693 = vsub.s32 %v3690, %v3692
        %v3694 = vrot.slane %v3684, %v3693
        %v3696 = vunpack.c.l.s4 1966171168
        %v3697 = vunpack.c.0.s8 %v3696
        %v3698 = vlaneseq
        %v3699 = vshrl.u32 %v3698, 7
        %v3700 = vsub.s32 %v3697, %v3699
        %v3701 = vrot.slane %v3685, %v3700
        %v3703 = vunpack.c.l.s4 1966171168
        %v3704 = vunpack.c.0.s8 %v3703
        %v3705 = vlaneseq
        %v3706 = vshrl.u32 %v3705, 7
        %v3707 = vsub.s32 %v3704, %v3706
        %v3708 = vrot.slane %v3686, %v3707
        %v3710 = vunpack.c.l.s4 1966171168
        %v3711 = vunpack.c.0.s8 %v3710
        %v3712 = vlaneseq
        %v3713 = vshrl.u32 %v3712, 7
        %v3714 = vsub.s32 %v3711, %v3713
        %v3715 = vrot.slane %v3687, %v3714
        %v3716 = vcombine.low %v3694, %v3701
        %v3717 = vcombine.low %v3708, %v3715
        %v3719 = vunpack.c.l.s4 1966171168
        %v3720 = vunpack.c.0.s8 %v3719
        %v3721 = vlaneseq
        %v3722 = vshrl.u32 %v3721, 7
        %v3723 = vsub.s32 %v3720, %v3722
        %v3724 = vrot.slane %v3716, %v3723
        %v3726 = vunpack.c.l.s4 1966171168
        %v3727 = vunpack.c.0.s8 %v3726
        %v3728 = vlaneseq
        %v3729 = vshrl.u32 %v3728, 7
        %v3730 = vsub.s32 %v3727, %v3729
        %v3731 = vrot.slane %v3717, %v3730
        %v3732 = vcombine.low %v3724, %v3731
        %v3733 = vcombine.low %v2188, %v2202
        %v3734 = vcombine.low %v2210, %v2212
        %v3735 = vcombine.low %v2195, %v2209
        %v3736 = vcombine.low %v2211, %v2213
        %v3738 = vunpack.c.l.s4 1966171168
        %v3739 = vunpack.c.0.s8 %v3738
        %v3740 = vlaneseq
        %v3741 = vshrl.u32 %v3740, 7
        %v3742 = vsub.s32 %v3739, %v3741
        %v3743 = vrot.slane %v3733, %v3742
        %v3745 = vunpack.c.l.s4 1966171168
        %v3746 = vunpack.c.0.s8 %v3745
        %v3747 = vlaneseq
        %v3748 = vshrl.u32 %v3747, 7
        %v3749 = vsub.s32 %v3746, %v3748
        %v3750 = vrot.slane %v3734, %v3749
        %v3752 = vunpack.c.l.s4 1966171168
        %v3753 = vunpack.c.0.s8 %v3752
        %v3754 = vlaneseq
        %v3755 = vshrl.u32 %v3754, 7
        %v3756 = vsub.s32 %v3753, %v3755
        %v3757 = vrot.slane %v3735, %v3756
        %v3759 = vunpack.c.l.s4 1966171168
        %v3760 = vunpack.c.0.s8 %v3759
        %v3761 = vlaneseq
        %v3762 = vshrl.u32 %v3761, 7
        %v3763 = vsub.s32 %v3760, %v3762
        %v3764 = vrot.slane %v3736, %v3763
        %v3765 = vcombine.low %v3743, %v3750
        %v3766 = vcombine.low %v3757, %v3764
        %v3768 = vunpack.c.l.s4 1966171168
        %v3769 = vunpack.c.0.s8 %v3768
        %v3770 = vlaneseq
        %v3771 = vshrl.u32 %v3770, 7
        %v3772 = vsub.s32 %v3769, %v3771
        %v3773 = vrot.slane %v3765, %v3772
        %v3775 = vunpack.c.l.s4 1966171168
        %v3776 = vunpack.c.0.s8 %v3775
        %v3777 = vlaneseq
        %v3778 = vshrl.u32 %v3777, 7
        %v3779 = vsub.s32 %v3776, %v3778
        %v3780 = vrot.slane %v3766, %v3779
        %v3781 = vcombine.low %v3773, %v3780
        %v3782 = vcombine.low %v2237, %v2251
        %v3783 = vcombine.low %v2259, %v2261
        %v3784 = vcombine.low %v2244, %v2258
        %v3785 = vcombine.low %v2260, %v2262
        %v3787 = vunpack.c.l.s4 1966171168
        %v3788 = vunpack.c.0.s8 %v3787
        %v3789 = vlaneseq
        %v3790 = vshrl.u32 %v3789, 7
        %v3791 = vsub.s32 %v3788, %v3790
        %v3792 = vrot.slane %v3782, %v3791
        %v3794 = vunpack.c.l.s4 1966171168
        %v3795 = vunpack.c.0.s8 %v3794
        %v3796 = vlaneseq
        %v3797 = vshrl.u32 %v3796, 7
        %v3798 = vsub.s32 %v3795, %v3797
        %v3799 = vrot.slane %v3783, %v3798
        %v3801 = vunpack.c.l.s4 1966171168
        %v3802 = vunpack.c.0.s8 %v3801
        %v3803 = vlaneseq
        %v3804 = vshrl.u32 %v3803, 7
        %v3805 = vsub.s32 %v3802, %v3804
        %v3806 = vrot.slane %v3784, %v3805
        %v3808 = vunpack.c.l.s4 1966171168
        %v3809 = vunpack.c.0.s8 %v3808
        %v3810 = vlaneseq
        %v3811 = vshrl.u32 %v3810, 7
        %v3812 = vsub.s32 %v3809, %v3811
        %v3813 = vrot.slane %v3785, %v3812
        %v3814 = vcombine.low %v3792, %v3799
        %v3815 = vcombine.low %v3806, %v3813
        %v3817 = vunpack.c.l.s4 1966171168
        %v3818 = vunpack.c.0.s8 %v3817
        %v3819 = vlaneseq
        %v3820 = vshrl.u32 %v3819, 7
        %v3821 = vsub.s32 %v3818, %v3820
        %v3822 = vrot.slane %v3814, %v3821
        %v3824 = vunpack.c.l.s4 1966171168
        %v3825 = vunpack.c.0.s8 %v3824
        %v3826 = vlaneseq
        %v3827 = vshrl.u32 %v3826, 7
        %v3828 = vsub.s32 %v3825, %v3827
        %v3829 = vrot.slane %v3815, %v3828
        %v3830 = vcombine.low %v3822, %v3829
        %v3831 = vcombine.low %v2286, %v2300
        %v3832 = vcombine.low %v2308, %v2310
        %v3833 = vcombine.low %v2293, %v2307
        %v3834 = vcombine.low %v2309, %v2311
        %v3836 = vunpack.c.l.s4 1966171168
        %v3837 = vunpack.c.0.s8 %v3836
        %v3838 = vlaneseq
        %v3839 = vshrl.u32 %v3838, 7
        %v3840 = vsub.s32 %v3837, %v3839
        %v3841 = vrot.slane %v3831, %v3840
        %v3843 = vunpack.c.l.s4 1966171168
        %v3844 = vunpack.c.0.s8 %v3843
        %v3845 = vlaneseq
        %v3846 = vshrl.u32 %v3845, 7
        %v3847 = vsub.s32 %v3844, %v3846
        %v3848 = vrot.slane %v3832, %v3847
        %v3850 = vunpack.c.l.s4 1966171168
        %v3851 = vunpack.c.0.s8 %v3850
        %v3852 = vlaneseq
        %v3853 = vshrl.u32 %v3852, 7
        %v3854 = vsub.s32 %v3851, %v3853
        %v3855 = vrot.slane %v3833, %v3854
        %v3857 = vunpack.c.l.s4 1966171168
        %v3858 = vunpack.c.0.s8 %v3857
        %v3859 = vlaneseq
        %v3860 = vshrl.u32 %v3859, 7
        %v3861 = vsub.s32 %v3858, %v3860
        %v3862 = vrot.slane %v3834, %v3861
        %v3863 = vcombine.low %v3841, %v3848
        %v3864 = vcombine.low %v3855, %v3862
        %v3866 = vunpack.c.l.s4 1966171168
        %v3867 = vunpack.c.0.s8 %v3866
        %v3868 = vlaneseq
        %v3869 = vshrl.u32 %v3868, 7
        %v3870 = vsub.s32 %v3867, %v3869
        %v3871 = vrot.slane %v3863, %v3870
        %v3873 = vunpack.c.l.s4 1966171168
        %v3874 = vunpack.c.0.s8 %v3873
        %v3875 = vlaneseq
        %v3876 = vshrl.u32 %v3875, 7
        %v3877 = vsub.s32 %v3874, %v3876
        %v3878 = vrot.slane %v3864, %v3877
        %v3879 = vcombine.low %v3871, %v3878
        %v3880 = vcombine.low %v2335, %v2349
        %v3881 = vcombine.low %v2357, %v2359
        %v3882 = vcombine.low %v2342, %v2356
        %v3883 = vcombine.low %v2358, %v2360
        %v3885 = vunpack.c.l.s4 1966171168
        %v3886 = vunpack.c.0.s8 %v3885
        %v3887 = vlaneseq
        %v3888 = vshrl.u32 %v3887, 7
        %v3889 = vsub.s32 %v3886, %v3888
        %v3890 = vrot.slane %v3880, %v3889
        %v3892 = vunpack.c.l.s4 1966171168
        %v3893 = vunpack.c.0.s8 %v3892
        %v3894 = vlaneseq
        %v3895 = vshrl.u32 %v3894, 7
        %v3896 = vsub.s32 %v3893, %v3895
        %v3897 = vrot.slane %v3881, %v3896
        %v3899 = vunpack.c.l.s4 1966171168
        %v3900 = vunpack.c.0.s8 %v3899
        %v3901 = vlaneseq
        %v3902 = vshrl.u32 %v3901, 7
        %v3903 = vsub.s32 %v3900, %v3902
        %v3904 = vrot.slane %v3882, %v3903
        %v3906 = vunpack.c.l.s4 1966171168
        %v3907 = vunpack.c.0.s8 %v3906
        %v3908 = vlaneseq
        %v3909 = vshrl.u32 %v3908, 7
        %v3910 = vsub.s32 %v3907, %v3909
        %v3911 = vrot.slane %v3883, %v3910
        %v3912 = vcombine.low %v3890, %v3897
        %v3913 = vcombine.low %v3904, %v3911
        %v3915 = vunpack.c.l.s4 1966171168
        %v3916 = vunpack.c.0.s8 %v3915
        %v3917 = vlaneseq
        %v3918 = vshrl.u32 %v3917, 7
        %v3919 = vsub.s32 %v3916, %v3918
        %v3920 = vrot.slane %v3912, %v3919
        %v3922 = vunpack.c.l.s4 1966171168
        %v3923 = vunpack.c.0.s8 %v3922
        %v3924 = vlaneseq
        %v3925 = vshrl.u32 %v3924, 7
        %v3926 = vsub.s32 %v3923, %v3925
        %v3927 = vrot.slane %v3913, %v3926
        %v3928 = vcombine.low %v3920, %v3927
        %v3929 = vcombine.low %v2384, %v2398
        %v3930 = vcombine.low %v2406, %v2408
        %v3931 = vcombine.low %v2391, %v2405
        %v3932 = vcombine.low %v2407, %v2409
        %v3934 = vunpack.c.l.s4 1966171168
        %v3935 = vunpack.c.0.s8 %v3934
        %v3936 = vlaneseq
        %v3937 = vshrl.u32 %v3936, 7
        %v3938 = vsub.s32 %v3935, %v3937
        %v3939 = vrot.slane %v3929, %v3938
        %v3941 = vunpack.c.l.s4 1966171168
        %v3942 = vunpack.c.0.s8 %v3941
        %v3943 = vlaneseq
        %v3944 = vshrl.u32 %v3943, 7
        %v3945 = vsub.s32 %v3942, %v3944
        %v3946 = vrot.slane %v3930, %v3945
        %v3948 = vunpack.c.l.s4 1966171168
        %v3949 = vunpack.c.0.s8 %v3948
        %v3950 = vlaneseq
        %v3951 = vshrl.u32 %v3950, 7
        %v3952 = vsub.s32 %v3949, %v3951
        %v3953 = vrot.slane %v3931, %v3952
        %v3955 = vunpack.c.l.s4 1966171168
        %v3956 = vunpack.c.0.s8 %v3955
        %v3957 = vlaneseq
        %v3958 = vshrl.u32 %v3957, 7
        %v3959 = vsub.s32 %v3956, %v3958
        %v3960 = vrot.slane %v3932, %v3959
        %v3961 = vcombine.low %v3939, %v3946
        %v3962 = vcombine.low %v3953, %v3960
        %v3964 = vunpack.c.l.s4 1966171168
        %v3965 = vunpack.c.0.s8 %v3964
        %v3966 = vlaneseq
        %v3967 = vshrl.u32 %v3966, 7
        %v3968 = vsub.s32 %v3965, %v3967
        %v3969 = vrot.slane %v3961, %v3968
        %v3971 = vunpack.c.l.s4 1966171168
        %v3972 = vunpack.c.0.s8 %v3971
        %v3973 = vlaneseq
        %v3974 = vshrl.u32 %v3973, 7
        %v3975 = vsub.s32 %v3972, %v3974
        %v3976 = vrot.slane %v3962, %v3975
        %v3977 = vcombine.low %v3969, %v3976
        %v3978 = vcombine.low %v2433, %v2447
        %v3979 = vcombine.low %v2455, %v2457
        %v3980 = vcombine.low %v2440, %v2454
        %v3981 = vcombine.low %v2456, %v2458
        %v3983 = vunpack.c.l.s4 1966171168
        %v3984 = vunpack.c.0.s8 %v3983
        %v3985 = vlaneseq
        %v3986 = vshrl.u32 %v3985, 7
        %v3987 = vsub.s32 %v3984, %v3986
        %v3988 = vrot.slane %v3978, %v3987
        %v3990 = vunpack.c.l.s4 1966171168
        %v3991 = vunpack.c.0.s8 %v3990
        %v3992 = vlaneseq
        %v3993 = vshrl.u32 %v3992, 7
        %v3994 = vsub.s32 %v3991, %v3993
        %v3995 = vrot.slane %v3979, %v3994
        %v3997 = vunpack.c.l.s4 1966171168
        %v3998 = vunpack.c.0.s8 %v3997
        %v3999 = vlaneseq
        %v4000 = vshrl.u32 %v3999, 7
        %v4001 = vsub.s32 %v3998, %v4000
        %v4002 = vrot.slane %v3980, %v4001
        %v4004 = vunpack.c.l.s4 1966171168
        %v4005 = vunpack.c.0.s8 %v4004
        %v4006 = vlaneseq
        %v4007 = vshrl.u32 %v4006, 7
        %v4008 = vsub.s32 %v4005, %v4007
        %v4009 = vrot.slane %v3981, %v4008
        %v4010 = vcombine.low %v3988, %v3995
        %v4011 = vcombine.low %v4002, %v4009
        %v4013 = vunpack.c.l.s4 1966171168
        %v4014 = vunpack.c.0.s8 %v4013
        %v4015 = vlaneseq
        %v4016 = vshrl.u32 %v4015, 7
        %v4017 = vsub.s32 %v4014, %v4016
        %v4018 = vrot.slane %v4010, %v4017
        %v4020 = vunpack.c.l.s4 1966171168
        %v4021 = vunpack.c.0.s8 %v4020
        %v4022 = vlaneseq
        %v4023 = vshrl.u32 %v4022, 7
        %v4024 = vsub.s32 %v4021, %v4023
        %v4025 = vrot.slane %v4011, %v4024
        %v4026 = vcombine.low %v4018, %v4025
        %v4027 = vcombine.low %v2482, %v2496
        %v4028 = vcombine.low %v2504, %v2506
        %v4029 = vcombine.low %v2489, %v2503
        %v4030 = vcombine.low %v2505, %v2507
        %v4032 = vunpack.c.l.s4 1966171168
        %v4033 = vunpack.c.0.s8 %v4032
        %v4034 = vlaneseq
        %v4035 = vshrl.u32 %v4034, 7
        %v4036 = vsub.s32 %v4033, %v4035
        %v4037 = vrot.slane %v4027, %v4036
        %v4039 = vunpack.c.l.s4 1966171168
        %v4040 = vunpack.c.0.s8 %v4039
        %v4041 = vlaneseq
        %v4042 = vshrl.u32 %v4041, 7
        %v4043 = vsub.s32 %v4040, %v4042
        %v4044 = vrot.slane %v4028, %v4043
        %v4046 = vunpack.c.l.s4 1966171168
        %v4047 = vunpack.c.0.s8 %v4046
        %v4048 = vlaneseq
        %v4049 = vshrl.u32 %v4048, 7
        %v4050 = vsub.s32 %v4047, %v4049
        %v4051 = vrot.slane %v4029, %v4050
        %v4053 = vunpack.c.l.s4 1966171168
        %v4054 = vunpack.c.0.s8 %v4053
        %v4055 = vlaneseq
        %v4056 = vshrl.u32 %v4055, 7
        %v4057 = vsub.s32 %v4054, %v4056
        %v4058 = vrot.slane %v4030, %v4057
        %v4059 = vcombine.low %v4037, %v4044
        %v4060 = vcombine.low %v4051, %v4058
        %v4062 = vunpack.c.l.s4 1966171168
        %v4063 = vunpack.c.0.s8 %v4062
        %v4064 = vlaneseq
        %v4065 = vshrl.u32 %v4064, 7
        %v4066 = vsub.s32 %v4063, %v4065
        %v4067 = vrot.slane %v4059, %v4066
        %v4069 = vunpack.c.l.s4 1966171168
        %v4070 = vunpack.c.0.s8 %v4069
        %v4071 = vlaneseq
        %v4072 = vshrl.u32 %v4071, 7
        %v4073 = vsub.s32 %v4070, %v4072
        %v4074 = vrot.slane %v4060, %v4073
        %v4075 = vcombine.low %v4067, %v4074
        %v4076 = vcombine.low %v2531, %v2545
        %v4077 = vcombine.low %v2553, %v2555
        %v4078 = vcombine.low %v2538, %v2552
        %v4079 = vcombine.low %v2554, %v2556
        %v4081 = vunpack.c.l.s4 1966171168
        %v4082 = vunpack.c.0.s8 %v4081
        %v4083 = vlaneseq
        %v4084 = vshrl.u32 %v4083, 7
        %v4085 = vsub.s32 %v4082, %v4084
        %v4086 = vrot.slane %v4076, %v4085
        %v4088 = vunpack.c.l.s4 1966171168
        %v4089 = vunpack.c.0.s8 %v4088
        %v4090 = vlaneseq
        %v4091 = vshrl.u32 %v4090, 7
        %v4092 = vsub.s32 %v4089, %v4091
        %v4093 = vrot.slane %v4077, %v4092
        %v4095 = vunpack.c.l.s4 1966171168
        %v4096 = vunpack.c.0.s8 %v4095
        %v4097 = vlaneseq
        %v4098 = vshrl.u32 %v4097, 7
        %v4099 = vsub.s32 %v4096, %v4098
        %v4100 = vrot.slane %v4078, %v4099
        %v4102 = vunpack.c.l.s4 1966171168
        %v4103 = vunpack.c.0.s8 %v4102
        %v4104 = vlaneseq
        %v4105 = vshrl.u32 %v4104, 7
        %v4106 = vsub.s32 %v4103, %v4105
        %v4107 = vrot.slane %v4079, %v4106
        %v4108 = vcombine.low %v4086, %v4093
        %v4109 = vcombine.low %v4100, %v4107
        %v4111 = vunpack.c.l.s4 1966171168
        %v4112 = vunpack.c.0.s8 %v4111
        %v4113 = vlaneseq
        %v4114 = vshrl.u32 %v4113, 7
        %v4115 = vsub.s32 %v4112, %v4114
        %v4116 = vrot.slane %v4108, %v4115
        %v4118 = vunpack.c.l.s4 1966171168
        %v4119 = vunpack.c.0.s8 %v4118
        %v4120 = vlaneseq
        %v4121 = vshrl.u32 %v4120, 7
        %v4122 = vsub.s32 %v4119, %v4121
        %v4123 = vrot.slane %v4109, %v4122
        %v4124 = vcombine.low %v4116, %v4123
        %v4125 = vcombine.low %v2580, %v2594
        %v4126 = vcombine.low %v2602, %v2604
        %v4127 = vcombine.low %v2587, %v2601
        %v4128 = vcombine.low %v2603, %v2605
        %v4130 = vunpack.c.l.s4 1966171168
        %v4131 = vunpack.c.0.s8 %v4130
        %v4132 = vlaneseq
        %v4133 = vshrl.u32 %v4132, 7
        %v4134 = vsub.s32 %v4131, %v4133
        %v4135 = vrot.slane %v4125, %v4134
        %v4137 = vunpack.c.l.s4 1966171168
        %v4138 = vunpack.c.0.s8 %v4137
        %v4139 = vlaneseq
        %v4140 = vshrl.u32 %v4139, 7
        %v4141 = vsub.s32 %v4138, %v4140
        %v4142 = vrot.slane %v4126, %v4141
        %v4144 = vunpack.c.l.s4 1966171168
        %v4145 = vunpack.c.0.s8 %v4144
        %v4146 = vlaneseq
        %v4147 = vshrl.u32 %v4146, 7
        %v4148 = vsub.s32 %v4145, %v4147
        %v4149 = vrot.slane %v4127, %v4148
        %v4151 = vunpack.c.l.s4 1966171168
        %v4152 = vunpack.c.0.s8 %v4151
        %v4153 = vlaneseq
        %v4154 = vshrl.u32 %v4153, 7
        %v4155 = vsub.s32 %v4152, %v4154
        %v4156 = vrot.slane %v4128, %v4155
        %v4157 = vcombine.low %v4135, %v4142
        %v4158 = vcombine.low %v4149, %v4156
        %v4160 = vunpack.c.l.s4 1966171168
        %v4161 = vunpack.c.0.s8 %v4160
        %v4162 = vlaneseq
        %v4163 = vshrl.u32 %v4162, 7
        %v4164 = vsub.s32 %v4161, %v4163
        %v4165 = vrot.slane %v4157, %v4164
        %v4167 = vunpack.c.l.s4 1966171168
        %v4168 = vunpack.c.0.s8 %v4167
        %v4169 = vlaneseq
        %v4170 = vshrl.u32 %v4169, 7
        %v4171 = vsub.s32 %v4168, %v4170
        %v4172 = vrot.slane %v4158, %v4171
        %v4173 = vcombine.low %v4165, %v4172
        %v4174 = vcombine.low %v2629, %v2643
        %v4175 = vcombine.low %v2651, %v2653
        %v4176 = vcombine.low %v2636, %v2650
        %v4177 = vcombine.low %v2652, %v2654
        %v4179 = vunpack.c.l.s4 1966171168
        %v4180 = vunpack.c.0.s8 %v4179
        %v4181 = vlaneseq
        %v4182 = vshrl.u32 %v4181, 7
        %v4183 = vsub.s32 %v4180, %v4182
        %v4184 = vrot.slane %v4174, %v4183
        %v4186 = vunpack.c.l.s4 1966171168
        %v4187 = vunpack.c.0.s8 %v4186
        %v4188 = vlaneseq
        %v4189 = vshrl.u32 %v4188, 7
        %v4190 = vsub.s32 %v4187, %v4189
        %v4191 = vrot.slane %v4175, %v4190
        %v4193 = vunpack.c.l.s4 1966171168
        %v4194 = vunpack.c.0.s8 %v4193
        %v4195 = vlaneseq
        %v4196 = vshrl.u32 %v4195, 7
        %v4197 = vsub.s32 %v4194, %v4196
        %v4198 = vrot.slane %v4176, %v4197
        %v4200 = vunpack.c.l.s4 1966171168
        %v4201 = vunpack.c.0.s8 %v4200
        %v4202 = vlaneseq
        %v4203 = vshrl.u32 %v4202, 7
        %v4204 = vsub.s32 %v4201, %v4203
        %v4205 = vrot.slane %v4177, %v4204
        %v4206 = vcombine.low %v4184, %v4191
        %v4207 = vcombine.low %v4198, %v4205
        %v4209 = vunpack.c.l.s4 1966171168
        %v4210 = vunpack.c.0.s8 %v4209
        %v4211 = vlaneseq
        %v4212 = vshrl.u32 %v4211, 7
        %v4213 = vsub.s32 %v4210, %v4212
        %v4214 = vrot.slane %v4206, %v4213
        %v4216 = vunpack.c.l.s4 1966171168
        %v4217 = vunpack.c.0.s8 %v4216
        %v4218 = vlaneseq
        %v4219 = vshrl.u32 %v4218, 7
        %v4220 = vsub.s32 %v4217, %v4219
        %v4221 = vrot.slane %v4207, %v4220
        %v4222 = vcombine.low %v4214, %v4221
        %v4223 = vcombine.low %v2678, %v2692
        %v4224 = vcombine.low %v2700, %v2702
        %v4225 = vcombine.low %v2685, %v2699
        %v4226 = vcombine.low %v2701, %v2703
        %v4228 = vunpack.c.l.s4 1966171168
        %v4229 = vunpack.c.0.s8 %v4228
        %v4230 = vlaneseq
        %v4231 = vshrl.u32 %v4230, 7
        %v4232 = vsub.s32 %v4229, %v4231
        %v4233 = vrot.slane %v4223, %v4232
        %v4235 = vunpack.c.l.s4 1966171168
        %v4236 = vunpack.c.0.s8 %v4235
        %v4237 = vlaneseq
        %v4238 = vshrl.u32 %v4237, 7
        %v4239 = vsub.s32 %v4236, %v4238
        %v4240 = vrot.slane %v4224, %v4239
        %v4242 = vunpack.c.l.s4 1966171168
        %v4243 = vunpack.c.0.s8 %v4242
        %v4244 = vlaneseq
        %v4245 = vshrl.u32 %v4244, 7
        %v4246 = vsub.s32 %v4243, %v4245
        %v4247 = vrot.slane %v4225, %v4246
        %v4249 = vunpack.c.l.s4 1966171168
        %v4250 = vunpack.c.0.s8 %v4249
        %v4251 = vlaneseq
        %v4252 = vshrl.u32 %v4251, 7
        %v4253 = vsub.s32 %v4250, %v4252
        %v4254 = vrot.slane %v4226, %v4253
        %v4255 = vcombine.low %v4233, %v4240
        %v4256 = vcombine.low %v4247, %v4254
        %v4258 = vunpack.c.l.s4 1966171168
        %v4259 = vunpack.c.0.s8 %v4258
        %v4260 = vlaneseq
        %v4261 = vshrl.u32 %v4260, 7
        %v4262 = vsub.s32 %v4259, %v4261
        %v4263 = vrot.slane %v4255, %v4262
        %v4265 = vunpack.c.l.s4 1966171168
        %v4266 = vunpack.c.0.s8 %v4265
        %v4267 = vlaneseq
        %v4268 = vshrl.u32 %v4267, 7
        %v4269 = vsub.s32 %v4266, %v4268
        %v4270 = vrot.slane %v4256, %v4269
        %v4271 = vcombine.low %v4263, %v4270
        %v4272 = vcombine.low %v2727, %v2741
        %v4273 = vcombine.low %v2749, %v2751
        %v4274 = vcombine.low %v2734, %v2748
        %v4275 = vcombine.low %v2750, %v2752
        %v4277 = vunpack.c.l.s4 1966171168
        %v4278 = vunpack.c.0.s8 %v4277
        %v4279 = vlaneseq
        %v4280 = vshrl.u32 %v4279, 7
        %v4281 = vsub.s32 %v4278, %v4280
        %v4282 = vrot.slane %v4272, %v4281
        %v4284 = vunpack.c.l.s4 1966171168
        %v4285 = vunpack.c.0.s8 %v4284
        %v4286 = vlaneseq
        %v4287 = vshrl.u32 %v4286, 7
        %v4288 = vsub.s32 %v4285, %v4287
        %v4289 = vrot.slane %v4273, %v4288
        %v4291 = vunpack.c.l.s4 1966171168
        %v4292 = vunpack.c.0.s8 %v4291
        %v4293 = vlaneseq
        %v4294 = vshrl.u32 %v4293, 7
        %v4295 = vsub.s32 %v4292, %v4294
        %v4296 = vrot.slane %v4274, %v4295
        %v4298 = vunpack.c.l.s4 1966171168
        %v4299 = vunpack.c.0.s8 %v4298
        %v4300 = vlaneseq
        %v4301 = vshrl.u32 %v4300, 7
        %v4302 = vsub.s32 %v4299, %v4301
        %v4303 = vrot.slane %v4275, %v4302
        %v4304 = vcombine.low %v4282, %v4289
        %v4305 = vcombine.low %v4296, %v4303
        %v4307 = vunpack.c.l.s4 1966171168
        %v4308 = vunpack.c.0.s8 %v4307
        %v4309 = vlaneseq
        %v4310 = vshrl.u32 %v4309, 7
        %v4311 = vsub.s32 %v4308, %v4310
        %v4312 = vrot.slane %v4304, %v4311
        %v4314 = vunpack.c.l.s4 1966171168
        %v4315 = vunpack.c.0.s8 %v4314
        %v4316 = vlaneseq
        %v4317 = vshrl.u32 %v4316, 7
        %v4318 = vsub.s32 %v4315, %v4317
        %v4319 = vrot.slane %v4305, %v4318
        %v4320 = vcombine.low %v4312, %v4319
        %v4321 = vcombine.low %v2776, %v2790
        %v4322 = vcombine.low %v2798, %v2800
        %v4323 = vcombine.low %v2783, %v2797
        %v4324 = vcombine.low %v2799, %v2801
        %v4326 = vunpack.c.l.s4 1966171168
        %v4327 = vunpack.c.0.s8 %v4326
        %v4328 = vlaneseq
        %v4329 = vshrl.u32 %v4328, 7
        %v4330 = vsub.s32 %v4327, %v4329
        %v4331 = vrot.slane %v4321, %v4330
        %v4333 = vunpack.c.l.s4 1966171168
        %v4334 = vunpack.c.0.s8 %v4333
        %v4335 = vlaneseq
        %v4336 = vshrl.u32 %v4335, 7
        %v4337 = vsub.s32 %v4334, %v4336
        %v4338 = vrot.slane %v4322, %v4337
        %v4340 = vunpack.c.l.s4 1966171168
        %v4341 = vunpack.c.0.s8 %v4340
        %v4342 = vlaneseq
        %v4343 = vshrl.u32 %v4342, 7
        %v4344 = vsub.s32 %v4341, %v4343
        %v4345 = vrot.slane %v4323, %v4344
        %v4347 = vunpack.c.l.s4 1966171168
        %v4348 = vunpack.c.0.s8 %v4347
        %v4349 = vlaneseq
        %v4350 = vshrl.u32 %v4349, 7
        %v4351 = vsub.s32 %v4348, %v4350
        %v4352 = vrot.slane %v4324, %v4351
        %v4353 = vcombine.low %v4331, %v4338
        %v4354 = vcombine.low %v4345, %v4352
        %v4356 = vunpack.c.l.s4 1966171168
        %v4357 = vunpack.c.0.s8 %v4356
        %v4358 = vlaneseq
        %v4359 = vshrl.u32 %v4358, 7
        %v4360 = vsub.s32 %v4357, %v4359
        %v4361 = vrot.slane %v4353, %v4360
        %v4363 = vunpack.c.l.s4 1966171168
        %v4364 = vunpack.c.0.s8 %v4363
        %v4365 = vlaneseq
        %v4366 = vshrl.u32 %v4365, 7
        %v4367 = vsub.s32 %v4364, %v4366
        %v4368 = vrot.slane %v4354, %v4367
        %v4369 = vcombine.low %v4361, %v4368
        %v4370 = vcombine.low %v2825, %v2839
        %v4371 = vcombine.low %v2847, %v2849
        %v4372 = vcombine.low %v2832, %v2846
        %v4373 = vcombine.low %v2848, %v2850
        %v4375 = vunpack.c.l.s4 1966171168
        %v4376 = vunpack.c.0.s8 %v4375
        %v4377 = vlaneseq
        %v4378 = vshrl.u32 %v4377, 7
        %v4379 = vsub.s32 %v4376, %v4378
        %v4380 = vrot.slane %v4370, %v4379
        %v4382 = vunpack.c.l.s4 1966171168
        %v4383 = vunpack.c.0.s8 %v4382
        %v4384 = vlaneseq
        %v4385 = vshrl.u32 %v4384, 7
        %v4386 = vsub.s32 %v4383, %v4385
        %v4387 = vrot.slane %v4371, %v4386
        %v4389 = vunpack.c.l.s4 1966171168
        %v4390 = vunpack.c.0.s8 %v4389
        %v4391 = vlaneseq
        %v4392 = vshrl.u32 %v4391, 7
        %v4393 = vsub.s32 %v4390, %v4392
        %v4394 = vrot.slane %v4372, %v4393
        %v4396 = vunpack.c.l.s4 1966171168
        %v4397 = vunpack.c.0.s8 %v4396
        %v4398 = vlaneseq
        %v4399 = vshrl.u32 %v4398, 7
        %v4400 = vsub.s32 %v4397, %v4399
        %v4401 = vrot.slane %v4373, %v4400
        %v4402 = vcombine.low %v4380, %v4387
        %v4403 = vcombine.low %v4394, %v4401
        %v4405 = vunpack.c.l.s4 1966171168
        %v4406 = vunpack.c.0.s8 %v4405
        %v4407 = vlaneseq
        %v4408 = vshrl.u32 %v4407, 7
        %v4409 = vsub.s32 %v4406, %v4408
        %v4410 = vrot.slane %v4402, %v4409
        %v4412 = vunpack.c.l.s4 1966171168
        %v4413 = vunpack.c.0.s8 %v4412
        %v4414 = vlaneseq
        %v4415 = vshrl.u32 %v4414, 7
        %v4416 = vsub.s32 %v4413, %v4415
        %v4417 = vrot.slane %v4403, %v4416
        %v4418 = vcombine.low %v4410, %v4417
        %v4419 = vcombine.low %v2874, %v2888
        %v4420 = vcombine.low %v2896, %v2898
        %v4421 = vcombine.low %v2881, %v2895
        %v4422 = vcombine.low %v2897, %v2899
        %v4424 = vunpack.c.l.s4 1966171168
        %v4425 = vunpack.c.0.s8 %v4424
        %v4426 = vlaneseq
        %v4427 = vshrl.u32 %v4426, 7
        %v4428 = vsub.s32 %v4425, %v4427
        %v4429 = vrot.slane %v4419, %v4428
        %v4431 = vunpack.c.l.s4 1966171168
        %v4432 = vunpack.c.0.s8 %v4431
        %v4433 = vlaneseq
        %v4434 = vshrl.u32 %v4433, 7
        %v4435 = vsub.s32 %v4432, %v4434
        %v4436 = vrot.slane %v4420, %v4435
        %v4438 = vunpack.c.l.s4 1966171168
        %v4439 = vunpack.c.0.s8 %v4438
        %v4440 = vlaneseq
        %v4441 = vshrl.u32 %v4440, 7
        %v4442 = vsub.s32 %v4439, %v4441
        %v4443 = vrot.slane %v4421, %v4442
        %v4445 = vunpack.c.l.s4 1966171168
        %v4446 = vunpack.c.0.s8 %v4445
        %v4447 = vlaneseq
        %v4448 = vshrl.u32 %v4447, 7
        %v4449 = vsub.s32 %v4446, %v4448
        %v4450 = vrot.slane %v4422, %v4449
        %v4451 = vcombine.low %v4429, %v4436
        %v4452 = vcombine.low %v4443, %v4450
        %v4454 = vunpack.c.l.s4 1966171168
        %v4455 = vunpack.c.0.s8 %v4454
        %v4456 = vlaneseq
        %v4457 = vshrl.u32 %v4456, 7
        %v4458 = vsub.s32 %v4455, %v4457
        %v4459 = vrot.slane %v4451, %v4458
        %v4461 = vunpack.c.l.s4 1966171168
        %v4462 = vunpack.c.0.s8 %v4461
        %v4463 = vlaneseq
        %v4464 = vshrl.u32 %v4463, 7
        %v4465 = vsub.s32 %v4462, %v4464
        %v4466 = vrot.slane %v4452, %v4465
        %v4467 = vcombine.low %v4459, %v4466
        %v4468 = vcombine.low %v2923, %v2937
        %v4469 = vcombine.low %v2945, %v2947
        %v4470 = vcombine.low %v2930, %v2944
        %v4471 = vcombine.low %v2946, %v2948
        %v4473 = vunpack.c.l.s4 1966171168
        %v4474 = vunpack.c.0.s8 %v4473
        %v4475 = vlaneseq
        %v4476 = vshrl.u32 %v4475, 7
        %v4477 = vsub.s32 %v4474, %v4476
        %v4478 = vrot.slane %v4468, %v4477
        %v4480 = vunpack.c.l.s4 1966171168
        %v4481 = vunpack.c.0.s8 %v4480
        %v4482 = vlaneseq
        %v4483 = vshrl.u32 %v4482, 7
        %v4484 = vsub.s32 %v4481, %v4483
        %v4485 = vrot.slane %v4469, %v4484
        %v4487 = vunpack.c.l.s4 1966171168
        %v4488 = vunpack.c.0.s8 %v4487
        %v4489 = vlaneseq
        %v4490 = vshrl.u32 %v4489, 7
        %v4491 = vsub.s32 %v4488, %v4490
        %v4492 = vrot.slane %v4470, %v4491
        %v4494 = vunpack.c.l.s4 1966171168
        %v4495 = vunpack.c.0.s8 %v4494
        %v4496 = vlaneseq
        %v4497 = vshrl.u32 %v4496, 7
        %v4498 = vsub.s32 %v4495, %v4497
        %v4499 = vrot.slane %v4471, %v4498
        %v4500 = vcombine.low %v4478, %v4485
        %v4501 = vcombine.low %v4492, %v4499
        %v4503 = vunpack.c.l.s4 1966171168
        %v4504 = vunpack.c.0.s8 %v4503
        %v4505 = vlaneseq
        %v4506 = vshrl.u32 %v4505, 7
        %v4507 = vsub.s32 %v4504, %v4506
        %v4508 = vrot.slane %v4500, %v4507
        %v4510 = vunpack.c.l.s4 1966171168
        %v4511 = vunpack.c.0.s8 %v4510
        %v4512 = vlaneseq
        %v4513 = vshrl.u32 %v4512, 7
        %v4514 = vsub.s32 %v4511, %v4513
        %v4515 = vrot.slane %v4501, %v4514
        %v4516 = vcombine.low %v4508, %v4515
        %v4517 = vcombine.low %v2972, %v2986
        %v4518 = vcombine.low %v2994, %v2996
        %v4519 = vcombine.low %v2979, %v2993
        %v4520 = vcombine.low %v2995, %v2997
        %v4522 = vunpack.c.l.s4 1966171168
        %v4523 = vunpack.c.0.s8 %v4522
        %v4524 = vlaneseq
        %v4525 = vshrl.u32 %v4524, 7
        %v4526 = vsub.s32 %v4523, %v4525
        %v4527 = vrot.slane %v4517, %v4526
        %v4529 = vunpack.c.l.s4 1966171168
        %v4530 = vunpack.c.0.s8 %v4529
        %v4531 = vlaneseq
        %v4532 = vshrl.u32 %v4531, 7
        %v4533 = vsub.s32 %v4530, %v4532
        %v4534 = vrot.slane %v4518, %v4533
        %v4536 = vunpack.c.l.s4 1966171168
        %v4537 = vunpack.c.0.s8 %v4536
        %v4538 = vlaneseq
        %v4539 = vshrl.u32 %v4538, 7
        %v4540 = vsub.s32 %v4537, %v4539
        %v4541 = vrot.slane %v4519, %v4540
        %v4543 = vunpack.c.l.s4 1966171168
        %v4544 = vunpack.c.0.s8 %v4543
        %v4545 = vlaneseq
        %v4546 = vshrl.u32 %v4545, 7
        %v4547 = vsub.s32 %v4544, %v4546
        %v4548 = vrot.slane %v4520, %v4547
        %v4549 = vcombine.low %v4527, %v4534
        %v4550 = vcombine.low %v4541, %v4548
        %v4552 = vunpack.c.l.s4 1966171168
        %v4553 = vunpack.c.0.s8 %v4552
        %v4554 = vlaneseq
        %v4555 = vshrl.u32 %v4554, 7
        %v4556 = vsub.s32 %v4553, %v4555
        %v4557 = vrot.slane %v4549, %v4556
        %v4559 = vunpack.c.l.s4 1966171168
        %v4560 = vunpack.c.0.s8 %v4559
        %v4561 = vlaneseq
        %v4562 = vshrl.u32 %v4561, 7
        %v4563 = vsub.s32 %v4560, %v4562
        %v4564 = vrot.slane %v4550, %v4563
        %v4565 = vcombine.low %v4557, %v4564
        %v4566 = vcombine.low %v3021, %v3035
        %v4567 = vcombine.low %v3043, %v3045
        %v4568 = vcombine.low %v3028, %v3042
        %v4569 = vcombine.low %v3044, %v3046
        %v4571 = vunpack.c.l.s4 1966171168
        %v4572 = vunpack.c.0.s8 %v4571
        %v4573 = vlaneseq
        %v4574 = vshrl.u32 %v4573, 7
        %v4575 = vsub.s32 %v4572, %v4574
        %v4576 = vrot.slane %v4566, %v4575
        %v4578 = vunpack.c.l.s4 1966171168
        %v4579 = vunpack.c.0.s8 %v4578
        %v4580 = vlaneseq
        %v4581 = vshrl.u32 %v4580, 7
        %v4582 = vsub.s32 %v4579, %v4581
        %v4583 = vrot.slane %v4567, %v4582
        %v4585 = vunpack.c.l.s4 1966171168
        %v4586 = vunpack.c.0.s8 %v4585
        %v4587 = vlaneseq
        %v4588 = vshrl.u32 %v4587, 7
        %v4589 = vsub.s32 %v4586, %v4588
        %v4590 = vrot.slane %v4568, %v4589
        %v4592 = vunpack.c.l.s4 1966171168
        %v4593 = vunpack.c.0.s8 %v4592
        %v4594 = vlaneseq
        %v4595 = vshrl.u32 %v4594, 7
        %v4596 = vsub.s32 %v4593, %v4595
        %v4597 = vrot.slane %v4569, %v4596
        %v4598 = vcombine.low %v4576, %v4583
        %v4599 = vcombine.low %v4590, %v4597
        %v4601 = vunpack.c.l.s4 1966171168
        %v4602 = vunpack.c.0.s8 %v4601
        %v4603 = vlaneseq
        %v4604 = vshrl.u32 %v4603, 7
        %v4605 = vsub.s32 %v4602, %v4604
        %v4606 = vrot.slane %v4598, %v4605
        %v4608 = vunpack.c.l.s4 1966171168
        %v4609 = vunpack.c.0.s8 %v4608
        %v4610 = vlaneseq
        %v4611 = vshrl.u32 %v4610, 7
        %v4612 = vsub.s32 %v4609, %v4611
        %v4613 = vrot.slane %v4599, %v4612
        %v4614 = vcombine.low %v4606, %v4613
        %v4615 = vcombine.low %v3070, %v3084
        %v4616 = vcombine.low %v3092, %v3094
        %v4617 = vcombine.low %v3077, %v3091
        %v4618 = vcombine.low %v3093, %v3095
        %v4620 = vunpack.c.l.s4 1966171168
        %v4621 = vunpack.c.0.s8 %v4620
        %v4622 = vlaneseq
        %v4623 = vshrl.u32 %v4622, 7
        %v4624 = vsub.s32 %v4621, %v4623
        %v4625 = vrot.slane %v4615, %v4624
        %v4627 = vunpack.c.l.s4 1966171168
        %v4628 = vunpack.c.0.s8 %v4627
        %v4629 = vlaneseq
        %v4630 = vshrl.u32 %v4629, 7
        %v4631 = vsub.s32 %v4628, %v4630
        %v4632 = vrot.slane %v4616, %v4631
        %v4634 = vunpack.c.l.s4 1966171168
        %v4635 = vunpack.c.0.s8 %v4634
        %v4636 = vlaneseq
        %v4637 = vshrl.u32 %v4636, 7
        %v4638 = vsub.s32 %v4635, %v4637
        %v4639 = vrot.slane %v4617, %v4638
        %v4641 = vunpack.c.l.s4 1966171168
        %v4642 = vunpack.c.0.s8 %v4641
        %v4643 = vlaneseq
        %v4644 = vshrl.u32 %v4643, 7
        %v4645 = vsub.s32 %v4642, %v4644
        %v4646 = vrot.slane %v4618, %v4645
        %v4647 = vcombine.low %v4625, %v4632
        %v4648 = vcombine.low %v4639, %v4646
        %v4650 = vunpack.c.l.s4 1966171168
        %v4651 = vunpack.c.0.s8 %v4650
        %v4652 = vlaneseq
        %v4653 = vshrl.u32 %v4652, 7
        %v4654 = vsub.s32 %v4651, %v4653
        %v4655 = vrot.slane %v4647, %v4654
        %v4657 = vunpack.c.l.s4 1966171168
        %v4658 = vunpack.c.0.s8 %v4657
        %v4659 = vlaneseq
        %v4660 = vshrl.u32 %v4659, 7
        %v4661 = vsub.s32 %v4658, %v4660
        %v4662 = vrot.slane %v4648, %v4661
        %v4663 = vcombine.low %v4655, %v4662
        %v4664 = vcombine.low %v3119, %v3133
        %v4665 = vcombine.low %v3141, %v3143
        %v4666 = vcombine.low %v3126, %v3140
        %v4667 = vcombine.low %v3142, %v3144
        %v4669 = vunpack.c.l.s4 1966171168
        %v4670 = vunpack.c.0.s8 %v4669
        %v4671 = vlaneseq
        %v4672 = vshrl.u32 %v4671, 7
        %v4673 = vsub.s32 %v4670, %v4672
        %v4674 = vrot.slane %v4664, %v4673
        %v4676 = vunpack.c.l.s4 1966171168
        %v4677 = vunpack.c.0.s8 %v4676
        %v4678 = vlaneseq
        %v4679 = vshrl.u32 %v4678, 7
        %v4680 = vsub.s32 %v4677, %v4679
        %v4681 = vrot.slane %v4665, %v4680
        %v4683 = vunpack.c.l.s4 1966171168
        %v4684 = vunpack.c.0.s8 %v4683
        %v4685 = vlaneseq
        %v4686 = vshrl.u32 %v4685, 7
        %v4687 = vsub.s32 %v4684, %v4686
        %v4688 = vrot.slane %v4666, %v4687
        %v4690 = vunpack.c.l.s4 1966171168
        %v4691 = vunpack.c.0.s8 %v4690
        %v4692 = vlaneseq
        %v4693 = vshrl.u32 %v4692, 7
        %v4694 = vsub.s32 %v4691, %v4693
        %v4695 = vrot.slane %v4667, %v4694
        %v4696 = vcombine.low %v4674, %v4681
        %v4697 = vcombine.low %v4688, %v4695
        %v4699 = vunpack.c.l.s4 1966171168
        %v4700 = vunpack.c.0.s8 %v4699
        %v4701 = vlaneseq
        %v4702 = vshrl.u32 %v4701, 7
        %v4703 = vsub.s32 %v4700, %v4702
        %v4704 = vrot.slane %v4696, %v4703
        %v4706 = vunpack.c.l.s4 1966171168
        %v4707 = vunpack.c.0.s8 %v4706
        %v4708 = vlaneseq
        %v4709 = vshrl.u32 %v4708, 7
        %v4710 = vsub.s32 %v4707, %v4709
        %v4711 = vrot.slane %v4697, %v4710
        %v4712 = vcombine.low %v4704, %v4711
        %v4713 = vcombine.low %v3168, %v3182
        %v4714 = vcombine.low %v3190, %v3192
        %v4715 = vcombine.low %v3175, %v3189
        %v4716 = vcombine.low %v3191, %v3193
        %v4718 = vunpack.c.l.s4 1966171168
        %v4719 = vunpack.c.0.s8 %v4718
        %v4720 = vlaneseq
        %v4721 = vshrl.u32 %v4720, 7
        %v4722 = vsub.s32 %v4719, %v4721
        %v4723 = vrot.slane %v4713, %v4722
        %v4725 = vunpack.c.l.s4 1966171168
        %v4726 = vunpack.c.0.s8 %v4725
        %v4727 = vlaneseq
        %v4728 = vshrl.u32 %v4727, 7
        %v4729 = vsub.s32 %v4726, %v4728
        %v4730 = vrot.slane %v4714, %v4729
        %v4732 = vunpack.c.l.s4 1966171168
        %v4733 = vunpack.c.0.s8 %v4732
        %v4734 = vlaneseq
        %v4735 = vshrl.u32 %v4734, 7
        %v4736 = vsub.s32 %v4733, %v4735
        %v4737 = vrot.slane %v4715, %v4736
        %v4739 = vunpack.c.l.s4 1966171168
        %v4740 = vunpack.c.0.s8 %v4739
        %v4741 = vlaneseq
        %v4742 = vshrl.u32 %v4741, 7
        %v4743 = vsub.s32 %v4740, %v4742
        %v4744 = vrot.slane %v4716, %v4743
        %v4745 = vcombine.low %v4723, %v4730
        %v4746 = vcombine.low %v4737, %v4744
        %v4748 = vunpack.c.l.s4 1966171168
        %v4749 = vunpack.c.0.s8 %v4748
        %v4750 = vlaneseq
        %v4751 = vshrl.u32 %v4750, 7
        %v4752 = vsub.s32 %v4749, %v4751
        %v4753 = vrot.slane %v4745, %v4752
        %v4755 = vunpack.c.l.s4 1966171168
        %v4756 = vunpack.c.0.s8 %v4755
        %v4757 = vlaneseq
        %v4758 = vshrl.u32 %v4757, 7
        %v4759 = vsub.s32 %v4756, %v4758
        %v4760 = vrot.slane %v4746, %v4759
        %v4761 = vcombine.low %v4753, %v4760
        %v4762 = vcombine.low %v3217, %v3231
        %v4763 = vcombine.low %v3239, %v3241
        %v4764 = vcombine.low %v3224, %v3238
        %v4765 = vcombine.low %v3240, %v3242
        %v4767 = vunpack.c.l.s4 1966171168
        %v4768 = vunpack.c.0.s8 %v4767
        %v4769 = vlaneseq
        %v4770 = vshrl.u32 %v4769, 7
        %v4771 = vsub.s32 %v4768, %v4770
        %v4772 = vrot.slane %v4762, %v4771
        %v4774 = vunpack.c.l.s4 1966171168
        %v4775 = vunpack.c.0.s8 %v4774
        %v4776 = vlaneseq
        %v4777 = vshrl.u32 %v4776, 7
        %v4778 = vsub.s32 %v4775, %v4777
        %v4779 = vrot.slane %v4763, %v4778
        %v4781 = vunpack.c.l.s4 1966171168
        %v4782 = vunpack.c.0.s8 %v4781
        %v4783 = vlaneseq
        %v4784 = vshrl.u32 %v4783, 7
        %v4785 = vsub.s32 %v4782, %v4784
        %v4786 = vrot.slane %v4764, %v4785
        %v4788 = vunpack.c.l.s4 1966171168
        %v4789 = vunpack.c.0.s8 %v4788
        %v4790 = vlaneseq
        %v4791 = vshrl.u32 %v4790, 7
        %v4792 = vsub.s32 %v4789, %v4791
        %v4793 = vrot.slane %v4765, %v4792
        %v4794 = vcombine.low %v4772, %v4779
        %v4795 = vcombine.low %v4786, %v4793
        %v4797 = vunpack.c.l.s4 1966171168
        %v4798 = vunpack.c.0.s8 %v4797
        %v4799 = vlaneseq
        %v4800 = vshrl.u32 %v4799, 7
        %v4801 = vsub.s32 %v4798, %v4800
        %v4802 = vrot.slane %v4794, %v4801
        %v4804 = vunpack.c.l.s4 1966171168
        %v4805 = vunpack.c.0.s8 %v4804
        %v4806 = vlaneseq
        %v4807 = vshrl.u32 %v4806, 7
        %v4808 = vsub.s32 %v4805, %v4807
        %v4809 = vrot.slane %v4795, %v4808
        %v4810 = vcombine.low %v4802, %v4809
        %v4811 = vcombine.low %v3266, %v3280
        %v4812 = vcombine.low %v3288, %v3290
        %v4813 = vcombine.low %v3273, %v3287
        %v4814 = vcombine.low %v3289, %v3291
        %v4816 = vunpack.c.l.s4 1966171168
        %v4817 = vunpack.c.0.s8 %v4816
        %v4818 = vlaneseq
        %v4819 = vshrl.u32 %v4818, 7
        %v4820 = vsub.s32 %v4817, %v4819
        %v4821 = vrot.slane %v4811, %v4820
        %v4823 = vunpack.c.l.s4 1966171168
        %v4824 = vunpack.c.0.s8 %v4823
        %v4825 = vlaneseq
        %v4826 = vshrl.u32 %v4825, 7
        %v4827 = vsub.s32 %v4824, %v4826
        %v4828 = vrot.slane %v4812, %v4827
        %v4830 = vunpack.c.l.s4 1966171168
        %v4831 = vunpack.c.0.s8 %v4830
        %v4832 = vlaneseq
        %v4833 = vshrl.u32 %v4832, 7
        %v4834 = vsub.s32 %v4831, %v4833
        %v4835 = vrot.slane %v4813, %v4834
        %v4837 = vunpack.c.l.s4 1966171168
        %v4838 = vunpack.c.0.s8 %v4837
        %v4839 = vlaneseq
        %v4840 = vshrl.u32 %v4839, 7
        %v4841 = vsub.s32 %v4838, %v4840
        %v4842 = vrot.slane %v4814, %v4841
        %v4843 = vcombine.low %v4821, %v4828
        %v4844 = vcombine.low %v4835, %v4842
        %v4846 = vunpack.c.l.s4 1966171168
        %v4847 = vunpack.c.0.s8 %v4846
        %v4848 = vlaneseq
        %v4849 = vshrl.u32 %v4848, 7
        %v4850 = vsub.s32 %v4847, %v4849
        %v4851 = vrot.slane %v4843, %v4850
        %v4853 = vunpack.c.l.s4 1966171168
        %v4854 = vunpack.c.0.s8 %v4853
        %v4855 = vlaneseq
        %v4856 = vshrl.u32 %v4855, 7
        %v4857 = vsub.s32 %v4854, %v4856
        %v4858 = vrot.slane %v4844, %v4857
        %v4859 = vcombine.low %v4851, %v4858
        %v4860 = vcombine.low %v3315, %v3329
        %v4861 = vcombine.low %v3337, %v3339
        %v4862 = vcombine.low %v3322, %v3336
        %v4863 = vcombine.low %v3338, %v3340
        %v4865 = vunpack.c.l.s4 1966171168
        %v4866 = vunpack.c.0.s8 %v4865
        %v4867 = vlaneseq
        %v4868 = vshrl.u32 %v4867, 7
        %v4869 = vsub.s32 %v4866, %v4868
        %v4870 = vrot.slane %v4860, %v4869
        %v4872 = vunpack.c.l.s4 1966171168
        %v4873 = vunpack.c.0.s8 %v4872
        %v4874 = vlaneseq
        %v4875 = vshrl.u32 %v4874, 7
        %v4876 = vsub.s32 %v4873, %v4875
        %v4877 = vrot.slane %v4861, %v4876
        %v4879 = vunpack.c.l.s4 1966171168
        %v4880 = vunpack.c.0.s8 %v4879
        %v4881 = vlaneseq
        %v4882 = vshrl.u32 %v4881, 7
        %v4883 = vsub.s32 %v4880, %v4882
        %v4884 = vrot.slane %v4862, %v4883
        %v4886 = vunpack.c.l.s4 1966171168
        %v4887 = vunpack.c.0.s8 %v4886
        %v4888 = vlaneseq
        %v4889 = vshrl.u32 %v4888, 7
        %v4890 = vsub.s32 %v4887, %v4889
        %v4891 = vrot.slane %v4863, %v4890
        %v4892 = vcombine.low %v4870, %v4877
        %v4893 = vcombine.low %v4884, %v4891
        %v4895 = vunpack.c.l.s4 1966171168
        %v4896 = vunpack.c.0.s8 %v4895
        %v4897 = vlaneseq
        %v4898 = vshrl.u32 %v4897, 7
        %v4899 = vsub.s32 %v4896, %v4898
        %v4900 = vrot.slane %v4892, %v4899
        %v4902 = vunpack.c.l.s4 1966171168
        %v4903 = vunpack.c.0.s8 %v4902
        %v4904 = vlaneseq
        %v4905 = vshrl.u32 %v4904, 7
        %v4906 = vsub.s32 %v4903, %v4905
        %v4907 = vrot.slane %v4893, %v4906
        %v4908 = vcombine.low %v4900, %v4907
        %v4909 = vcombine.low %v3364, %v3378
        %v4910 = vcombine.low %v3386, %v3388
        %v4911 = vcombine.low %v3371, %v3385
        %v4912 = vcombine.low %v3387, %v3389
        %v4914 = vunpack.c.l.s4 1966171168
        %v4915 = vunpack.c.0.s8 %v4914
        %v4916 = vlaneseq
        %v4917 = vshrl.u32 %v4916, 7
        %v4918 = vsub.s32 %v4915, %v4917
        %v4919 = vrot.slane %v4909, %v4918
        %v4921 = vunpack.c.l.s4 1966171168
        %v4922 = vunpack.c.0.s8 %v4921
        %v4923 = vlaneseq
        %v4924 = vshrl.u32 %v4923, 7
        %v4925 = vsub.s32 %v4922, %v4924
        %v4926 = vrot.slane %v4910, %v4925
        %v4928 = vunpack.c.l.s4 1966171168
        %v4929 = vunpack.c.0.s8 %v4928
        %v4930 = vlaneseq
        %v4931 = vshrl.u32 %v4930, 7
        %v4932 = vsub.s32 %v4929, %v4931
        %v4933 = vrot.slane %v4911, %v4932
        %v4935 = vunpack.c.l.s4 1966171168
        %v4936 = vunpack.c.0.s8 %v4935
        %v4937 = vlaneseq
        %v4938 = vshrl.u32 %v4937, 7
        %v4939 = vsub.s32 %v4936, %v4938
        %v4940 = vrot.slane %v4912, %v4939
        %v4941 = vcombine.low %v4919, %v4926
        %v4942 = vcombine.low %v4933, %v4940
        %v4944 = vunpack.c.l.s4 1966171168
        %v4945 = vunpack.c.0.s8 %v4944
        %v4946 = vlaneseq
        %v4947 = vshrl.u32 %v4946, 7
        %v4948 = vsub.s32 %v4945, %v4947
        %v4949 = vrot.slane %v4941, %v4948
        %v4951 = vunpack.c.l.s4 1966171168
        %v4952 = vunpack.c.0.s8 %v4951
        %v4953 = vlaneseq
        %v4954 = vshrl.u32 %v4953, 7
        %v4955 = vsub.s32 %v4952, %v4954
        %v4956 = vrot.slane %v4942, %v4955
        %v4957 = vcombine.low %v4949, %v4956
        %4958 = vset.pattern.permute.xlu0 0
        %4959 = vperm.xlu0 %4958, %v3438
        %v4960 = vpop.permute.xlu0 %4959
        %4961 = vset.pattern.permute.xlu0 0
        %4962 = vperm.xlu0 %4961, %v3487
        %v4963 = vpop.permute.xlu0 %4962
        %4964 = vset.pattern.permute.xlu0 0
        %4965 = vperm.xlu0 %4964, %v3536
        %v4966 = vpop.permute.xlu0 %4965
        %4967 = vset.pattern.permute.xlu0 0
        %4968 = vperm.xlu0 %4967, %v3585
        %v4969 = vpop.permute.xlu0 %4968
        %4970 = vset.pattern.permute.xlu0 0
        %4971 = vperm.xlu0 %4970, %v3634
        %v4972 = vpop.permute.xlu0 %4971
        %4973 = vset.pattern.permute.xlu0 0
        %4974 = vperm.xlu0 %4973, %v3683
        %v4975 = vpop.permute.xlu0 %4974
        %4976 = vset.pattern.permute.xlu0 0
        %4977 = vperm.xlu0 %4976, %v3732
        %v4978 = vpop.permute.xlu0 %4977
        %4979 = vset.pattern.permute.xlu0 0
        %4980 = vperm.xlu0 %4979, %v3781
        %v4981 = vpop.permute.xlu0 %4980
        %4982 = vset.pattern.permute.xlu0 0
        %4983 = vperm.xlu0 %4982, %v3830
        %v4984 = vpop.permute.xlu0 %4983
        %4985 = vset.pattern.permute.xlu0 0
        %4986 = vperm.xlu0 %4985, %v3879
        %v4987 = vpop.permute.xlu0 %4986
        %4988 = vset.pattern.permute.xlu0 0
        %4989 = vperm.xlu0 %4988, %v3928
        %v4990 = vpop.permute.xlu0 %4989
        %4991 = vset.pattern.permute.xlu0 0
        %4992 = vperm.xlu0 %4991, %v3977
        %v4993 = vpop.permute.xlu0 %4992
        %4994 = vset.pattern.permute.xlu0 0
        %4995 = vperm.xlu0 %4994, %v4026
        %v4996 = vpop.permute.xlu0 %4995
        %4997 = vset.pattern.permute.xlu0 0
        %4998 = vperm.xlu0 %4997, %v4075
        %v4999 = vpop.permute.xlu0 %4998
        %5000 = vset.pattern.permute.xlu0 0
        %5001 = vperm.xlu0 %5000, %v4124
        %v5002 = vpop.permute.xlu0 %5001
        %5003 = vset.pattern.permute.xlu0 0
        %5004 = vperm.xlu0 %5003, %v4173
        %v5005 = vpop.permute.xlu0 %5004
        %5006 = vset.pattern.permute.xlu0 0
        %5007 = vperm.xlu0 %5006, %v4222
        %v5008 = vpop.permute.xlu0 %5007
        %5009 = vset.pattern.permute.xlu0 0
        %5010 = vperm.xlu0 %5009, %v4271
        %v5011 = vpop.permute.xlu0 %5010
        %5012 = vset.pattern.permute.xlu0 0
        %5013 = vperm.xlu0 %5012, %v4320
        %v5014 = vpop.permute.xlu0 %5013
        %5015 = vset.pattern.permute.xlu0 0
        %5016 = vperm.xlu0 %5015, %v4369
        %v5017 = vpop.permute.xlu0 %5016
        %5018 = vset.pattern.permute.xlu0 0
        %5019 = vperm.xlu0 %5018, %v4418
        %v5020 = vpop.permute.xlu0 %5019
        %5021 = vset.pattern.permute.xlu0 0
        %5022 = vperm.xlu0 %5021, %v4467
        %v5023 = vpop.permute.xlu0 %5022
        %5024 = vset.pattern.permute.xlu0 0
        %5025 = vperm.xlu0 %5024, %v4516
        %v5026 = vpop.permute.xlu0 %5025
        %5027 = vset.pattern.permute.xlu0 0
        %5028 = vperm.xlu0 %5027, %v4565
        %v5029 = vpop.permute.xlu0 %5028
        %5030 = vset.pattern.permute.xlu0 0
        %5031 = vperm.xlu0 %5030, %v4614
        %v5032 = vpop.permute.xlu0 %5031
        %5033 = vset.pattern.permute.xlu0 0
        %5034 = vperm.xlu0 %5033, %v4663
        %v5035 = vpop.permute.xlu0 %5034
        %5036 = vset.pattern.permute.xlu0 0
        %5037 = vperm.xlu0 %5036, %v4712
        %v5038 = vpop.permute.xlu0 %5037
        %5039 = vset.pattern.permute.xlu0 0
        %5040 = vperm.xlu0 %5039, %v4761
        %v5041 = vpop.permute.xlu0 %5040
        %5042 = vset.pattern.permute.xlu0 0
        %5043 = vperm.xlu0 %5042, %v4810
        %v5044 = vpop.permute.xlu0 %5043
        %5045 = vset.pattern.permute.xlu0 0
        %5046 = vperm.xlu0 %5045, %v4859
        %v5047 = vpop.permute.xlu0 %5046
        %5048 = vset.pattern.permute.xlu0 0
        %5049 = vperm.xlu0 %5048, %v4908
        %v5050 = vpop.permute.xlu0 %5049
        %5051 = vset.pattern.permute.xlu0 0
        %5052 = vperm.xlu0 %5051, %v4957
        %v5053 = vpop.permute.xlu0 %5052
        %v5054 = vlaneseq
        %v5055 = vand.u32 %v5054, 127
        %v5056 = vlaneseq
        %v5057 = vshrl.u32 %v5056, 7
        %v5058 = vsub.s32 %v5055, %v5057
        %v5059 = vrot.slane %v4960, %v5058
        %v5060 = vadd.s32 %v5055, 4294967288
        %v5061 = vlaneseq
        %v5062 = vshrl.u32 %v5061, 7
        %v5063 = vsub.s32 %v5060, %v5062
        %v5064 = vrot.slane %v4963, %v5063
        %vm5065 = vcmask 130112
        %v5066 = vsel %vm5065, %v5064, %v5059
        %v5067 = vadd.s32 %v5055, 4294967280
        %v5068 = vlaneseq
        %v5069 = vshrl.u32 %v5068, 7
        %v5070 = vsub.s32 %v5067, %v5069
        %v5071 = vrot.slane %v4966, %v5070
        %vm5072 = vcmask 195712
        %v5073 = vsel %vm5072, %v5071, %v5066
        %v5074 = vadd.s32 %v5055, 4294967272
        %v5075 = vlaneseq
        %v5076 = vshrl.u32 %v5075, 7
        %v5077 = vsub.s32 %v5074, %v5076
        %v5078 = vrot.slane %v4969, %v5077
        %vm5079 = vcmask 261312
        %v5080 = vsel %vm5079, %v5078, %v5073
        %v5081 = vadd.s32 %v5055, 4294967264
        %v5082 = vlaneseq
        %v5083 = vshrl.u32 %v5082, 7
        %v5084 = vsub.s32 %v5081, %v5083
        %v5085 = vrot.slane %v4972, %v5084
        %vm5086 = vcmask 326912
        %v5087 = vsel %vm5086, %v5085, %v5080
        %v5088 = vadd.s32 %v5055, 4294967256
        %v5089 = vlaneseq
        %v5090 = vshrl.u32 %v5089, 7
        %v5091 = vsub.s32 %v5088, %v5090
        %v5092 = vrot.slane %v4975, %v5091
        %vm5093 = vcmask 392512
        %v5094 = vsel %vm5093, %v5092, %v5087
        %v5095 = vadd.s32 %v5055, 4294967248
        %v5096 = vlaneseq
        %v5097 = vshrl.u32 %v5096, 7
        %v5098 = vsub.s32 %v5095, %v5097
        %v5099 = vrot.slane %v4978, %v5098
        %vm5100 = vcmask 458112
        %v5101 = vsel %vm5100, %v5099, %v5094
        %v5102 = vadd.s32 %v5055, 4294967240
        %v5103 = vlaneseq
        %v5104 = vshrl.u32 %v5103, 7
        %v5105 = vsub.s32 %v5102, %v5104
        %v5106 = vrot.slane %v4981, %v5105
        %vm5107 = vcmask 523712
        %v5108 = vsel %vm5107, %v5106, %v5101
        %v5109 = vadd.s32 %v5055, 4294967232
        %v5110 = vlaneseq
        %v5111 = vshrl.u32 %v5110, 7
        %v5112 = vsub.s32 %v5109, %v5111
        %v5113 = vrot.slane %v4984, %v5112
        %vm5114 = vcmask 589312
        %v5115 = vsel %vm5114, %v5113, %v5108
        %v5116 = vadd.s32 %v5055, 4294967224
        %v5117 = vlaneseq
        %v5118 = vshrl.u32 %v5117, 7
        %v5119 = vsub.s32 %v5116, %v5118
        %v5120 = vrot.slane %v4987, %v5119
        %vm5121 = vcmask 654912
        %v5122 = vsel %vm5121, %v5120, %v5115
        %v5123 = vadd.s32 %v5055, 4294967216
        %v5124 = vlaneseq
        %v5125 = vshrl.u32 %v5124, 7
        %v5126 = vsub.s32 %v5123, %v5125
        %v5127 = vrot.slane %v4990, %v5126
        %vm5128 = vcmask 720512
        %v5129 = vsel %vm5128, %v5127, %v5122
        %v5130 = vadd.s32 %v5055, 4294967208
        %v5131 = vlaneseq
        %v5132 = vshrl.u32 %v5131, 7
        %v5133 = vsub.s32 %v5130, %v5132
        %v5134 = vrot.slane %v4993, %v5133
        %vm5135 = vcmask 786112
        %v5136 = vsel %vm5135, %v5134, %v5129
        %v5137 = vadd.s32 %v5055, 4294967200
        %v5138 = vlaneseq
        %v5139 = vshrl.u32 %v5138, 7
        %v5140 = vsub.s32 %v5137, %v5139
        %v5141 = vrot.slane %v4996, %v5140
        %vm5142 = vcmask 851712
        %v5143 = vsel %vm5142, %v5141, %v5136
        %v5144 = vadd.s32 %v5055, 4294967192
        %v5145 = vlaneseq
        %v5146 = vshrl.u32 %v5145, 7
        %v5147 = vsub.s32 %v5144, %v5146
        %v5148 = vrot.slane %v4999, %v5147
        %vm5149 = vcmask 917312
        %v5150 = vsel %vm5149, %v5148, %v5143
        %v5151 = vadd.s32 %v5055, 4294967184
        %v5152 = vlaneseq
        %v5153 = vshrl.u32 %v5152, 7
        %v5154 = vsub.s32 %v5151, %v5153
        %v5155 = vrot.slane %v5002, %v5154
        %vm5156 = vcmask 982912
        %v5157 = vsel %vm5156, %v5155, %v5150
        %v5158 = vadd.s32 %v5055, 4294967176
        %v5159 = vlaneseq
        %v5160 = vshrl.u32 %v5159, 7
        %v5161 = vsub.s32 %v5158, %v5160
        %v5162 = vrot.slane %v5005, %v5161
        %vm5163 = vcmask 1048512
        %v5164 = vsel %vm5163, %v5162, %v5157
        %v5165 = vlaneseq
        %v5166 = vshrl.u32 %v5165, 7
        %v5167 = vsub.s32 %v5055, %v5166
        %v5168 = vrot.slane %v5008, %v5167
        %v5169 = vlaneseq
        %v5170 = vshrl.u32 %v5169, 7
        %v5171 = vsub.s32 %v5060, %v5170
        %v5172 = vrot.slane %v5011, %v5171
        %v5173 = vsel %vm5065, %v5172, %v5168
        %v5174 = vlaneseq
        %v5175 = vshrl.u32 %v5174, 7
        %v5176 = vsub.s32 %v5067, %v5175
        %v5177 = vrot.slane %v5014, %v5176
        %v5178 = vsel %vm5072, %v5177, %v5173
        %v5179 = vlaneseq
        %v5180 = vshrl.u32 %v5179, 7
        %v5181 = vsub.s32 %v5074, %v5180
        %v5182 = vrot.slane %v5017, %v5181
        %v5183 = vsel %vm5079, %v5182, %v5178
        %v5184 = vlaneseq
        %v5185 = vshrl.u32 %v5184, 7
        %v5186 = vsub.s32 %v5081, %v5185
        %v5187 = vrot.slane %v5020, %v5186
        %v5188 = vsel %vm5086, %v5187, %v5183
        %v5189 = vlaneseq
        %v5190 = vshrl.u32 %v5189, 7
        %v5191 = vsub.s32 %v5088, %v5190
        %v5192 = vrot.slane %v5023, %v5191
        %v5193 = vsel %vm5093, %v5192, %v5188
        %v5194 = vlaneseq
        %v5195 = vshrl.u32 %v5194, 7
        %v5196 = vsub.s32 %v5095, %v5195
        %v5197 = vrot.slane %v5026, %v5196
        %v5198 = vsel %vm5100, %v5197, %v5193
        %v5199 = vlaneseq
        %v5200 = vshrl.u32 %v5199, 7
        %v5201 = vsub.s32 %v5102, %v5200
        %v5202 = vrot.slane %v5029, %v5201
        %v5203 = vsel %vm5107, %v5202, %v5198
        %v5204 = vlaneseq
        %v5205 = vshrl.u32 %v5204, 7
        %v5206 = vsub.s32 %v5109, %v5205
        %v5207 = vrot.slane %v5032, %v5206
        %v5208 = vsel %vm5114, %v5207, %v5203
        %v5209 = vlaneseq
        %v5210 = vshrl.u32 %v5209, 7
        %v5211 = vsub.s32 %v5116, %v5210
        %v5212 = vrot.slane %v5035, %v5211
        %v5213 = vsel %vm5121, %v5212, %v5208
        %v5214 = vlaneseq
        %v5215 = vshrl.u32 %v5214, 7
        %v5216 = vsub.s32 %v5123, %v5215
        %v5217 = vrot.slane %v5038, %v5216
        %v5218 = vsel %vm5128, %v5217, %v5213
        %v5219 = vlaneseq
        %v5220 = vshrl.u32 %v5219, 7
        %v5221 = vsub.s32 %v5130, %v5220
        %v5222 = vrot.slane %v5041, %v5221
        %v5223 = vsel %vm5135, %v5222, %v5218
        %v5224 = vlaneseq
        %v5225 = vshrl.u32 %v5224, 7
        %v5226 = vsub.s32 %v5137, %v5225
        %v5227 = vrot.slane %v5044, %v5226
        %v5228 = vsel %vm5142, %v5227, %v5223
        %v5229 = vlaneseq
        %v5230 = vshrl.u32 %v5229, 7
        %v5231 = vsub.s32 %v5144, %v5230
        %v5232 = vrot.slane %v5047, %v5231
        %v5233 = vsel %vm5149, %v5232, %v5228
        %v5234 = vlaneseq
        %v5235 = vshrl.u32 %v5234, 7
        %v5236 = vsub.s32 %v5151, %v5235
        %v5237 = vrot.slane %v5050, %v5236
        %v5238 = vsel %vm5156, %v5237, %v5233
        %v5239 = vlaneseq
        %v5240 = vshrl.u32 %v5239, 7
        %v5241 = vsub.s32 %v5158, %v5240
        %v5242 = vrot.slane %v5053, %v5241
        %v5243 = vsel %vm5163, %v5242, %v5238
        %v5244 = vcombine.low %v5164, %v5243
        %v5246 = vunpack.c.l.s4 1966171168
        %v5247 = vunpack.c.0.s8 %v5246
        %v5248 = vlaneseq
        %v5249 = vshrl.u32 %v5248, 7
        %v5250 = vsub.s32 %v5247, %v5249
        %v5251 = vrot.slane %v5244, %v5250
        %v5253 = vunpack.c.l.s4 1966171168
        %v5254 = vunpack.c.0.s8 %v5253
        %v5255 = vlaneseq
        %v5256 = vshrl.u32 %v5255, 7
        %v5257 = vsub.s32 %v5254, %v5256
        %v5258 = vrot.slane %v5251, %v5257
        %v5260 = vlaneseq
        %vm5261 = vcmp.ge.s32.totalorder %v5260, 0
        %vm5262 = vcmp.lt.s32.totalorder %v5260, 256
        %vm5263 = vmand %vm5261, %vm5262
        %5264 = vst.msk [vmem:[%s371] sm:$0x3] %vm5263, %v5258
        %s5265 = sand.u32 %s254, 1
        %s5266 = scalar_lea.sflag [#allocation4], %s5265
        %s5267 = sand.u32 %s254, 1
        %s5268 = smul.addr %s5267, 2
        %s5269 = scalar_lea.vmem [#allocation3], %s5268
        // Predicated region
        $region61: #{tpu_custom_call.1} parent=59 // pred_check
          %p5270 = pneg %p264
        $region62: #{tpu_custom_call.1} parent=59 // pred_check_branch
          %5272 = sbr.rel (%p5270) target = $region64
        $region63: #{tpu_custom_call.1} parent=59 // pred_region
          %s5273 = smul.u32 2, %s26
          %s5275 = ssub.s32 32, 32
          %5276 = vsyncadd %s5266, %s5275
          %s5277 = smul.addr %s5273, 16
          %s5278 = scalar_lea.hbm %s10, %s5277
          %s5280 = sshll.u32 %s5269, 4
          %s5281 = int_to_ptr.vmem [resolvable:$true] %s5280
          %5283 = dma.vmem_to_hbm [thread:$0]  %s5281, 32, %s5278, %s5266
        $region64: #{tpu_custom_call.1} parent=59 // pred_fallthru
          _
      $region60: #{tpu_custom_call.1} parent=5 // pred_fallthru
        _
      %p5284 = scmp.le.s32.totalorder 2, %s21
      // Predicated region
      $region65: #{tpu_custom_call.1} parent=5 // pred_check
        %p5285 = pneg %p5284
      $region66: #{tpu_custom_call.1} parent=5 // pred_check_branch
        %5287 = sbr.rel (%p5285) target = $region68
      $region67: #{tpu_custom_call.1} parent=5 // pred_region
        %s5288 = ssub.s32 %s21, 2
        // Predicated region
        $region69: #{tpu_custom_call.1} parent=67 // pred_check
          %p5289 = pneg %p270
        $region70: #{tpu_custom_call.1} parent=67 // pred_check_branch
          %5291 = sbr.rel (%p5289) target = $region72
        $region71: #{tpu_custom_call.1} parent=67 // pred_region
          %s5292 = sand.u32 %s255, 1
          %s5293 = scalar_lea.sflag [#allocation4], %s5292
          %s5294 = sand.u32 %s255, 1
          %s5295 = smul.addr %s5294, 2
          %s5296 = scalar_lea.vmem [#allocation3], %s5295
          %5297 = dma.done %s5293, 32
        $region72: #{tpu_custom_call.1} parent=67 // pred_fallthru
          _
      $region68: #{tpu_custom_call.1} parent=5 // pred_fallthru
        _
    $region6: #{tpu_custom_call.1} parent=1 // loop_footer
      %s25 = sadd.s32 1, %s21
    $region7: #{tpu_custom_call.1} parent=1 // loop_footer_branch
      %20 = sbr.rel target = $region3
    $region8: #{tpu_custom_call.1} parent=1 // loop_exit
      _
    %5298 = vsyncpa [#allocation4], 1
    %s5299 = scalar_lea.sflag [#allocation4], 1
    %5300 = vsyncpa %s5299, 1

</llo_original>
